<compile_context>
chip_gen: v7x
topology: tpu7x:2x2x1
jax: 0.10.0
libtpu: 0.0.40
codegen_flags: <defaults>
</compile_context>

<pallas_src>
import functools

import jax
import jax.numpy as jnp
from jax.experimental import pallas as pl
from jax.experimental.pallas import tpu as pltpu


# ----------------------------------------------------------------------------
# Fused kernel: adjacency -> normalized affinity -> subspace iteration ->
# spectral embedding -> k-means -> labels (1, N) float32.
# ----------------------------------------------------------------------------
def _open_spectral_kernel(src_oht_ref, dst_oh_ref, q0_ref, labels_ref, *,
                          n_clusters, n_power_iters, n_kmeans_iters):
    f32 = jnp.float32
    n = src_oht_ref.shape[0]
    k = n_clusters

    # ---- 1. adjacency from edge one-hots (MXU), symmetrize, zero diagonal ----
    a = jax.lax.dot_general(                      # (N, N) edge counts
        src_oht_ref[...], dst_oh_ref[...],
        (((1,), (0,)), ((), ())), preferred_element_type=f32)
    a = jnp.minimum(a, 1.0)                       # binarize multi-edges
    a = jnp.maximum(a, a.T)                       # undirected (one XLU transpose)
    row_ids = jax.lax.broadcasted_iota(jnp.int32, (n, n), 0)
    col_ids = jax.lax.broadcasted_iota(jnp.int32, (n, n), 1)
    diag = row_ids == col_ids
    a = jnp.where(diag, 0.0, a)                   # no self-loops

    # ---- 2. normalized affinity M = D^-1/2 A D^-1/2 (degrees on the MXU) ----
    ones_col = jnp.ones((n, 1), f32)
    ones_row = jnp.ones((1, n), f32)
    deg_r = jax.lax.dot_general(a, ones_col, (((1,), (0,)), ((), ())),
                                preferred_element_type=f32)           # (N, 1)
    deg_c = jax.lax.dot_general(ones_row, a, (((1,), (0,)), ((), ())),
                                preferred_element_type=f32)           # (1, N)
    inv_r = jax.lax.rsqrt(jnp.maximum(deg_r, 1e-12))
    inv_c = jax.lax.rsqrt(jnp.maximum(deg_c, 1e-12))
    m = a * inv_r * inv_c
    # Shifted operator B = M + I: eigenvalues in [0, 2], so the largest-
    # magnitude eigenpairs of B are exactly the largest-algebraic of M.
    b = jnp.where(diag, m + 1.0, m)

    # ---- 3. top-k subspace via subspace iteration (replaces eigh) ----
    row_id_k = jax.lax.broadcasted_iota(jnp.int32, (k, 1), 0)          # (k, 1)

    def orthonormalize_rows(z):
        # Gram-Schmidt over the k rows of z (k, N).  Uses only static slices,
        # reductions and broadcasts (VPU / XLU friendly, no concatenates).
        q = jnp.zeros_like(z)
        for i in range(k):
            v = z[i:i + 1, :]                                          # (1, N)
            proj = jnp.sum(q * v, axis=-1, keepdims=True)              # (k, 1)
            v = v - jnp.sum(proj * q, axis=0, keepdims=True)           # (1, N)
            nrm2 = jnp.sum(v * v, axis=-1, keepdims=True)
            v = v * jax.lax.rsqrt(jnp.maximum(nrm2, 1e-30))
            q = q + jnp.where(row_id_k == i, v, 0.0)                   # write row i
        return q

    def power_body(_, q):
        z = jax.lax.dot_general(q, b, (((1,), (0,)), ((), ())),
                                preferred_element_type=f32)            # (k, N)
        return orthonormalize_rows(z)

    q = jax.lax.fori_loop(0, n_power_iters, power_body,
                          orthonormalize_rows(q0_ref[...]))

    # ---- 4. row-normalized spectral embedding, nodes on lanes: E (k, N) ----
    col_nrm2 = jnp.sum(q * q, axis=0, keepdims=True)                   # (1, N)
    e = q * jax.lax.rsqrt(jnp.maximum(col_nrm2, 1e-24))

    # ---- 5. k-means, all iterations in-kernel, lane-dense ----
    # deterministic init: centroids = embeddings of nodes 0..k-1 (via MXU select)
    sel = (jax.lax.broadcasted_iota(jnp.int32, (k, n), 0)
           == jax.lax.broadcasted_iota(jnp.int32, (k, n), 1)).astype(f32)   # (k, N)
    c0 = jax.lax.dot_general(sel, e, (((1,), (1,)), ((), ())),
                             preferred_element_type=f32)                    # (k, k)
    cluster_ids = row_id_k.astype(f32)                                      # (k, 1)

    def assign(c):
        # dist(j, c) = ||c||^2 - 2 <e_j, c>   (||e_j||^2 dropped: argmin-invariant)
        dots = jax.lax.dot_general(c, e, (((1,), (0,)), ((), ())),
                                   preferred_element_type=f32)              # (k, N)
        c_sq = jnp.sum(c * c, axis=1, keepdims=True)                        # (k, 1)
        dist = c_sq - 2.0 * dots                                            # (k, N)
        best_d = dist[0:1, :]
        best_i = jnp.zeros((1, n), f32)
        for cc in range(1, k):   # unrolled VPU argmin over the k sublanes
            d_cc = dist[cc:cc + 1, :]
            better = d_cc < best_d
            best_d = jnp.where(better, d_cc, best_d)
            best_i = jnp.where(better, jnp.float32(cc), best_i)
        return best_i                                                       # (1, N)

    def km_body(_, c):
        labels = assign(c)                                                  # (1, N)
        onehot = (labels == cluster_ids).astype(f32)                        # (k, N)
        sums = jax.lax.dot_general(onehot, e, (((1,), (1,)), ((), ())),
                                   preferred_element_type=f32)              # (k, k)
        counts = jnp.sum(onehot, axis=1, keepdims=True)                     # (k, 1)
        inv = pl.reciprocal(jnp.maximum(counts, 1.0), approx=True)          # EUP
        newc = sums * inv
        return jnp.where(counts > 0.0, newc, c)       # keep old centroid if empty

    # Original semantics: n_iters x (assign -> update); the returned labels
    # come from centroids after n_iters-1 updates, so: n-1 updates + 1 assign.
    c_final = jax.lax.fori_loop(0, n_kmeans_iters - 1, km_body, c0, unroll=True)
    labels_ref[...] = assign(c_final)                  # (1, N) f32, lane-dense


def open_spectral_pallas(src_oh_t, dst_oh, q0, *, n_power_iters, n_kmeans_iters):
    n = src_oh_t.shape[0]
    k = q0.shape[0]
    kernel = functools.partial(
        _open_spectral_kernel, n_clusters=k,
        n_power_iters=n_power_iters, n_kmeans_iters=n_kmeans_iters)
    return pl.pallas_call(
        kernel,
        out_shape=jax.ShapeDtypeStruct((1, n), jnp.float32),
        in_specs=[pl.BlockSpec(memory_space=pltpu.MemorySpace.VMEM),
                  pl.BlockSpec(memory_space=pltpu.MemorySpace.VMEM),
                  pl.BlockSpec(memory_space=pltpu.MemorySpace.VMEM)],
        out_specs=pl.BlockSpec(memory_space=pltpu.MemorySpace.VMEM),
    )(src_oh_t, dst_oh, q0)


# ----------------------------------------------------------------------------
# OpenSpectral "module": fit = spectral clustering on the adjacency; forward
# returns the fitted labels as float32 (x's values are ignored, exactly like
# the PyTorch forward which only returns sc.labels_).
# ----------------------------------------------------------------------------
@functools.partial(jax.jit,
                   static_argnames=("n_clusters", "n_power_iters", "kmeans_iters"))
def open_spectral_fit_and_forward(x, edge_index, n_clusters,
                                  n_power_iters=50, kmeans_iters=10):
    num_nodes = x.shape[0]     # node feature values unused, mirrors torch forward
    src, dst = edge_index[0], edge_index[1]
    node_ids = jnp.arange(num_nodes, dtype=edge_index.dtype)

    # Edge one-hots as broadcast compares (no XLA scatter).  The (N, N)
    # adjacency itself is built on the MXU inside the fused kernel.
    src_oh_t = (node_ids[:, None] == src[None, :]).astype(jnp.float32)   # (N, E)
    dst_oh = (dst[:, None] == node_ids[None, :]).astype(jnp.float32)     # (E, N)

    # Deterministic subspace-iteration start (any full-rank start works).
    q0 = jax.random.normal(jax.random.PRNGKey(0),
                           (n_clusters, num_nodes), jnp.float32)

    # Single fused Pallas launch: affinity -> embedding -> k-means -> labels.
    # TODO(synk): sklearn's k-means++ with n_init=10 is replaced by a
    # deterministic first-k-nodes init (labels may differ up to permutation).
    labels = open_spectral_pallas(src_oh_t, dst_oh, q0,
                                  n_power_iters=n_power_iters,
                                  n_kmeans_iters=kmeans_iters)            # (1, N)

    # forward returns torch.Tensor(labels_) -> float32 vector of labels
    return labels.reshape(-1)


if __name__ == "__main__":
    key = jax.random.PRNGKey(0)
    k_x, k_src, k_dst = jax.random.split(key, 3)

    num_nodes = 128
    feat_dim = 16
    out_dim = 8            # n_clusters (known_classes=5 + unknown_classes=3)

    # node features (unused by forward, kept for interface fidelity)
    x = jax.random.normal(k_x, (num_nodes, feat_dim), jnp.float32)

    # deterministic edge_index: a ring plus random edges
    ring_src = jnp.arange(num_nodes, dtype=jnp.int32)
    ring_dst = (ring_src + 1) % num_nodes
    rnd_src = jax.random.randint(k_src, (512,), 0, num_nodes, jnp.int32)
    rnd_dst = jax.random.randint(k_dst, (512,), 0, num_nodes, jnp.int32)
    edge_index = jnp.stack(
        [jnp.concatenate([ring_src, rnd_src]),
         jnp.concatenate([ring_dst, rnd_dst])], axis=0)      # (2, E), E = 640

    labels = open_spectral_fit_and_forward(x, edge_index, out_dim)
    labels = jax.block_until_ready(labels)

    assert labels.shape == (num_nodes,)
    assert labels.dtype == jnp.float32
    assert bool(jnp.all(labels >= 0)) and bool(jnp.all(labels < out_dim))
    print("KERNEL_OK")
</pallas_src>

<mosaic_0001>
module attributes {stable_mosaic.version = 11 : i64} {
  func.func @_open_spectral_kernel(%arg0: memref<128x640xf32, #tpu.memory_space<vmem>>, %arg1: memref<640x128xf32, #tpu.memory_space<vmem>>, %arg2: memref<8x128xf32, #tpu.memory_space<vmem>>, %arg3: memref<1x128xf32, #tpu.memory_space<vmem>>) attributes {dimension_semantics = [], scalar_prefetch = 0 : i64, scratch_operands = 0 : i64, tpu.core_type = #tpu.core_type<tc>} {
    %c0 = arith.constant 0 : index
    %c0_0 = arith.constant 0 : index
    %0 = vector.load %arg0[%c0, %c0_0] : memref<128x640xf32, #tpu.memory_space<vmem>>, vector<128x640xf32>
    %c0_1 = arith.constant 0 : index
    %c0_2 = arith.constant 0 : index
    %1 = vector.load %arg1[%c0_1, %c0_2] : memref<640x128xf32, #tpu.memory_space<vmem>>, vector<640x128xf32>
    %cst = arith.constant dense<0.000000e+00> : vector<128x128xf32>
    %2 = tpu.matmul %0, %1, %cst {dimension_numbers = #tpu.dot_dimension_numbers<[1], [0], [0], [1], [0, 0, 1, 1], [], []>} : vector<128x640xf32>, vector<640x128xf32>, vector<128x128xf32> -> vector<128x128xf32>
    %cst_3 = arith.constant 1.000000e+00 : f32
    %3 = vector.broadcast %cst_3 : f32 to vector<128x128xf32>
    %4 = arith.minimumf %2, %3 : vector<128x128xf32>
    %5 = tpu.transpose %4, [1, 0] : vector<128x128xf32> -> vector<128x128xf32>
    %6 = arith.maximumf %4, %5 : vector<128x128xf32>
    %7 = tpu.iota {dimensions = array<i32: 0>} : vector<128x128xi32>
    %8 = tpu.iota {dimensions = array<i32: 1>} : vector<128x128xi32>
    %9 = arith.cmpi eq, %7, %8 : vector<128x128xi32>
    %cst_4 = arith.constant 0.000000e+00 : f32
    %10 = vector.broadcast %cst_4 : f32 to vector<128x128xf32>
    %11 = arith.select %9, %10, %6 : vector<128x128xi1>, vector<128x128xf32>
    %cst_5 = arith.constant 1.000000e+00 : f32
    %12 = vector.broadcast %cst_5 : f32 to vector<128x1xf32>
    %cst_6 = arith.constant 1.000000e+00 : f32
    %13 = vector.broadcast %cst_6 : f32 to vector<1x128xf32>
    %cst_7 = arith.constant dense<0.000000e+00> : vector<128x1xf32>
    %14 = tpu.matmul %11, %12, %cst_7 {dimension_numbers = #tpu.dot_dimension_numbers<[1], [0], [0], [1], [0, 0, 1, 1], [], []>} : vector<128x128xf32>, vector<128x1xf32>, vector<128x1xf32> -> vector<128x1xf32>
    %cst_8 = arith.constant dense<0.000000e+00> : vector<1x128xf32>
    %15 = tpu.matmul %13, %11, %cst_8 {dimension_numbers = #tpu.dot_dimension_numbers<[1], [0], [0], [1], [0, 0, 1, 1], [], []>} : vector<1x128xf32>, vector<128x128xf32>, vector<1x128xf32> -> vector<1x128xf32>
    %cst_9 = arith.constant 9.99999996E-13 : f32
    %16 = vector.broadcast %cst_9 : f32 to vector<128x1xf32>
    %17 = arith.maximumf %14, %16 : vector<128x1xf32>
    %18 = math.rsqrt %17 : vector<128x1xf32>
    %cst_10 = arith.constant 9.99999996E-13 : f32
    %19 = vector.broadcast %cst_10 : f32 to vector<1x128xf32>
    %20 = arith.maximumf %15, %19 : vector<1x128xf32>
    %21 = math.rsqrt %20 : vector<1x128xf32>
    %22 = vector.broadcast %18 : vector<128x1xf32> to vector<128x128xf32>
    %23 = arith.mulf %11, %22 : vector<128x128xf32>
    %24 = vector.broadcast %21 : vector<1x128xf32> to vector<128x128xf32>
    %25 = arith.mulf %23, %24 : vector<128x128xf32>
    %cst_11 = arith.constant 1.000000e+00 : f32
    %26 = vector.broadcast %cst_11 : f32 to vector<128x128xf32>
    %27 = arith.addf %25, %26 : vector<128x128xf32>
    %28 = arith.select %9, %27, %25 : vector<128x128xi1>, vector<128x128xf32>
    %29 = tpu.iota {dimensions = array<i32: 0>} : vector<8x1xi32>
    %c0_12 = arith.constant 0 : index
    %c0_13 = arith.constant 0 : index
    %30 = vector.load %arg2[%c0_12, %c0_13] : memref<8x128xf32, #tpu.memory_space<vmem>>, vector<8x128xf32>
    %cst_14 = arith.constant 0.000000e+00 : f32
    %31 = vector.broadcast %cst_14 : f32 to vector<8x128xf32>
    %32 = vector.extract_strided_slice %30 {offsets = [0, 0], sizes = [1, 128], strides = [1, 1]} : vector<8x128xf32> to vector<1x128xf32>
    %33 = vector.broadcast %32 : vector<1x128xf32> to vector<8x128xf32>
    %34 = arith.mulf %31, %33 : vector<8x128xf32>
    %cst_15 = arith.constant dense<0.000000e+00> : vector<8xf32>
    %35 = vector.multi_reduction <add>, %34, %cst_15 [1] : vector<8x128xf32> to vector<8xf32>
    %36 = vector.shape_cast %35 : vector<8xf32> to vector<8x1xf32>
    %37 = vector.broadcast %36 : vector<8x1xf32> to vector<8x128xf32>
    %38 = arith.mulf %37, %31 : vector<8x128xf32>
    %cst_16 = arith.constant dense<0.000000e+00> : vector<128xf32>
    %39 = vector.multi_reduction <add>, %38, %cst_16 [0] : vector<8x128xf32> to vector<128xf32>
    %40 = vector.shape_cast %39 : vector<128xf32> to vector<1x128xf32>
    %41 = arith.subf %32, %40 : vector<1x128xf32>
    %42 = arith.mulf %41, %41 : vector<1x128xf32>
    %cst_17 = arith.constant dense<0.000000e+00> : vector<1xf32>
    %43 = vector.multi_reduction <add>, %42, %cst_17 [1] : vector<1x128xf32> to vector<1xf32>
    %44 = vector.shape_cast %43 : vector<1xf32> to vector<1x1xf32>
    %cst_18 = arith.constant 1.000000e-30 : f32
    %45 = vector.broadcast %cst_18 : f32 to vector<1x1xf32>
    %46 = arith.maximumf %44, %45 : vector<1x1xf32>
    %47 = math.rsqrt %46 : vector<1x1xf32>
    %48 = vector.broadcast %47 : vector<1x1xf32> to vector<1x128xf32>
    %49 = arith.mulf %41, %48 : vector<1x128xf32>
    %c0_i32 = arith.constant 0 : i32
    %50 = vector.broadcast %c0_i32 : i32 to vector<8x1xi32>
    %51 = arith.cmpi eq, %29, %50 : vector<8x1xi32>
    %cst_19 = arith.constant 0.000000e+00 : f32
    %52 = vector.shape_cast %51 : vector<8x1xi1> to vector<8x1xi1>
    %53 = vector.broadcast %52 : vector<8x1xi1> to vector<8x128xi1>
    %54 = vector.shape_cast %49 : vector<1x128xf32> to vector<1x128xf32>
    %55 = vector.broadcast %54 : vector<1x128xf32> to vector<8x128xf32>
    %56 = vector.broadcast %cst_19 : f32 to vector<8x128xf32>
    %57 = arith.select %53, %55, %56 : vector<8x128xi1>, vector<8x128xf32>
    %58 = arith.addf %31, %57 : vector<8x128xf32>
    %59 = vector.extract_strided_slice %30 {offsets = [1, 0], sizes = [1, 128], strides = [1, 1]} : vector<8x128xf32> to vector<1x128xf32>
    %60 = vector.broadcast %59 : vector<1x128xf32> to vector<8x128xf32>
    %61 = arith.mulf %58, %60 : vector<8x128xf32>
    %cst_20 = arith.constant dense<0.000000e+00> : vector<8xf32>
    %62 = vector.multi_reduction <add>, %61, %cst_20 [1] : vector<8x128xf32> to vector<8xf32>
    %63 = vector.shape_cast %62 : vector<8xf32> to vector<8x1xf32>
    %64 = vector.broadcast %63 : vector<8x1xf32> to vector<8x128xf32>
    %65 = arith.mulf %64, %58 : vector<8x128xf32>
    %cst_21 = arith.constant dense<0.000000e+00> : vector<128xf32>
    %66 = vector.multi_reduction <add>, %65, %cst_21 [0] : vector<8x128xf32> to vector<128xf32>
    %67 = vector.shape_cast %66 : vector<128xf32> to vector<1x128xf32>
    %68 = arith.subf %59, %67 : vector<1x128xf32>
    %69 = arith.mulf %68, %68 : vector<1x128xf32>
    %cst_22 = arith.constant dense<0.000000e+00> : vector<1xf32>
    %70 = vector.multi_reduction <add>, %69, %cst_22 [1] : vector<1x128xf32> to vector<1xf32>
    %71 = vector.shape_cast %70 : vector<1xf32> to vector<1x1xf32>
    %cst_23 = arith.constant 1.000000e-30 : f32
    %72 = vector.broadcast %cst_23 : f32 to vector<1x1xf32>
    %73 = arith.maximumf %71, %72 : vector<1x1xf32>
    %74 = math.rsqrt %73 : vector<1x1xf32>
    %75 = vector.broadcast %74 : vector<1x1xf32> to vector<1x128xf32>
    %76 = arith.mulf %68, %75 : vector<1x128xf32>
    %c1_i32 = arith.constant 1 : i32
    %77 = vector.broadcast %c1_i32 : i32 to vector<8x1xi32>
    %78 = arith.cmpi eq, %29, %77 : vector<8x1xi32>
    %cst_24 = arith.constant 0.000000e+00 : f32
    %79 = vector.shape_cast %78 : vector<8x1xi1> to vector<8x1xi1>
    %80 = vector.broadcast %79 : vector<8x1xi1> to vector<8x128xi1>
    %81 = vector.shape_cast %76 : vector<1x128xf32> to vector<1x128xf32>
    %82 = vector.broadcast %81 : vector<1x128xf32> to vector<8x128xf32>
    %83 = vector.broadcast %cst_24 : f32 to vector<8x128xf32>
    %84 = arith.select %80, %82, %83 : vector<8x128xi1>, vector<8x128xf32>
    %85 = arith.addf %58, %84 : vector<8x128xf32>
    %86 = vector.extract_strided_slice %30 {offsets = [2, 0], sizes = [1, 128], strides = [1, 1]} : vector<8x128xf32> to vector<1x128xf32>
    %87 = vector.broadcast %86 : vector<1x128xf32> to vector<8x128xf32>
    %88 = arith.mulf %85, %87 : vector<8x128xf32>
    %cst_25 = arith.constant dense<0.000000e+00> : vector<8xf32>
    %89 = vector.multi_reduction <add>, %88, %cst_25 [1] : vector<8x128xf32> to vector<8xf32>
    %90 = vector.shape_cast %89 : vector<8xf32> to vector<8x1xf32>
    %91 = vector.broadcast %90 : vector<8x1xf32> to vector<8x128xf32>
    %92 = arith.mulf %91, %85 : vector<8x128xf32>
    %cst_26 = arith.constant dense<0.000000e+00> : vector<128xf32>
    %93 = vector.multi_reduction <add>, %92, %cst_26 [0] : vector<8x128xf32> to vector<128xf32>
    %94 = vector.shape_cast %93 : vector<128xf32> to vector<1x128xf32>
    %95 = arith.subf %86, %94 : vector<1x128xf32>
    %96 = arith.mulf %95, %95 : vector<1x128xf32>
    %cst_27 = arith.constant dense<0.000000e+00> : vector<1xf32>
    %97 = vector.multi_reduction <add>, %96, %cst_27 [1] : vector<1x128xf32> to vector<1xf32>
    %98 = vector.shape_cast %97 : vector<1xf32> to vector<1x1xf32>
    %cst_28 = arith.constant 1.000000e-30 : f32
    %99 = vector.broadcast %cst_28 : f32 to vector<1x1xf32>
    %100 = arith.maximumf %98, %99 : vector<1x1xf32>
    %101 = math.rsqrt %100 : vector<1x1xf32>
    %102 = vector.broadcast %101 : vector<1x1xf32> to vector<1x128xf32>
    %103 = arith.mulf %95, %102 : vector<1x128xf32>
    %c2_i32 = arith.constant 2 : i32
    %104 = vector.broadcast %c2_i32 : i32 to vector<8x1xi32>
    %105 = arith.cmpi eq, %29, %104 : vector<8x1xi32>
    %cst_29 = arith.constant 0.000000e+00 : f32
    %106 = vector.shape_cast %105 : vector<8x1xi1> to vector<8x1xi1>
    %107 = vector.broadcast %106 : vector<8x1xi1> to vector<8x128xi1>
    %108 = vector.shape_cast %103 : vector<1x128xf32> to vector<1x128xf32>
    %109 = vector.broadcast %108 : vector<1x128xf32> to vector<8x128xf32>
    %110 = vector.broadcast %cst_29 : f32 to vector<8x128xf32>
    %111 = arith.select %107, %109, %110 : vector<8x128xi1>, vector<8x128xf32>
    %112 = arith.addf %85, %111 : vector<8x128xf32>
    %113 = vector.extract_strided_slice %30 {offsets = [3, 0], sizes = [1, 128], strides = [1, 1]} : vector<8x128xf32> to vector<1x128xf32>
    %114 = vector.broadcast %113 : vector<1x128xf32> to vector<8x128xf32>
    %115 = arith.mulf %112, %114 : vector<8x128xf32>
    %cst_30 = arith.constant dense<0.000000e+00> : vector<8xf32>
    %116 = vector.multi_reduction <add>, %115, %cst_30 [1] : vector<8x128xf32> to vector<8xf32>
    %117 = vector.shape_cast %116 : vector<8xf32> to vector<8x1xf32>
    %118 = vector.broadcast %117 : vector<8x1xf32> to vector<8x128xf32>
    %119 = arith.mulf %118, %112 : vector<8x128xf32>
    %cst_31 = arith.constant dense<0.000000e+00> : vector<128xf32>
    %120 = vector.multi_reduction <add>, %119, %cst_31 [0] : vector<8x128xf32> to vector<128xf32>
    %121 = vector.shape_cast %120 : vector<128xf32> to vector<1x128xf32>
    %122 = arith.subf %113, %121 : vector<1x128xf32>
    %123 = arith.mulf %122, %122 : vector<1x128xf32>
    %cst_32 = arith.constant dense<0.000000e+00> : vector<1xf32>
    %124 = vector.multi_reduction <add>, %123, %cst_32 [1] : vector<1x128xf32> to vector<1xf32>
    %125 = vector.shape_cast %124 : vector<1xf32> to vector<1x1xf32>
    %cst_33 = arith.constant 1.000000e-30 : f32
    %126 = vector.broadcast %cst_33 : f32 to vector<1x1xf32>
    %127 = arith.maximumf %125, %126 : vector<1x1xf32>
    %128 = math.rsqrt %127 : vector<1x1xf32>
    %129 = vector.broadcast %128 : vector<1x1xf32> to vector<1x128xf32>
    %130 = arith.mulf %122, %129 : vector<1x128xf32>
    %c3_i32 = arith.constant 3 : i32
    %131 = vector.broadcast %c3_i32 : i32 to vector<8x1xi32>
    %132 = arith.cmpi eq, %29, %131 : vector<8x1xi32>
    %cst_34 = arith.constant 0.000000e+00 : f32
    %133 = vector.shape_cast %132 : vector<8x1xi1> to vector<8x1xi1>
    %134 = vector.broadcast %133 : vector<8x1xi1> to vector<8x128xi1>
    %135 = vector.shape_cast %130 : vector<1x128xf32> to vector<1x128xf32>
    %136 = vector.broadcast %135 : vector<1x128xf32> to vector<8x128xf32>
    %137 = vector.broadcast %cst_34 : f32 to vector<8x128xf32>
    %138 = arith.select %134, %136, %137 : vector<8x128xi1>, vector<8x128xf32>
    %139 = arith.addf %112, %138 : vector<8x128xf32>
    %140 = vector.extract_strided_slice %30 {offsets = [4, 0], sizes = [1, 128], strides = [1, 1]} : vector<8x128xf32> to vector<1x128xf32>
    %141 = vector.broadcast %140 : vector<1x128xf32> to vector<8x128xf32>
    %142 = arith.mulf %139, %141 : vector<8x128xf32>
    %cst_35 = arith.constant dense<0.000000e+00> : vector<8xf32>
    %143 = vector.multi_reduction <add>, %142, %cst_35 [1] : vector<8x128xf32> to vector<8xf32>
    %144 = vector.shape_cast %143 : vector<8xf32> to vector<8x1xf32>
    %145 = vector.broadcast %144 : vector<8x1xf32> to vector<8x128xf32>
    %146 = arith.mulf %145, %139 : vector<8x128xf32>
    %cst_36 = arith.constant dense<0.000000e+00> : vector<128xf32>
    %147 = vector.multi_reduction <add>, %146, %cst_36 [0] : vector<8x128xf32> to vector<128xf32>
    %148 = vector.shape_cast %147 : vector<128xf32> to vector<1x128xf32>
    %149 = arith.subf %140, %148 : vector<1x128xf32>
    %150 = arith.mulf %149, %149 : vector<1x128xf32>
    %cst_37 = arith.constant dense<0.000000e+00> : vector<1xf32>
    %151 = vector.multi_reduction <add>, %150, %cst_37 [1] : vector<1x128xf32> to vector<1xf32>
    %152 = vector.shape_cast %151 : vector<1xf32> to vector<1x1xf32>
    %cst_38 = arith.constant 1.000000e-30 : f32
    %153 = vector.broadcast %cst_38 : f32 to vector<1x1xf32>
    %154 = arith.maximumf %152, %153 : vector<1x1xf32>
    %155 = math.rsqrt %154 : vector<1x1xf32>
    %156 = vector.broadcast %155 : vector<1x1xf32> to vector<1x128xf32>
    %157 = arith.mulf %149, %156 : vector<1x128xf32>
    %c4_i32 = arith.constant 4 : i32
    %158 = vector.broadcast %c4_i32 : i32 to vector<8x1xi32>
    %159 = arith.cmpi eq, %29, %158 : vector<8x1xi32>
    %cst_39 = arith.constant 0.000000e+00 : f32
    %160 = vector.shape_cast %159 : vector<8x1xi1> to vector<8x1xi1>
    %161 = vector.broadcast %160 : vector<8x1xi1> to vector<8x128xi1>
    %162 = vector.shape_cast %157 : vector<1x128xf32> to vector<1x128xf32>
    %163 = vector.broadcast %162 : vector<1x128xf32> to vector<8x128xf32>
    %164 = vector.broadcast %cst_39 : f32 to vector<8x128xf32>
    %165 = arith.select %161, %163, %164 : vector<8x128xi1>, vector<8x128xf32>
    %166 = arith.addf %139, %165 : vector<8x128xf32>
    %167 = vector.extract_strided_slice %30 {offsets = [5, 0], sizes = [1, 128], strides = [1, 1]} : vector<8x128xf32> to vector<1x128xf32>
    %168 = vector.broadcast %167 : vector<1x128xf32> to vector<8x128xf32>
    %169 = arith.mulf %166, %168 : vector<8x128xf32>
    %cst_40 = arith.constant dense<0.000000e+00> : vector<8xf32>
    %170 = vector.multi_reduction <add>, %169, %cst_40 [1] : vector<8x128xf32> to vector<8xf32>
    %171 = vector.shape_cast %170 : vector<8xf32> to vector<8x1xf32>
    %172 = vector.broadcast %171 : vector<8x1xf32> to vector<8x128xf32>
    %173 = arith.mulf %172, %166 : vector<8x128xf32>
    %cst_41 = arith.constant dense<0.000000e+00> : vector<128xf32>
    %174 = vector.multi_reduction <add>, %173, %cst_41 [0] : vector<8x128xf32> to vector<128xf32>
    %175 = vector.shape_cast %174 : vector<128xf32> to vector<1x128xf32>
    %176 = arith.subf %167, %175 : vector<1x128xf32>
    %177 = arith.mulf %176, %176 : vector<1x128xf32>
    %cst_42 = arith.constant dense<0.000000e+00> : vector<1xf32>
    %178 = vector.multi_reduction <add>, %177, %cst_42 [1] : vector<1x128xf32> to vector<1xf32>
    %179 = vector.shape_cast %178 : vector<1xf32> to vector<1x1xf32>
    %cst_43 = arith.constant 1.000000e-30 : f32
    %180 = vector.broadcast %cst_43 : f32 to vector<1x1xf32>
    %181 = arith.maximumf %179, %180 : vector<1x1xf32>
    %182 = math.rsqrt %181 : vector<1x1xf32>
    %183 = vector.broadcast %182 : vector<1x1xf32> to vector<1x128xf32>
    %184 = arith.mulf %176, %183 : vector<1x128xf32>
    %c5_i32 = arith.constant 5 : i32
    %185 = vector.broadcast %c5_i32 : i32 to vector<8x1xi32>
    %186 = arith.cmpi eq, %29, %185 : vector<8x1xi32>
    %cst_44 = arith.constant 0.000000e+00 : f32
    %187 = vector.shape_cast %186 : vector<8x1xi1> to vector<8x1xi1>
    %188 = vector.broadcast %187 : vector<8x1xi1> to vector<8x128xi1>
    %189 = vector.shape_cast %184 : vector<1x128xf32> to vector<1x128xf32>
    %190 = vector.broadcast %189 : vector<1x128xf32> to vector<8x128xf32>
    %191 = vector.broadcast %cst_44 : f32 to vector<8x128xf32>
    %192 = arith.select %188, %190, %191 : vector<8x128xi1>, vector<8x128xf32>
    %193 = arith.addf %166, %192 : vector<8x128xf32>
    %194 = vector.extract_strided_slice %30 {offsets = [6, 0], sizes = [1, 128], strides = [1, 1]} : vector<8x128xf32> to vector<1x128xf32>
    %195 = vector.broadcast %194 : vector<1x128xf32> to vector<8x128xf32>
    %196 = arith.mulf %193, %195 : vector<8x128xf32>
    %cst_45 = arith.constant dense<0.000000e+00> : vector<8xf32>
    %197 = vector.multi_reduction <add>, %196, %cst_45 [1] : vector<8x128xf32> to vector<8xf32>
    %198 = vector.shape_cast %197 : vector<8xf32> to vector<8x1xf32>
    %199 = vector.broadcast %198 : vector<8x1xf32> to vector<8x128xf32>
    %200 = arith.mulf %199, %193 : vector<8x128xf32>
    %cst_46 = arith.constant dense<0.000000e+00> : vector<128xf32>
    %201 = vector.multi_reduction <add>, %200, %cst_46 [0] : vector<8x128xf32> to vector<128xf32>
    %202 = vector.shape_cast %201 : vector<128xf32> to vector<1x128xf32>
    %203 = arith.subf %194, %202 : vector<1x128xf32>
    %204 = arith.mulf %203, %203 : vector<1x128xf32>
    %cst_47 = arith.constant dense<0.000000e+00> : vector<1xf32>
    %205 = vector.multi_reduction <add>, %204, %cst_47 [1] : vector<1x128xf32> to vector<1xf32>
    %206 = vector.shape_cast %205 : vector<1xf32> to vector<1x1xf32>
    %cst_48 = arith.constant 1.000000e-30 : f32
    %207 = vector.broadcast %cst_48 : f32 to vector<1x1xf32>
    %208 = arith.maximumf %206, %207 : vector<1x1xf32>
    %209 = math.rsqrt %208 : vector<1x1xf32>
    %210 = vector.broadcast %209 : vector<1x1xf32> to vector<1x128xf32>
    %211 = arith.mulf %203, %210 : vector<1x128xf32>
    %c6_i32 = arith.constant 6 : i32
    %212 = vector.broadcast %c6_i32 : i32 to vector<8x1xi32>
    %213 = arith.cmpi eq, %29, %212 : vector<8x1xi32>
    %cst_49 = arith.constant 0.000000e+00 : f32
    %214 = vector.shape_cast %213 : vector<8x1xi1> to vector<8x1xi1>
    %215 = vector.broadcast %214 : vector<8x1xi1> to vector<8x128xi1>
    %216 = vector.shape_cast %211 : vector<1x128xf32> to vector<1x128xf32>
    %217 = vector.broadcast %216 : vector<1x128xf32> to vector<8x128xf32>
    %218 = vector.broadcast %cst_49 : f32 to vector<8x128xf32>
    %219 = arith.select %215, %217, %218 : vector<8x128xi1>, vector<8x128xf32>
    %220 = arith.addf %193, %219 : vector<8x128xf32>
    %221 = vector.extract_strided_slice %30 {offsets = [7, 0], sizes = [1, 128], strides = [1, 1]} : vector<8x128xf32> to vector<1x128xf32>
    %222 = vector.broadcast %221 : vector<1x128xf32> to vector<8x128xf32>
    %223 = arith.mulf %220, %222 : vector<8x128xf32>
    %cst_50 = arith.constant dense<0.000000e+00> : vector<8xf32>
    %224 = vector.multi_reduction <add>, %223, %cst_50 [1] : vector<8x128xf32> to vector<8xf32>
    %225 = vector.shape_cast %224 : vector<8xf32> to vector<8x1xf32>
    %226 = vector.broadcast %225 : vector<8x1xf32> to vector<8x128xf32>
    %227 = arith.mulf %226, %220 : vector<8x128xf32>
    %cst_51 = arith.constant dense<0.000000e+00> : vector<128xf32>
    %228 = vector.multi_reduction <add>, %227, %cst_51 [0] : vector<8x128xf32> to vector<128xf32>
    %229 = vector.shape_cast %228 : vector<128xf32> to vector<1x128xf32>
    %230 = arith.subf %221, %229 : vector<1x128xf32>
    %231 = arith.mulf %230, %230 : vector<1x128xf32>
    %cst_52 = arith.constant dense<0.000000e+00> : vector<1xf32>
    %232 = vector.multi_reduction <add>, %231, %cst_52 [1] : vector<1x128xf32> to vector<1xf32>
    %233 = vector.shape_cast %232 : vector<1xf32> to vector<1x1xf32>
    %cst_53 = arith.constant 1.000000e-30 : f32
    %234 = vector.broadcast %cst_53 : f32 to vector<1x1xf32>
    %235 = arith.maximumf %233, %234 : vector<1x1xf32>
    %236 = math.rsqrt %235 : vector<1x1xf32>
    %237 = vector.broadcast %236 : vector<1x1xf32> to vector<1x128xf32>
    %238 = arith.mulf %230, %237 : vector<1x128xf32>
    %c7_i32 = arith.constant 7 : i32
    %239 = vector.broadcast %c7_i32 : i32 to vector<8x1xi32>
    %240 = arith.cmpi eq, %29, %239 : vector<8x1xi32>
    %cst_54 = arith.constant 0.000000e+00 : f32
    %241 = vector.shape_cast %240 : vector<8x1xi1> to vector<8x1xi1>
    %242 = vector.broadcast %241 : vector<8x1xi1> to vector<8x128xi1>
    %243 = vector.shape_cast %238 : vector<1x128xf32> to vector<1x128xf32>
    %244 = vector.broadcast %243 : vector<1x128xf32> to vector<8x128xf32>
    %245 = vector.broadcast %cst_54 : f32 to vector<8x128xf32>
    %246 = arith.select %242, %244, %245 : vector<8x128xi1>, vector<8x128xf32>
    %247 = arith.addf %220, %246 : vector<8x128xf32>
    %c0_i32_55 = arith.constant 0 : i32
    %c50_i32 = arith.constant 50 : i32
    %248 = arith.addi %c0_i32_55, %c50_i32 : i32
    %c1_i32_56 = arith.constant 1 : i32
    %249 = scf.for %arg4 = %c0_i32_55 to %248 step %c1_i32_56 iter_args(%arg5 = %247) -> (vector<8x128xf32>)  : i32 {
      %cst_216 = arith.constant dense<0.000000e+00> : vector<8x128xf32>
      %868 = tpu.matmul %arg5, %28, %cst_216 {dimension_numbers = #tpu.dot_dimension_numbers<[1], [0], [0], [1], [0, 0, 1, 1], [], []>} : vector<8x128xf32>, vector<128x128xf32>, vector<8x128xf32> -> vector<8x128xf32>
      %cst_217 = arith.constant 0.000000e+00 : f32
      %869 = vector.broadcast %cst_217 : f32 to vector<8x128xf32>
      %870 = vector.extract_strided_slice %868 {offsets = [0, 0], sizes = [1, 128], strides = [1, 1]} : vector<8x128xf32> to vector<1x128xf32>
      %871 = vector.broadcast %870 : vector<1x128xf32> to vector<8x128xf32>
      %872 = arith.mulf %869, %871 : vector<8x128xf32>
      %cst_218 = arith.constant dense<0.000000e+00> : vector<8xf32>
      %873 = vector.multi_reduction <add>, %872, %cst_218 [1] : vector<8x128xf32> to vector<8xf32>
      %874 = vector.shape_cast %873 : vector<8xf32> to vector<8x1xf32>
      %875 = vector.broadcast %874 : vector<8x1xf32> to vector<8x128xf32>
      %876 = arith.mulf %875, %869 : vector<8x128xf32>
      %cst_219 = arith.constant dense<0.000000e+00> : vector<128xf32>
      %877 = vector.multi_reduction <add>, %876, %cst_219 [0] : vector<8x128xf32> to vector<128xf32>
      %878 = vector.shape_cast %877 : vector<128xf32> to vector<1x128xf32>
      %879 = arith.subf %870, %878 : vector<1x128xf32>
      %880 = arith.mulf %879, %879 : vector<1x128xf32>
      %cst_220 = arith.constant dense<0.000000e+00> : vector<1xf32>
      %881 = vector.multi_reduction <add>, %880, %cst_220 [1] : vector<1x128xf32> to vector<1xf32>
      %882 = vector.shape_cast %881 : vector<1xf32> to vector<1x1xf32>
      %cst_221 = arith.constant 1.000000e-30 : f32
      %883 = vector.broadcast %cst_221 : f32 to vector<1x1xf32>
      %884 = arith.maximumf %882, %883 : vector<1x1xf32>
      %885 = math.rsqrt %884 : vector<1x1xf32>
      %886 = vector.broadcast %885 : vector<1x1xf32> to vector<1x128xf32>
      %887 = arith.mulf %879, %886 : vector<1x128xf32>
      %c0_i32_222 = arith.constant 0 : i32
      %888 = vector.broadcast %c0_i32_222 : i32 to vector<8x1xi32>
      %889 = arith.cmpi eq, %29, %888 : vector<8x1xi32>
      %cst_223 = arith.constant 0.000000e+00 : f32
      %890 = vector.shape_cast %889 : vector<8x1xi1> to vector<8x1xi1>
      %891 = vector.broadcast %890 : vector<8x1xi1> to vector<8x128xi1>
      %892 = vector.shape_cast %887 : vector<1x128xf32> to vector<1x128xf32>
      %893 = vector.broadcast %892 : vector<1x128xf32> to vector<8x128xf32>
      %894 = vector.broadcast %cst_223 : f32 to vector<8x128xf32>
      %895 = arith.select %891, %893, %894 : vector<8x128xi1>, vector<8x128xf32>
      %896 = arith.addf %869, %895 : vector<8x128xf32>
      %897 = vector.extract_strided_slice %868 {offsets = [1, 0], sizes = [1, 128], strides = [1, 1]} : vector<8x128xf32> to vector<1x128xf32>
      %898 = vector.broadcast %897 : vector<1x128xf32> to vector<8x128xf32>
      %899 = arith.mulf %896, %898 : vector<8x128xf32>
      %cst_224 = arith.constant dense<0.000000e+00> : vector<8xf32>
      %900 = vector.multi_reduction <add>, %899, %cst_224 [1] : vector<8x128xf32> to vector<8xf32>
      %901 = vector.shape_cast %900 : vector<8xf32> to vector<8x1xf32>
      %902 = vector.broadcast %901 : vector<8x1xf32> to vector<8x128xf32>
      %903 = arith.mulf %902, %896 : vector<8x128xf32>
      %cst_225 = arith.constant dense<0.000000e+00> : vector<128xf32>
      %904 = vector.multi_reduction <add>, %903, %cst_225 [0] : vector<8x128xf32> to vector<128xf32>
      %905 = vector.shape_cast %904 : vector<128xf32> to vector<1x128xf32>
      %906 = arith.subf %897, %905 : vector<1x128xf32>
      %907 = arith.mulf %906, %906 : vector<1x128xf32>
      %cst_226 = arith.constant dense<0.000000e+00> : vector<1xf32>
      %908 = vector.multi_reduction <add>, %907, %cst_226 [1] : vector<1x128xf32> to vector<1xf32>
      %909 = vector.shape_cast %908 : vector<1xf32> to vector<1x1xf32>
      %cst_227 = arith.constant 1.000000e-30 : f32
      %910 = vector.broadcast %cst_227 : f32 to vector<1x1xf32>
      %911 = arith.maximumf %909, %910 : vector<1x1xf32>
      %912 = math.rsqrt %911 : vector<1x1xf32>
      %913 = vector.broadcast %912 : vector<1x1xf32> to vector<1x128xf32>
      %914 = arith.mulf %906, %913 : vector<1x128xf32>
      %c1_i32_228 = arith.constant 1 : i32
      %915 = vector.broadcast %c1_i32_228 : i32 to vector<8x1xi32>
      %916 = arith.cmpi eq, %29, %915 : vector<8x1xi32>
      %cst_229 = arith.constant 0.000000e+00 : f32
      %917 = vector.shape_cast %916 : vector<8x1xi1> to vector<8x1xi1>
      %918 = vector.broadcast %917 : vector<8x1xi1> to vector<8x128xi1>
      %919 = vector.shape_cast %914 : vector<1x128xf32> to vector<1x128xf32>
      %920 = vector.broadcast %919 : vector<1x128xf32> to vector<8x128xf32>
      %921 = vector.broadcast %cst_229 : f32 to vector<8x128xf32>
      %922 = arith.select %918, %920, %921 : vector<8x128xi1>, vector<8x128xf32>
      %923 = arith.addf %896, %922 : vector<8x128xf32>
      %924 = vector.extract_strided_slice %868 {offsets = [2, 0], sizes = [1, 128], strides = [1, 1]} : vector<8x128xf32> to vector<1x128xf32>
      %925 = vector.broadcast %924 : vector<1x128xf32> to vector<8x128xf32>
      %926 = arith.mulf %923, %925 : vector<8x128xf32>
      %cst_230 = arith.constant dense<0.000000e+00> : vector<8xf32>
      %927 = vector.multi_reduction <add>, %926, %cst_230 [1] : vector<8x128xf32> to vector<8xf32>
      %928 = vector.shape_cast %927 : vector<8xf32> to vector<8x1xf32>
      %929 = vector.broadcast %928 : vector<8x1xf32> to vector<8x128xf32>
      %930 = arith.mulf %929, %923 : vector<8x128xf32>
      %cst_231 = arith.constant dense<0.000000e+00> : vector<128xf32>
      %931 = vector.multi_reduction <add>, %930, %cst_231 [0] : vector<8x128xf32> to vector<128xf32>
      %932 = vector.shape_cast %931 : vector<128xf32> to vector<1x128xf32>
      %933 = arith.subf %924, %932 : vector<1x128xf32>
      %934 = arith.mulf %933, %933 : vector<1x128xf32>
      %cst_232 = arith.constant dense<0.000000e+00> : vector<1xf32>
      %935 = vector.multi_reduction <add>, %934, %cst_232 [1] : vector<1x128xf32> to vector<1xf32>
      %936 = vector.shape_cast %935 : vector<1xf32> to vector<1x1xf32>
      %cst_233 = arith.constant 1.000000e-30 : f32
      %937 = vector.broadcast %cst_233 : f32 to vector<1x1xf32>
      %938 = arith.maximumf %936, %937 : vector<1x1xf32>
      %939 = math.rsqrt %938 : vector<1x1xf32>
      %940 = vector.broadcast %939 : vector<1x1xf32> to vector<1x128xf32>
      %941 = arith.mulf %933, %940 : vector<1x128xf32>
      %c2_i32_234 = arith.constant 2 : i32
      %942 = vector.broadcast %c2_i32_234 : i32 to vector<8x1xi32>
      %943 = arith.cmpi eq, %29, %942 : vector<8x1xi32>
      %cst_235 = arith.constant 0.000000e+00 : f32
      %944 = vector.shape_cast %943 : vector<8x1xi1> to vector<8x1xi1>
      %945 = vector.broadcast %944 : vector<8x1xi1> to vector<8x128xi1>
      %946 = vector.shape_cast %941 : vector<1x128xf32> to vector<1x128xf32>
      %947 = vector.broadcast %946 : vector<1x128xf32> to vector<8x128xf32>
      %948 = vector.broadcast %cst_235 : f32 to vector<8x128xf32>
      %949 = arith.select %945, %947, %948 : vector<8x128xi1>, vector<8x128xf32>
      %950 = arith.addf %923, %949 : vector<8x128xf32>
      %951 = vector.extract_strided_slice %868 {offsets = [3, 0], sizes = [1, 128], strides = [1, 1]} : vector<8x128xf32> to vector<1x128xf32>
      %952 = vector.broadcast %951 : vector<1x128xf32> to vector<8x128xf32>
      %953 = arith.mulf %950, %952 : vector<8x128xf32>
      %cst_236 = arith.constant dense<0.000000e+00> : vector<8xf32>
      %954 = vector.multi_reduction <add>, %953, %cst_236 [1] : vector<8x128xf32> to vector<8xf32>
      %955 = vector.shape_cast %954 : vector<8xf32> to vector<8x1xf32>
      %956 = vector.broadcast %955 : vector<8x1xf32> to vector<8x128xf32>
      %957 = arith.mulf %956, %950 : vector<8x128xf32>
      %cst_237 = arith.constant dense<0.000000e+00> : vector<128xf32>
      %958 = vector.multi_reduction <add>, %957, %cst_237 [0] : vector<8x128xf32> to vector<128xf32>
      %959 = vector.shape_cast %958 : vector<128xf32> to vector<1x128xf32>
      %960 = arith.subf %951, %959 : vector<1x128xf32>
      %961 = arith.mulf %960, %960 : vector<1x128xf32>
      %cst_238 = arith.constant dense<0.000000e+00> : vector<1xf32>
      %962 = vector.multi_reduction <add>, %961, %cst_238 [1] : vector<1x128xf32> to vector<1xf32>
      %963 = vector.shape_cast %962 : vector<1xf32> to vector<1x1xf32>
      %cst_239 = arith.constant 1.000000e-30 : f32
      %964 = vector.broadcast %cst_239 : f32 to vector<1x1xf32>
      %965 = arith.maximumf %963, %964 : vector<1x1xf32>
      %966 = math.rsqrt %965 : vector<1x1xf32>
      %967 = vector.broadcast %966 : vector<1x1xf32> to vector<1x128xf32>
      %968 = arith.mulf %960, %967 : vector<1x128xf32>
      %c3_i32_240 = arith.constant 3 : i32
      %969 = vector.broadcast %c3_i32_240 : i32 to vector<8x1xi32>
      %970 = arith.cmpi eq, %29, %969 : vector<8x1xi32>
      %cst_241 = arith.constant 0.000000e+00 : f32
      %971 = vector.shape_cast %970 : vector<8x1xi1> to vector<8x1xi1>
      %972 = vector.broadcast %971 : vector<8x1xi1> to vector<8x128xi1>
      %973 = vector.shape_cast %968 : vector<1x128xf32> to vector<1x128xf32>
      %974 = vector.broadcast %973 : vector<1x128xf32> to vector<8x128xf32>
      %975 = vector.broadcast %cst_241 : f32 to vector<8x128xf32>
      %976 = arith.select %972, %974, %975 : vector<8x128xi1>, vector<8x128xf32>
      %977 = arith.addf %950, %976 : vector<8x128xf32>
      %978 = vector.extract_strided_slice %868 {offsets = [4, 0], sizes = [1, 128], strides = [1, 1]} : vector<8x128xf32> to vector<1x128xf32>
      %979 = vector.broadcast %978 : vector<1x128xf32> to vector<8x128xf32>
      %980 = arith.mulf %977, %979 : vector<8x128xf32>
      %cst_242 = arith.constant dense<0.000000e+00> : vector<8xf32>
      %981 = vector.multi_reduction <add>, %980, %cst_242 [1] : vector<8x128xf32> to vector<8xf32>
      %982 = vector.shape_cast %981 : vector<8xf32> to vector<8x1xf32>
      %983 = vector.broadcast %982 : vector<8x1xf32> to vector<8x128xf32>
      %984 = arith.mulf %983, %977 : vector<8x128xf32>
      %cst_243 = arith.constant dense<0.000000e+00> : vector<128xf32>
      %985 = vector.multi_reduction <add>, %984, %cst_243 [0] : vector<8x128xf32> to vector<128xf32>
      %986 = vector.shape_cast %985 : vector<128xf32> to vector<1x128xf32>
      %987 = arith.subf %978, %986 : vector<1x128xf32>
      %988 = arith.mulf %987, %987 : vector<1x128xf32>
      %cst_244 = arith.constant dense<0.000000e+00> : vector<1xf32>
      %989 = vector.multi_reduction <add>, %988, %cst_244 [1] : vector<1x128xf32> to vector<1xf32>
      %990 = vector.shape_cast %989 : vector<1xf32> to vector<1x1xf32>
      %cst_245 = arith.constant 1.000000e-30 : f32
      %991 = vector.broadcast %cst_245 : f32 to vector<1x1xf32>
      %992 = arith.maximumf %990, %991 : vector<1x1xf32>
      %993 = math.rsqrt %992 : vector<1x1xf32>
      %994 = vector.broadcast %993 : vector<1x1xf32> to vector<1x128xf32>
      %995 = arith.mulf %987, %994 : vector<1x128xf32>
      %c4_i32_246 = arith.constant 4 : i32
      %996 = vector.broadcast %c4_i32_246 : i32 to vector<8x1xi32>
      %997 = arith.cmpi eq, %29, %996 : vector<8x1xi32>
      %cst_247 = arith.constant 0.000000e+00 : f32
      %998 = vector.shape_cast %997 : vector<8x1xi1> to vector<8x1xi1>
      %999 = vector.broadcast %998 : vector<8x1xi1> to vector<8x128xi1>
      %1000 = vector.shape_cast %995 : vector<1x128xf32> to vector<1x128xf32>
      %1001 = vector.broadcast %1000 : vector<1x128xf32> to vector<8x128xf32>
      %1002 = vector.broadcast %cst_247 : f32 to vector<8x128xf32>
      %1003 = arith.select %999, %1001, %1002 : vector<8x128xi1>, vector<8x128xf32>
      %1004 = arith.addf %977, %1003 : vector<8x128xf32>
      %1005 = vector.extract_strided_slice %868 {offsets = [5, 0], sizes = [1, 128], strides = [1, 1]} : vector<8x128xf32> to vector<1x128xf32>
      %1006 = vector.broadcast %1005 : vector<1x128xf32> to vector<8x128xf32>
      %1007 = arith.mulf %1004, %1006 : vector<8x128xf32>
      %cst_248 = arith.constant dense<0.000000e+00> : vector<8xf32>
      %1008 = vector.multi_reduction <add>, %1007, %cst_248 [1] : vector<8x128xf32> to vector<8xf32>
      %1009 = vector.shape_cast %1008 : vector<8xf32> to vector<8x1xf32>
      %1010 = vector.broadcast %1009 : vector<8x1xf32> to vector<8x128xf32>
      %1011 = arith.mulf %1010, %1004 : vector<8x128xf32>
      %cst_249 = arith.constant dense<0.000000e+00> : vector<128xf32>
      %1012 = vector.multi_reduction <add>, %1011, %cst_249 [0] : vector<8x128xf32> to vector<128xf32>
      %1013 = vector.shape_cast %1012 : vector<128xf32> to vector<1x128xf32>
      %1014 = arith.subf %1005, %1013 : vector<1x128xf32>
      %1015 = arith.mulf %1014, %1014 : vector<1x128xf32>
      %cst_250 = arith.constant dense<0.000000e+00> : vector<1xf32>
      %1016 = vector.multi_reduction <add>, %1015, %cst_250 [1] : vector<1x128xf32> to vector<1xf32>
      %1017 = vector.shape_cast %1016 : vector<1xf32> to vector<1x1xf32>
      %cst_251 = arith.constant 1.000000e-30 : f32
      %1018 = vector.broadcast %cst_251 : f32 to vector<1x1xf32>
      %1019 = arith.maximumf %1017, %1018 : vector<1x1xf32>
      %1020 = math.rsqrt %1019 : vector<1x1xf32>
      %1021 = vector.broadcast %1020 : vector<1x1xf32> to vector<1x128xf32>
      %1022 = arith.mulf %1014, %1021 : vector<1x128xf32>
      %c5_i32_252 = arith.constant 5 : i32
      %1023 = vector.broadcast %c5_i32_252 : i32 to vector<8x1xi32>
      %1024 = arith.cmpi eq, %29, %1023 : vector<8x1xi32>
      %cst_253 = arith.constant 0.000000e+00 : f32
      %1025 = vector.shape_cast %1024 : vector<8x1xi1> to vector<8x1xi1>
      %1026 = vector.broadcast %1025 : vector<8x1xi1> to vector<8x128xi1>
      %1027 = vector.shape_cast %1022 : vector<1x128xf32> to vector<1x128xf32>
      %1028 = vector.broadcast %1027 : vector<1x128xf32> to vector<8x128xf32>
      %1029 = vector.broadcast %cst_253 : f32 to vector<8x128xf32>
      %1030 = arith.select %1026, %1028, %1029 : vector<8x128xi1>, vector<8x128xf32>
      %1031 = arith.addf %1004, %1030 : vector<8x128xf32>
      %1032 = vector.extract_strided_slice %868 {offsets = [6, 0], sizes = [1, 128], strides = [1, 1]} : vector<8x128xf32> to vector<1x128xf32>
      %1033 = vector.broadcast %1032 : vector<1x128xf32> to vector<8x128xf32>
      %1034 = arith.mulf %1031, %1033 : vector<8x128xf32>
      %cst_254 = arith.constant dense<0.000000e+00> : vector<8xf32>
      %1035 = vector.multi_reduction <add>, %1034, %cst_254 [1] : vector<8x128xf32> to vector<8xf32>
      %1036 = vector.shape_cast %1035 : vector<8xf32> to vector<8x1xf32>
      %1037 = vector.broadcast %1036 : vector<8x1xf32> to vector<8x128xf32>
      %1038 = arith.mulf %1037, %1031 : vector<8x128xf32>
      %cst_255 = arith.constant dense<0.000000e+00> : vector<128xf32>
      %1039 = vector.multi_reduction <add>, %1038, %cst_255 [0] : vector<8x128xf32> to vector<128xf32>
      %1040 = vector.shape_cast %1039 : vector<128xf32> to vector<1x128xf32>
      %1041 = arith.subf %1032, %1040 : vector<1x128xf32>
      %1042 = arith.mulf %1041, %1041 : vector<1x128xf32>
      %cst_256 = arith.constant dense<0.000000e+00> : vector<1xf32>
      %1043 = vector.multi_reduction <add>, %1042, %cst_256 [1] : vector<1x128xf32> to vector<1xf32>
      %1044 = vector.shape_cast %1043 : vector<1xf32> to vector<1x1xf32>
      %cst_257 = arith.constant 1.000000e-30 : f32
      %1045 = vector.broadcast %cst_257 : f32 to vector<1x1xf32>
      %1046 = arith.maximumf %1044, %1045 : vector<1x1xf32>
      %1047 = math.rsqrt %1046 : vector<1x1xf32>
      %1048 = vector.broadcast %1047 : vector<1x1xf32> to vector<1x128xf32>
      %1049 = arith.mulf %1041, %1048 : vector<1x128xf32>
      %c6_i32_258 = arith.constant 6 : i32
      %1050 = vector.broadcast %c6_i32_258 : i32 to vector<8x1xi32>
      %1051 = arith.cmpi eq, %29, %1050 : vector<8x1xi32>
      %cst_259 = arith.constant 0.000000e+00 : f32
      %1052 = vector.shape_cast %1051 : vector<8x1xi1> to vector<8x1xi1>
      %1053 = vector.broadcast %1052 : vector<8x1xi1> to vector<8x128xi1>
      %1054 = vector.shape_cast %1049 : vector<1x128xf32> to vector<1x128xf32>
      %1055 = vector.broadcast %1054 : vector<1x128xf32> to vector<8x128xf32>
      %1056 = vector.broadcast %cst_259 : f32 to vector<8x128xf32>
      %1057 = arith.select %1053, %1055, %1056 : vector<8x128xi1>, vector<8x128xf32>
      %1058 = arith.addf %1031, %1057 : vector<8x128xf32>
      %1059 = vector.extract_strided_slice %868 {offsets = [7, 0], sizes = [1, 128], strides = [1, 1]} : vector<8x128xf32> to vector<1x128xf32>
      %1060 = vector.broadcast %1059 : vector<1x128xf32> to vector<8x128xf32>
      %1061 = arith.mulf %1058, %1060 : vector<8x128xf32>
      %cst_260 = arith.constant dense<0.000000e+00> : vector<8xf32>
      %1062 = vector.multi_reduction <add>, %1061, %cst_260 [1] : vector<8x128xf32> to vector<8xf32>
      %1063 = vector.shape_cast %1062 : vector<8xf32> to vector<8x1xf32>
      %1064 = vector.broadcast %1063 : vector<8x1xf32> to vector<8x128xf32>
      %1065 = arith.mulf %1064, %1058 : vector<8x128xf32>
      %cst_261 = arith.constant dense<0.000000e+00> : vector<128xf32>
      %1066 = vector.multi_reduction <add>, %1065, %cst_261 [0] : vector<8x128xf32> to vector<128xf32>
      %1067 = vector.shape_cast %1066 : vector<128xf32> to vector<1x128xf32>
      %1068 = arith.subf %1059, %1067 : vector<1x128xf32>
      %1069 = arith.mulf %1068, %1068 : vector<1x128xf32>
      %cst_262 = arith.constant dense<0.000000e+00> : vector<1xf32>
      %1070 = vector.multi_reduction <add>, %1069, %cst_262 [1] : vector<1x128xf32> to vector<1xf32>
      %1071 = vector.shape_cast %1070 : vector<1xf32> to vector<1x1xf32>
      %cst_263 = arith.constant 1.000000e-30 : f32
      %1072 = vector.broadcast %cst_263 : f32 to vector<1x1xf32>
      %1073 = arith.maximumf %1071, %1072 : vector<1x1xf32>
      %1074 = math.rsqrt %1073 : vector<1x1xf32>
      %1075 = vector.broadcast %1074 : vector<1x1xf32> to vector<1x128xf32>
      %1076 = arith.mulf %1068, %1075 : vector<1x128xf32>
      %c7_i32_264 = arith.constant 7 : i32
      %1077 = vector.broadcast %c7_i32_264 : i32 to vector<8x1xi32>
      %1078 = arith.cmpi eq, %29, %1077 : vector<8x1xi32>
      %cst_265 = arith.constant 0.000000e+00 : f32
      %1079 = vector.shape_cast %1078 : vector<8x1xi1> to vector<8x1xi1>
      %1080 = vector.broadcast %1079 : vector<8x1xi1> to vector<8x128xi1>
      %1081 = vector.shape_cast %1076 : vector<1x128xf32> to vector<1x128xf32>
      %1082 = vector.broadcast %1081 : vector<1x128xf32> to vector<8x128xf32>
      %1083 = vector.broadcast %cst_265 : f32 to vector<8x128xf32>
      %1084 = arith.select %1080, %1082, %1083 : vector<8x128xi1>, vector<8x128xf32>
      %1085 = arith.addf %1058, %1084 : vector<8x128xf32>
      scf.yield %1085 : vector<8x128xf32>
    }
    %250 = arith.mulf %249, %249 : vector<8x128xf32>
    %cst_57 = arith.constant dense<0.000000e+00> : vector<128xf32>
    %251 = vector.multi_reduction <add>, %250, %cst_57 [0] : vector<8x128xf32> to vector<128xf32>
    %252 = vector.shape_cast %251 : vector<128xf32> to vector<1x128xf32>
    %cst_58 = arith.constant 1.000000e-24 : f32
    %253 = vector.broadcast %cst_58 : f32 to vector<1x128xf32>
    %254 = arith.maximumf %252, %253 : vector<1x128xf32>
    %255 = math.rsqrt %254 : vector<1x128xf32>
    %256 = vector.broadcast %255 : vector<1x128xf32> to vector<8x128xf32>
    %257 = arith.mulf %249, %256 : vector<8x128xf32>
    %258 = tpu.iota {dimensions = array<i32: 0>} : vector<8x128xi32>
    %259 = tpu.iota {dimensions = array<i32: 1>} : vector<8x128xi32>
    %260 = arith.cmpi eq, %258, %259 : vector<8x128xi32>
    %261 = arith.extui %260 : vector<8x128xi1> to vector<8x128xi32>
    %262 = arith.sitofp %261 : vector<8x128xi32> to vector<8x128xf32>
    %cst_59 = arith.constant dense<0.000000e+00> : vector<8x8xf32>
    %263 = tpu.matmul %262, %257, %cst_59 {dimension_numbers = #tpu.dot_dimension_numbers<[1], [1], [0], [0], [0, 0, 1, 0], [], []>} : vector<8x128xf32>, vector<8x128xf32>, vector<8x8xf32> -> vector<8x8xf32>
    %264 = arith.sitofp %29 : vector<8x1xi32> to vector<8x1xf32>
    %c0_i32_60 = arith.constant 0 : i32
    %cst_61 = arith.constant dense<0.000000e+00> : vector<8x128xf32>
    %265 = tpu.matmul %263, %257, %cst_61 {dimension_numbers = #tpu.dot_dimension_numbers<[1], [0], [0], [1], [0, 0, 1, 1], [], []>} : vector<8x8xf32>, vector<8x128xf32>, vector<8x128xf32> -> vector<8x128xf32>
    %266 = arith.mulf %263, %263 : vector<8x8xf32>
    %cst_62 = arith.constant dense<0.000000e+00> : vector<8xf32>
    %267 = vector.multi_reduction <add>, %266, %cst_62 [1] : vector<8x8xf32> to vector<8xf32>
    %268 = vector.shape_cast %267 : vector<8xf32> to vector<8x1xf32>
    %cst_63 = arith.constant 2.000000e+00 : f32
    %269 = vector.broadcast %cst_63 : f32 to vector<8x128xf32>
    %270 = arith.mulf %269, %265 : vector<8x128xf32>
    %271 = vector.broadcast %268 : vector<8x1xf32> to vector<8x128xf32>
    %272 = arith.subf %271, %270 : vector<8x128xf32>
    %273 = vector.extract_strided_slice %272 {offsets = [0, 0], sizes = [1, 128], strides = [1, 1]} : vector<8x128xf32> to vector<1x128xf32>
    %cst_64 = arith.constant 0.000000e+00 : f32
    %274 = vector.broadcast %cst_64 : f32 to vector<1x128xf32>
    %275 = vector.extract_strided_slice %272 {offsets = [1, 0], sizes = [1, 128], strides = [1, 1]} : vector<8x128xf32> to vector<1x128xf32>
    %276 = arith.cmpf olt, %275, %273 : vector<1x128xf32>
    %277 = arith.select %276, %275, %273 : vector<1x128xi1>, vector<1x128xf32>
    %cst_65 = arith.constant 1.000000e+00 : f32
    %278 = vector.broadcast %cst_65 : f32 to vector<1x128xf32>
    %279 = arith.select %276, %278, %274 : vector<1x128xi1>, vector<1x128xf32>
    %280 = vector.extract_strided_slice %272 {offsets = [2, 0], sizes = [1, 128], strides = [1, 1]} : vector<8x128xf32> to vector<1x128xf32>
    %281 = arith.cmpf olt, %280, %277 : vector<1x128xf32>
    %282 = arith.select %281, %280, %277 : vector<1x128xi1>, vector<1x128xf32>
    %cst_66 = arith.constant 2.000000e+00 : f32
    %283 = vector.broadcast %cst_66 : f32 to vector<1x128xf32>
    %284 = arith.select %281, %283, %279 : vector<1x128xi1>, vector<1x128xf32>
    %285 = vector.extract_strided_slice %272 {offsets = [3, 0], sizes = [1, 128], strides = [1, 1]} : vector<8x128xf32> to vector<1x128xf32>
    %286 = arith.cmpf olt, %285, %282 : vector<1x128xf32>
    %287 = arith.select %286, %285, %282 : vector<1x128xi1>, vector<1x128xf32>
    %cst_67 = arith.constant 3.000000e+00 : f32
    %288 = vector.broadcast %cst_67 : f32 to vector<1x128xf32>
    %289 = arith.select %286, %288, %284 : vector<1x128xi1>, vector<1x128xf32>
    %290 = vector.extract_strided_slice %272 {offsets = [4, 0], sizes = [1, 128], strides = [1, 1]} : vector<8x128xf32> to vector<1x128xf32>
    %291 = arith.cmpf olt, %290, %287 : vector<1x128xf32>
    %292 = arith.select %291, %290, %287 : vector<1x128xi1>, vector<1x128xf32>
    %cst_68 = arith.constant 4.000000e+00 : f32
    %293 = vector.broadcast %cst_68 : f32 to vector<1x128xf32>
    %294 = arith.select %291, %293, %289 : vector<1x128xi1>, vector<1x128xf32>
    %295 = vector.extract_strided_slice %272 {offsets = [5, 0], sizes = [1, 128], strides = [1, 1]} : vector<8x128xf32> to vector<1x128xf32>
    %296 = arith.cmpf olt, %295, %292 : vector<1x128xf32>
    %297 = arith.select %296, %295, %292 : vector<1x128xi1>, vector<1x128xf32>
    %cst_69 = arith.constant 5.000000e+00 : f32
    %298 = vector.broadcast %cst_69 : f32 to vector<1x128xf32>
    %299 = arith.select %296, %298, %294 : vector<1x128xi1>, vector<1x128xf32>
    %300 = vector.extract_strided_slice %272 {offsets = [6, 0], sizes = [1, 128], strides = [1, 1]} : vector<8x128xf32> to vector<1x128xf32>
    %301 = arith.cmpf olt, %300, %297 : vector<1x128xf32>
    %302 = arith.select %301, %300, %297 : vector<1x128xi1>, vector<1x128xf32>
    %cst_70 = arith.constant 6.000000e+00 : f32
    %303 = vector.broadcast %cst_70 : f32 to vector<1x128xf32>
    %304 = arith.select %301, %303, %299 : vector<1x128xi1>, vector<1x128xf32>
    %305 = vector.extract_strided_slice %272 {offsets = [7, 0], sizes = [1, 128], strides = [1, 1]} : vector<8x128xf32> to vector<1x128xf32>
    %306 = arith.cmpf olt, %305, %302 : vector<1x128xf32>
    %cst_71 = arith.constant 7.000000e+00 : f32
    %307 = vector.broadcast %cst_71 : f32 to vector<1x128xf32>
    %308 = arith.select %306, %307, %304 : vector<1x128xi1>, vector<1x128xf32>
    %309 = vector.broadcast %308 : vector<1x128xf32> to vector<8x128xf32>
    %310 = vector.broadcast %264 : vector<8x1xf32> to vector<8x128xf32>
    %311 = arith.cmpf oeq, %309, %310 : vector<8x128xf32>
    %312 = arith.extui %311 : vector<8x128xi1> to vector<8x128xi32>
    %313 = arith.sitofp %312 : vector<8x128xi32> to vector<8x128xf32>
    %cst_72 = arith.constant dense<0.000000e+00> : vector<8x8xf32>
    %314 = tpu.matmul %313, %257, %cst_72 {dimension_numbers = #tpu.dot_dimension_numbers<[1], [1], [0], [0], [0, 0, 1, 0], [], []>} : vector<8x128xf32>, vector<8x128xf32>, vector<8x8xf32> -> vector<8x8xf32>
    %cst_73 = arith.constant dense<0.000000e+00> : vector<8xf32>
    %315 = vector.multi_reduction <add>, %313, %cst_73 [1] : vector<8x128xf32> to vector<8xf32>
    %316 = vector.shape_cast %315 : vector<8xf32> to vector<8x1xf32>
    %cst_74 = arith.constant 1.000000e+00 : f32
    %317 = vector.broadcast %cst_74 : f32 to vector<8x1xf32>
    %318 = arith.maximumf %316, %317 : vector<8x1xf32>
    %319 = tpu.reciprocal %318 {approx = true} : vector<8x1xf32> -> vector<8x1xf32>
    %320 = vector.broadcast %319 : vector<8x1xf32> to vector<8x8xf32>
    %321 = arith.mulf %314, %320 : vector<8x8xf32>
    %cst_75 = arith.constant 0.000000e+00 : f32
    %322 = vector.broadcast %cst_75 : f32 to vector<8x1xf32>
    %323 = arith.cmpf ogt, %316, %322 : vector<8x1xf32>
    %324 = vector.shape_cast %323 : vector<8x1xi1> to vector<8x1xi1>
    %325 = vector.broadcast %324 : vector<8x1xi1> to vector<8x8xi1>
    %326 = arith.select %325, %321, %263 : vector<8x8xi1>, vector<8x8xf32>
    %c1_i32_76 = arith.constant 1 : i32
    %cst_77 = arith.constant dense<0.000000e+00> : vector<8x128xf32>
    %327 = tpu.matmul %326, %257, %cst_77 {dimension_numbers = #tpu.dot_dimension_numbers<[1], [0], [0], [1], [0, 0, 1, 1], [], []>} : vector<8x8xf32>, vector<8x128xf32>, vector<8x128xf32> -> vector<8x128xf32>
    %328 = arith.mulf %326, %326 : vector<8x8xf32>
    %cst_78 = arith.constant dense<0.000000e+00> : vector<8xf32>
    %329 = vector.multi_reduction <add>, %328, %cst_78 [1] : vector<8x8xf32> to vector<8xf32>
    %330 = vector.shape_cast %329 : vector<8xf32> to vector<8x1xf32>
    %cst_79 = arith.constant 2.000000e+00 : f32
    %331 = vector.broadcast %cst_79 : f32 to vector<8x128xf32>
    %332 = arith.mulf %331, %327 : vector<8x128xf32>
    %333 = vector.broadcast %330 : vector<8x1xf32> to vector<8x128xf32>
    %334 = arith.subf %333, %332 : vector<8x128xf32>
    %335 = vector.extract_strided_slice %334 {offsets = [0, 0], sizes = [1, 128], strides = [1, 1]} : vector<8x128xf32> to vector<1x128xf32>
    %cst_80 = arith.constant 0.000000e+00 : f32
    %336 = vector.broadcast %cst_80 : f32 to vector<1x128xf32>
    %337 = vector.extract_strided_slice %334 {offsets = [1, 0], sizes = [1, 128], strides = [1, 1]} : vector<8x128xf32> to vector<1x128xf32>
    %338 = arith.cmpf olt, %337, %335 : vector<1x128xf32>
    %339 = arith.select %338, %337, %335 : vector<1x128xi1>, vector<1x128xf32>
    %cst_81 = arith.constant 1.000000e+00 : f32
    %340 = vector.broadcast %cst_81 : f32 to vector<1x128xf32>
    %341 = arith.select %338, %340, %336 : vector<1x128xi1>, vector<1x128xf32>
    %342 = vector.extract_strided_slice %334 {offsets = [2, 0], sizes = [1, 128], strides = [1, 1]} : vector<8x128xf32> to vector<1x128xf32>
    %343 = arith.cmpf olt, %342, %339 : vector<1x128xf32>
    %344 = arith.select %343, %342, %339 : vector<1x128xi1>, vector<1x128xf32>
    %cst_82 = arith.constant 2.000000e+00 : f32
    %345 = vector.broadcast %cst_82 : f32 to vector<1x128xf32>
    %346 = arith.select %343, %345, %341 : vector<1x128xi1>, vector<1x128xf32>
    %347 = vector.extract_strided_slice %334 {offsets = [3, 0], sizes = [1, 128], strides = [1, 1]} : vector<8x128xf32> to vector<1x128xf32>
    %348 = arith.cmpf olt, %347, %344 : vector<1x128xf32>
    %349 = arith.select %348, %347, %344 : vector<1x128xi1>, vector<1x128xf32>
    %cst_83 = arith.constant 3.000000e+00 : f32
    %350 = vector.broadcast %cst_83 : f32 to vector<1x128xf32>
    %351 = arith.select %348, %350, %346 : vector<1x128xi1>, vector<1x128xf32>
    %352 = vector.extract_strided_slice %334 {offsets = [4, 0], sizes = [1, 128], strides = [1, 1]} : vector<8x128xf32> to vector<1x128xf32>
    %353 = arith.cmpf olt, %352, %349 : vector<1x128xf32>
    %354 = arith.select %353, %352, %349 : vector<1x128xi1>, vector<1x128xf32>
    %cst_84 = arith.constant 4.000000e+00 : f32
    %355 = vector.broadcast %cst_84 : f32 to vector<1x128xf32>
    %356 = arith.select %353, %355, %351 : vector<1x128xi1>, vector<1x128xf32>
    %357 = vector.extract_strided_slice %334 {offsets = [5, 0], sizes = [1, 128], strides = [1, 1]} : vector<8x128xf32> to vector<1x128xf32>
    %358 = arith.cmpf olt, %357, %354 : vector<1x128xf32>
    %359 = arith.select %358, %357, %354 : vector<1x128xi1>, vector<1x128xf32>
    %cst_85 = arith.constant 5.000000e+00 : f32
    %360 = vector.broadcast %cst_85 : f32 to vector<1x128xf32>
    %361 = arith.select %358, %360, %356 : vector<1x128xi1>, vector<1x128xf32>
    %362 = vector.extract_strided_slice %334 {offsets = [6, 0], sizes = [1, 128], strides = [1, 1]} : vector<8x128xf32> to vector<1x128xf32>
    %363 = arith.cmpf olt, %362, %359 : vector<1x128xf32>
    %364 = arith.select %363, %362, %359 : vector<1x128xi1>, vector<1x128xf32>
    %cst_86 = arith.constant 6.000000e+00 : f32
    %365 = vector.broadcast %cst_86 : f32 to vector<1x128xf32>
    %366 = arith.select %363, %365, %361 : vector<1x128xi1>, vector<1x128xf32>
    %367 = vector.extract_strided_slice %334 {offsets = [7, 0], sizes = [1, 128], strides = [1, 1]} : vector<8x128xf32> to vector<1x128xf32>
    %368 = arith.cmpf olt, %367, %364 : vector<1x128xf32>
    %cst_87 = arith.constant 7.000000e+00 : f32
    %369 = vector.broadcast %cst_87 : f32 to vector<1x128xf32>
    %370 = arith.select %368, %369, %366 : vector<1x128xi1>, vector<1x128xf32>
    %371 = vector.broadcast %370 : vector<1x128xf32> to vector<8x128xf32>
    %372 = vector.broadcast %264 : vector<8x1xf32> to vector<8x128xf32>
    %373 = arith.cmpf oeq, %371, %372 : vector<8x128xf32>
    %374 = arith.extui %373 : vector<8x128xi1> to vector<8x128xi32>
    %375 = arith.sitofp %374 : vector<8x128xi32> to vector<8x128xf32>
    %cst_88 = arith.constant dense<0.000000e+00> : vector<8x8xf32>
    %376 = tpu.matmul %375, %257, %cst_88 {dimension_numbers = #tpu.dot_dimension_numbers<[1], [1], [0], [0], [0, 0, 1, 0], [], []>} : vector<8x128xf32>, vector<8x128xf32>, vector<8x8xf32> -> vector<8x8xf32>
    %cst_89 = arith.constant dense<0.000000e+00> : vector<8xf32>
    %377 = vector.multi_reduction <add>, %375, %cst_89 [1] : vector<8x128xf32> to vector<8xf32>
    %378 = vector.shape_cast %377 : vector<8xf32> to vector<8x1xf32>
    %cst_90 = arith.constant 1.000000e+00 : f32
    %379 = vector.broadcast %cst_90 : f32 to vector<8x1xf32>
    %380 = arith.maximumf %378, %379 : vector<8x1xf32>
    %381 = tpu.reciprocal %380 {approx = true} : vector<8x1xf32> -> vector<8x1xf32>
    %382 = vector.broadcast %381 : vector<8x1xf32> to vector<8x8xf32>
    %383 = arith.mulf %376, %382 : vector<8x8xf32>
    %cst_91 = arith.constant 0.000000e+00 : f32
    %384 = vector.broadcast %cst_91 : f32 to vector<8x1xf32>
    %385 = arith.cmpf ogt, %378, %384 : vector<8x1xf32>
    %386 = vector.shape_cast %385 : vector<8x1xi1> to vector<8x1xi1>
    %387 = vector.broadcast %386 : vector<8x1xi1> to vector<8x8xi1>
    %388 = arith.select %387, %383, %326 : vector<8x8xi1>, vector<8x8xf32>
    %c2_i32_92 = arith.constant 2 : i32
    %cst_93 = arith.constant dense<0.000000e+00> : vector<8x128xf32>
    %389 = tpu.matmul %388, %257, %cst_93 {dimension_numbers = #tpu.dot_dimension_numbers<[1], [0], [0], [1], [0, 0, 1, 1], [], []>} : vector<8x8xf32>, vector<8x128xf32>, vector<8x128xf32> -> vector<8x128xf32>
    %390 = arith.mulf %388, %388 : vector<8x8xf32>
    %cst_94 = arith.constant dense<0.000000e+00> : vector<8xf32>
    %391 = vector.multi_reduction <add>, %390, %cst_94 [1] : vector<8x8xf32> to vector<8xf32>
    %392 = vector.shape_cast %391 : vector<8xf32> to vector<8x1xf32>
    %cst_95 = arith.constant 2.000000e+00 : f32
    %393 = vector.broadcast %cst_95 : f32 to vector<8x128xf32>
    %394 = arith.mulf %393, %389 : vector<8x128xf32>
    %395 = vector.broadcast %392 : vector<8x1xf32> to vector<8x128xf32>
    %396 = arith.subf %395, %394 : vector<8x128xf32>
    %397 = vector.extract_strided_slice %396 {offsets = [0, 0], sizes = [1, 128], strides = [1, 1]} : vector<8x128xf32> to vector<1x128xf32>
    %cst_96 = arith.constant 0.000000e+00 : f32
    %398 = vector.broadcast %cst_96 : f32 to vector<1x128xf32>
    %399 = vector.extract_strided_slice %396 {offsets = [1, 0], sizes = [1, 128], strides = [1, 1]} : vector<8x128xf32> to vector<1x128xf32>
    %400 = arith.cmpf olt, %399, %397 : vector<1x128xf32>
    %401 = arith.select %400, %399, %397 : vector<1x128xi1>, vector<1x128xf32>
    %cst_97 = arith.constant 1.000000e+00 : f32
    %402 = vector.broadcast %cst_97 : f32 to vector<1x128xf32>
    %403 = arith.select %400, %402, %398 : vector<1x128xi1>, vector<1x128xf32>
    %404 = vector.extract_strided_slice %396 {offsets = [2, 0], sizes = [1, 128], strides = [1, 1]} : vector<8x128xf32> to vector<1x128xf32>
    %405 = arith.cmpf olt, %404, %401 : vector<1x128xf32>
    %406 = arith.select %405, %404, %401 : vector<1x128xi1>, vector<1x128xf32>
    %cst_98 = arith.constant 2.000000e+00 : f32
    %407 = vector.broadcast %cst_98 : f32 to vector<1x128xf32>
    %408 = arith.select %405, %407, %403 : vector<1x128xi1>, vector<1x128xf32>
    %409 = vector.extract_strided_slice %396 {offsets = [3, 0], sizes = [1, 128], strides = [1, 1]} : vector<8x128xf32> to vector<1x128xf32>
    %410 = arith.cmpf olt, %409, %406 : vector<1x128xf32>
    %411 = arith.select %410, %409, %406 : vector<1x128xi1>, vector<1x128xf32>
    %cst_99 = arith.constant 3.000000e+00 : f32
    %412 = vector.broadcast %cst_99 : f32 to vector<1x128xf32>
    %413 = arith.select %410, %412, %408 : vector<1x128xi1>, vector<1x128xf32>
    %414 = vector.extract_strided_slice %396 {offsets = [4, 0], sizes = [1, 128], strides = [1, 1]} : vector<8x128xf32> to vector<1x128xf32>
    %415 = arith.cmpf olt, %414, %411 : vector<1x128xf32>
    %416 = arith.select %415, %414, %411 : vector<1x128xi1>, vector<1x128xf32>
    %cst_100 = arith.constant 4.000000e+00 : f32
    %417 = vector.broadcast %cst_100 : f32 to vector<1x128xf32>
    %418 = arith.select %415, %417, %413 : vector<1x128xi1>, vector<1x128xf32>
    %419 = vector.extract_strided_slice %396 {offsets = [5, 0], sizes = [1, 128], strides = [1, 1]} : vector<8x128xf32> to vector<1x128xf32>
    %420 = arith.cmpf olt, %419, %416 : vector<1x128xf32>
    %421 = arith.select %420, %419, %416 : vector<1x128xi1>, vector<1x128xf32>
    %cst_101 = arith.constant 5.000000e+00 : f32
    %422 = vector.broadcast %cst_101 : f32 to vector<1x128xf32>
    %423 = arith.select %420, %422, %418 : vector<1x128xi1>, vector<1x128xf32>
    %424 = vector.extract_strided_slice %396 {offsets = [6, 0], sizes = [1, 128], strides = [1, 1]} : vector<8x128xf32> to vector<1x128xf32>
    %425 = arith.cmpf olt, %424, %421 : vector<1x128xf32>
    %426 = arith.select %425, %424, %421 : vector<1x128xi1>, vector<1x128xf32>
    %cst_102 = arith.constant 6.000000e+00 : f32
    %427 = vector.broadcast %cst_102 : f32 to vector<1x128xf32>
    %428 = arith.select %425, %427, %423 : vector<1x128xi1>, vector<1x128xf32>
    %429 = vector.extract_strided_slice %396 {offsets = [7, 0], sizes = [1, 128], strides = [1, 1]} : vector<8x128xf32> to vector<1x128xf32>
    %430 = arith.cmpf olt, %429, %426 : vector<1x128xf32>
    %cst_103 = arith.constant 7.000000e+00 : f32
    %431 = vector.broadcast %cst_103 : f32 to vector<1x128xf32>
    %432 = arith.select %430, %431, %428 : vector<1x128xi1>, vector<1x128xf32>
    %433 = vector.broadcast %432 : vector<1x128xf32> to vector<8x128xf32>
    %434 = vector.broadcast %264 : vector<8x1xf32> to vector<8x128xf32>
    %435 = arith.cmpf oeq, %433, %434 : vector<8x128xf32>
    %436 = arith.extui %435 : vector<8x128xi1> to vector<8x128xi32>
    %437 = arith.sitofp %436 : vector<8x128xi32> to vector<8x128xf32>
    %cst_104 = arith.constant dense<0.000000e+00> : vector<8x8xf32>
    %438 = tpu.matmul %437, %257, %cst_104 {dimension_numbers = #tpu.dot_dimension_numbers<[1], [1], [0], [0], [0, 0, 1, 0], [], []>} : vector<8x128xf32>, vector<8x128xf32>, vector<8x8xf32> -> vector<8x8xf32>
    %cst_105 = arith.constant dense<0.000000e+00> : vector<8xf32>
    %439 = vector.multi_reduction <add>, %437, %cst_105 [1] : vector<8x128xf32> to vector<8xf32>
    %440 = vector.shape_cast %439 : vector<8xf32> to vector<8x1xf32>
    %cst_106 = arith.constant 1.000000e+00 : f32
    %441 = vector.broadcast %cst_106 : f32 to vector<8x1xf32>
    %442 = arith.maximumf %440, %441 : vector<8x1xf32>
    %443 = tpu.reciprocal %442 {approx = true} : vector<8x1xf32> -> vector<8x1xf32>
    %444 = vector.broadcast %443 : vector<8x1xf32> to vector<8x8xf32>
    %445 = arith.mulf %438, %444 : vector<8x8xf32>
    %cst_107 = arith.constant 0.000000e+00 : f32
    %446 = vector.broadcast %cst_107 : f32 to vector<8x1xf32>
    %447 = arith.cmpf ogt, %440, %446 : vector<8x1xf32>
    %448 = vector.shape_cast %447 : vector<8x1xi1> to vector<8x1xi1>
    %449 = vector.broadcast %448 : vector<8x1xi1> to vector<8x8xi1>
    %450 = arith.select %449, %445, %388 : vector<8x8xi1>, vector<8x8xf32>
    %c3_i32_108 = arith.constant 3 : i32
    %cst_109 = arith.constant dense<0.000000e+00> : vector<8x128xf32>
    %451 = tpu.matmul %450, %257, %cst_109 {dimension_numbers = #tpu.dot_dimension_numbers<[1], [0], [0], [1], [0, 0, 1, 1], [], []>} : vector<8x8xf32>, vector<8x128xf32>, vector<8x128xf32> -> vector<8x128xf32>
    %452 = arith.mulf %450, %450 : vector<8x8xf32>
    %cst_110 = arith.constant dense<0.000000e+00> : vector<8xf32>
    %453 = vector.multi_reduction <add>, %452, %cst_110 [1] : vector<8x8xf32> to vector<8xf32>
    %454 = vector.shape_cast %453 : vector<8xf32> to vector<8x1xf32>
    %cst_111 = arith.constant 2.000000e+00 : f32
    %455 = vector.broadcast %cst_111 : f32 to vector<8x128xf32>
    %456 = arith.mulf %455, %451 : vector<8x128xf32>
    %457 = vector.broadcast %454 : vector<8x1xf32> to vector<8x128xf32>
    %458 = arith.subf %457, %456 : vector<8x128xf32>
    %459 = vector.extract_strided_slice %458 {offsets = [0, 0], sizes = [1, 128], strides = [1, 1]} : vector<8x128xf32> to vector<1x128xf32>
    %cst_112 = arith.constant 0.000000e+00 : f32
    %460 = vector.broadcast %cst_112 : f32 to vector<1x128xf32>
    %461 = vector.extract_strided_slice %458 {offsets = [1, 0], sizes = [1, 128], strides = [1, 1]} : vector<8x128xf32> to vector<1x128xf32>
    %462 = arith.cmpf olt, %461, %459 : vector<1x128xf32>
    %463 = arith.select %462, %461, %459 : vector<1x128xi1>, vector<1x128xf32>
    %cst_113 = arith.constant 1.000000e+00 : f32
    %464 = vector.broadcast %cst_113 : f32 to vector<1x128xf32>
    %465 = arith.select %462, %464, %460 : vector<1x128xi1>, vector<1x128xf32>
    %466 = vector.extract_strided_slice %458 {offsets = [2, 0], sizes = [1, 128], strides = [1, 1]} : vector<8x128xf32> to vector<1x128xf32>
    %467 = arith.cmpf olt, %466, %463 : vector<1x128xf32>
    %468 = arith.select %467, %466, %463 : vector<1x128xi1>, vector<1x128xf32>
    %cst_114 = arith.constant 2.000000e+00 : f32
    %469 = vector.broadcast %cst_114 : f32 to vector<1x128xf32>
    %470 = arith.select %467, %469, %465 : vector<1x128xi1>, vector<1x128xf32>
    %471 = vector.extract_strided_slice %458 {offsets = [3, 0], sizes = [1, 128], strides = [1, 1]} : vector<8x128xf32> to vector<1x128xf32>
    %472 = arith.cmpf olt, %471, %468 : vector<1x128xf32>
    %473 = arith.select %472, %471, %468 : vector<1x128xi1>, vector<1x128xf32>
    %cst_115 = arith.constant 3.000000e+00 : f32
    %474 = vector.broadcast %cst_115 : f32 to vector<1x128xf32>
    %475 = arith.select %472, %474, %470 : vector<1x128xi1>, vector<1x128xf32>
    %476 = vector.extract_strided_slice %458 {offsets = [4, 0], sizes = [1, 128], strides = [1, 1]} : vector<8x128xf32> to vector<1x128xf32>
    %477 = arith.cmpf olt, %476, %473 : vector<1x128xf32>
    %478 = arith.select %477, %476, %473 : vector<1x128xi1>, vector<1x128xf32>
    %cst_116 = arith.constant 4.000000e+00 : f32
    %479 = vector.broadcast %cst_116 : f32 to vector<1x128xf32>
    %480 = arith.select %477, %479, %475 : vector<1x128xi1>, vector<1x128xf32>
    %481 = vector.extract_strided_slice %458 {offsets = [5, 0], sizes = [1, 128], strides = [1, 1]} : vector<8x128xf32> to vector<1x128xf32>
    %482 = arith.cmpf olt, %481, %478 : vector<1x128xf32>
    %483 = arith.select %482, %481, %478 : vector<1x128xi1>, vector<1x128xf32>
    %cst_117 = arith.constant 5.000000e+00 : f32
    %484 = vector.broadcast %cst_117 : f32 to vector<1x128xf32>
    %485 = arith.select %482, %484, %480 : vector<1x128xi1>, vector<1x128xf32>
    %486 = vector.extract_strided_slice %458 {offsets = [6, 0], sizes = [1, 128], strides = [1, 1]} : vector<8x128xf32> to vector<1x128xf32>
    %487 = arith.cmpf olt, %486, %483 : vector<1x128xf32>
    %488 = arith.select %487, %486, %483 : vector<1x128xi1>, vector<1x128xf32>
    %cst_118 = arith.constant 6.000000e+00 : f32
    %489 = vector.broadcast %cst_118 : f32 to vector<1x128xf32>
    %490 = arith.select %487, %489, %485 : vector<1x128xi1>, vector<1x128xf32>
    %491 = vector.extract_strided_slice %458 {offsets = [7, 0], sizes = [1, 128], strides = [1, 1]} : vector<8x128xf32> to vector<1x128xf32>
    %492 = arith.cmpf olt, %491, %488 : vector<1x128xf32>
    %cst_119 = arith.constant 7.000000e+00 : f32
    %493 = vector.broadcast %cst_119 : f32 to vector<1x128xf32>
    %494 = arith.select %492, %493, %490 : vector<1x128xi1>, vector<1x128xf32>
    %495 = vector.broadcast %494 : vector<1x128xf32> to vector<8x128xf32>
    %496 = vector.broadcast %264 : vector<8x1xf32> to vector<8x128xf32>
    %497 = arith.cmpf oeq, %495, %496 : vector<8x128xf32>
    %498 = arith.extui %497 : vector<8x128xi1> to vector<8x128xi32>
    %499 = arith.sitofp %498 : vector<8x128xi32> to vector<8x128xf32>
    %cst_120 = arith.constant dense<0.000000e+00> : vector<8x8xf32>
    %500 = tpu.matmul %499, %257, %cst_120 {dimension_numbers = #tpu.dot_dimension_numbers<[1], [1], [0], [0], [0, 0, 1, 0], [], []>} : vector<8x128xf32>, vector<8x128xf32>, vector<8x8xf32> -> vector<8x8xf32>
    %cst_121 = arith.constant dense<0.000000e+00> : vector<8xf32>
    %501 = vector.multi_reduction <add>, %499, %cst_121 [1] : vector<8x128xf32> to vector<8xf32>
    %502 = vector.shape_cast %501 : vector<8xf32> to vector<8x1xf32>
    %cst_122 = arith.constant 1.000000e+00 : f32
    %503 = vector.broadcast %cst_122 : f32 to vector<8x1xf32>
    %504 = arith.maximumf %502, %503 : vector<8x1xf32>
    %505 = tpu.reciprocal %504 {approx = true} : vector<8x1xf32> -> vector<8x1xf32>
    %506 = vector.broadcast %505 : vector<8x1xf32> to vector<8x8xf32>
    %507 = arith.mulf %500, %506 : vector<8x8xf32>
    %cst_123 = arith.constant 0.000000e+00 : f32
    %508 = vector.broadcast %cst_123 : f32 to vector<8x1xf32>
    %509 = arith.cmpf ogt, %502, %508 : vector<8x1xf32>
    %510 = vector.shape_cast %509 : vector<8x1xi1> to vector<8x1xi1>
    %511 = vector.broadcast %510 : vector<8x1xi1> to vector<8x8xi1>
    %512 = arith.select %511, %507, %450 : vector<8x8xi1>, vector<8x8xf32>
    %c4_i32_124 = arith.constant 4 : i32
    %cst_125 = arith.constant dense<0.000000e+00> : vector<8x128xf32>
    %513 = tpu.matmul %512, %257, %cst_125 {dimension_numbers = #tpu.dot_dimension_numbers<[1], [0], [0], [1], [0, 0, 1, 1], [], []>} : vector<8x8xf32>, vector<8x128xf32>, vector<8x128xf32> -> vector<8x128xf32>
    %514 = arith.mulf %512, %512 : vector<8x8xf32>
    %cst_126 = arith.constant dense<0.000000e+00> : vector<8xf32>
    %515 = vector.multi_reduction <add>, %514, %cst_126 [1] : vector<8x8xf32> to vector<8xf32>
    %516 = vector.shape_cast %515 : vector<8xf32> to vector<8x1xf32>
    %cst_127 = arith.constant 2.000000e+00 : f32
    %517 = vector.broadcast %cst_127 : f32 to vector<8x128xf32>
    %518 = arith.mulf %517, %513 : vector<8x128xf32>
    %519 = vector.broadcast %516 : vector<8x1xf32> to vector<8x128xf32>
    %520 = arith.subf %519, %518 : vector<8x128xf32>
    %521 = vector.extract_strided_slice %520 {offsets = [0, 0], sizes = [1, 128], strides = [1, 1]} : vector<8x128xf32> to vector<1x128xf32>
    %cst_128 = arith.constant 0.000000e+00 : f32
    %522 = vector.broadcast %cst_128 : f32 to vector<1x128xf32>
    %523 = vector.extract_strided_slice %520 {offsets = [1, 0], sizes = [1, 128], strides = [1, 1]} : vector<8x128xf32> to vector<1x128xf32>
    %524 = arith.cmpf olt, %523, %521 : vector<1x128xf32>
    %525 = arith.select %524, %523, %521 : vector<1x128xi1>, vector<1x128xf32>
    %cst_129 = arith.constant 1.000000e+00 : f32
    %526 = vector.broadcast %cst_129 : f32 to vector<1x128xf32>
    %527 = arith.select %524, %526, %522 : vector<1x128xi1>, vector<1x128xf32>
    %528 = vector.extract_strided_slice %520 {offsets = [2, 0], sizes = [1, 128], strides = [1, 1]} : vector<8x128xf32> to vector<1x128xf32>
    %529 = arith.cmpf olt, %528, %525 : vector<1x128xf32>
    %530 = arith.select %529, %528, %525 : vector<1x128xi1>, vector<1x128xf32>
    %cst_130 = arith.constant 2.000000e+00 : f32
    %531 = vector.broadcast %cst_130 : f32 to vector<1x128xf32>
    %532 = arith.select %529, %531, %527 : vector<1x128xi1>, vector<1x128xf32>
    %533 = vector.extract_strided_slice %520 {offsets = [3, 0], sizes = [1, 128], strides = [1, 1]} : vector<8x128xf32> to vector<1x128xf32>
    %534 = arith.cmpf olt, %533, %530 : vector<1x128xf32>
    %535 = arith.select %534, %533, %530 : vector<1x128xi1>, vector<1x128xf32>
    %cst_131 = arith.constant 3.000000e+00 : f32
    %536 = vector.broadcast %cst_131 : f32 to vector<1x128xf32>
    %537 = arith.select %534, %536, %532 : vector<1x128xi1>, vector<1x128xf32>
    %538 = vector.extract_strided_slice %520 {offsets = [4, 0], sizes = [1, 128], strides = [1, 1]} : vector<8x128xf32> to vector<1x128xf32>
    %539 = arith.cmpf olt, %538, %535 : vector<1x128xf32>
    %540 = arith.select %539, %538, %535 : vector<1x128xi1>, vector<1x128xf32>
    %cst_132 = arith.constant 4.000000e+00 : f32
    %541 = vector.broadcast %cst_132 : f32 to vector<1x128xf32>
    %542 = arith.select %539, %541, %537 : vector<1x128xi1>, vector<1x128xf32>
    %543 = vector.extract_strided_slice %520 {offsets = [5, 0], sizes = [1, 128], strides = [1, 1]} : vector<8x128xf32> to vector<1x128xf32>
    %544 = arith.cmpf olt, %543, %540 : vector<1x128xf32>
    %545 = arith.select %544, %543, %540 : vector<1x128xi1>, vector<1x128xf32>
    %cst_133 = arith.constant 5.000000e+00 : f32
    %546 = vector.broadcast %cst_133 : f32 to vector<1x128xf32>
    %547 = arith.select %544, %546, %542 : vector<1x128xi1>, vector<1x128xf32>
    %548 = vector.extract_strided_slice %520 {offsets = [6, 0], sizes = [1, 128], strides = [1, 1]} : vector<8x128xf32> to vector<1x128xf32>
    %549 = arith.cmpf olt, %548, %545 : vector<1x128xf32>
    %550 = arith.select %549, %548, %545 : vector<1x128xi1>, vector<1x128xf32>
    %cst_134 = arith.constant 6.000000e+00 : f32
    %551 = vector.broadcast %cst_134 : f32 to vector<1x128xf32>
    %552 = arith.select %549, %551, %547 : vector<1x128xi1>, vector<1x128xf32>
    %553 = vector.extract_strided_slice %520 {offsets = [7, 0], sizes = [1, 128], strides = [1, 1]} : vector<8x128xf32> to vector<1x128xf32>
    %554 = arith.cmpf olt, %553, %550 : vector<1x128xf32>
    %cst_135 = arith.constant 7.000000e+00 : f32
    %555 = vector.broadcast %cst_135 : f32 to vector<1x128xf32>
    %556 = arith.select %554, %555, %552 : vector<1x128xi1>, vector<1x128xf32>
    %557 = vector.broadcast %556 : vector<1x128xf32> to vector<8x128xf32>
    %558 = vector.broadcast %264 : vector<8x1xf32> to vector<8x128xf32>
    %559 = arith.cmpf oeq, %557, %558 : vector<8x128xf32>
    %560 = arith.extui %559 : vector<8x128xi1> to vector<8x128xi32>
    %561 = arith.sitofp %560 : vector<8x128xi32> to vector<8x128xf32>
    %cst_136 = arith.constant dense<0.000000e+00> : vector<8x8xf32>
    %562 = tpu.matmul %561, %257, %cst_136 {dimension_numbers = #tpu.dot_dimension_numbers<[1], [1], [0], [0], [0, 0, 1, 0], [], []>} : vector<8x128xf32>, vector<8x128xf32>, vector<8x8xf32> -> vector<8x8xf32>
    %cst_137 = arith.constant dense<0.000000e+00> : vector<8xf32>
    %563 = vector.multi_reduction <add>, %561, %cst_137 [1] : vector<8x128xf32> to vector<8xf32>
    %564 = vector.shape_cast %563 : vector<8xf32> to vector<8x1xf32>
    %cst_138 = arith.constant 1.000000e+00 : f32
    %565 = vector.broadcast %cst_138 : f32 to vector<8x1xf32>
    %566 = arith.maximumf %564, %565 : vector<8x1xf32>
    %567 = tpu.reciprocal %566 {approx = true} : vector<8x1xf32> -> vector<8x1xf32>
    %568 = vector.broadcast %567 : vector<8x1xf32> to vector<8x8xf32>
    %569 = arith.mulf %562, %568 : vector<8x8xf32>
    %cst_139 = arith.constant 0.000000e+00 : f32
    %570 = vector.broadcast %cst_139 : f32 to vector<8x1xf32>
    %571 = arith.cmpf ogt, %564, %570 : vector<8x1xf32>
    %572 = vector.shape_cast %571 : vector<8x1xi1> to vector<8x1xi1>
    %573 = vector.broadcast %572 : vector<8x1xi1> to vector<8x8xi1>
    %574 = arith.select %573, %569, %512 : vector<8x8xi1>, vector<8x8xf32>
    %c5_i32_140 = arith.constant 5 : i32
    %cst_141 = arith.constant dense<0.000000e+00> : vector<8x128xf32>
    %575 = tpu.matmul %574, %257, %cst_141 {dimension_numbers = #tpu.dot_dimension_numbers<[1], [0], [0], [1], [0, 0, 1, 1], [], []>} : vector<8x8xf32>, vector<8x128xf32>, vector<8x128xf32> -> vector<8x128xf32>
    %576 = arith.mulf %574, %574 : vector<8x8xf32>
    %cst_142 = arith.constant dense<0.000000e+00> : vector<8xf32>
    %577 = vector.multi_reduction <add>, %576, %cst_142 [1] : vector<8x8xf32> to vector<8xf32>
    %578 = vector.shape_cast %577 : vector<8xf32> to vector<8x1xf32>
    %cst_143 = arith.constant 2.000000e+00 : f32
    %579 = vector.broadcast %cst_143 : f32 to vector<8x128xf32>
    %580 = arith.mulf %579, %575 : vector<8x128xf32>
    %581 = vector.broadcast %578 : vector<8x1xf32> to vector<8x128xf32>
    %582 = arith.subf %581, %580 : vector<8x128xf32>
    %583 = vector.extract_strided_slice %582 {offsets = [0, 0], sizes = [1, 128], strides = [1, 1]} : vector<8x128xf32> to vector<1x128xf32>
    %cst_144 = arith.constant 0.000000e+00 : f32
    %584 = vector.broadcast %cst_144 : f32 to vector<1x128xf32>
    %585 = vector.extract_strided_slice %582 {offsets = [1, 0], sizes = [1, 128], strides = [1, 1]} : vector<8x128xf32> to vector<1x128xf32>
    %586 = arith.cmpf olt, %585, %583 : vector<1x128xf32>
    %587 = arith.select %586, %585, %583 : vector<1x128xi1>, vector<1x128xf32>
    %cst_145 = arith.constant 1.000000e+00 : f32
    %588 = vector.broadcast %cst_145 : f32 to vector<1x128xf32>
    %589 = arith.select %586, %588, %584 : vector<1x128xi1>, vector<1x128xf32>
    %590 = vector.extract_strided_slice %582 {offsets = [2, 0], sizes = [1, 128], strides = [1, 1]} : vector<8x128xf32> to vector<1x128xf32>
    %591 = arith.cmpf olt, %590, %587 : vector<1x128xf32>
    %592 = arith.select %591, %590, %587 : vector<1x128xi1>, vector<1x128xf32>
    %cst_146 = arith.constant 2.000000e+00 : f32
    %593 = vector.broadcast %cst_146 : f32 to vector<1x128xf32>
    %594 = arith.select %591, %593, %589 : vector<1x128xi1>, vector<1x128xf32>
    %595 = vector.extract_strided_slice %582 {offsets = [3, 0], sizes = [1, 128], strides = [1, 1]} : vector<8x128xf32> to vector<1x128xf32>
    %596 = arith.cmpf olt, %595, %592 : vector<1x128xf32>
    %597 = arith.select %596, %595, %592 : vector<1x128xi1>, vector<1x128xf32>
    %cst_147 = arith.constant 3.000000e+00 : f32
    %598 = vector.broadcast %cst_147 : f32 to vector<1x128xf32>
    %599 = arith.select %596, %598, %594 : vector<1x128xi1>, vector<1x128xf32>
    %600 = vector.extract_strided_slice %582 {offsets = [4, 0], sizes = [1, 128], strides = [1, 1]} : vector<8x128xf32> to vector<1x128xf32>
    %601 = arith.cmpf olt, %600, %597 : vector<1x128xf32>
    %602 = arith.select %601, %600, %597 : vector<1x128xi1>, vector<1x128xf32>
    %cst_148 = arith.constant 4.000000e+00 : f32
    %603 = vector.broadcast %cst_148 : f32 to vector<1x128xf32>
    %604 = arith.select %601, %603, %599 : vector<1x128xi1>, vector<1x128xf32>
    %605 = vector.extract_strided_slice %582 {offsets = [5, 0], sizes = [1, 128], strides = [1, 1]} : vector<8x128xf32> to vector<1x128xf32>
    %606 = arith.cmpf olt, %605, %602 : vector<1x128xf32>
    %607 = arith.select %606, %605, %602 : vector<1x128xi1>, vector<1x128xf32>
    %cst_149 = arith.constant 5.000000e+00 : f32
    %608 = vector.broadcast %cst_149 : f32 to vector<1x128xf32>
    %609 = arith.select %606, %608, %604 : vector<1x128xi1>, vector<1x128xf32>
    %610 = vector.extract_strided_slice %582 {offsets = [6, 0], sizes = [1, 128], strides = [1, 1]} : vector<8x128xf32> to vector<1x128xf32>
    %611 = arith.cmpf olt, %610, %607 : vector<1x128xf32>
    %612 = arith.select %611, %610, %607 : vector<1x128xi1>, vector<1x128xf32>
    %cst_150 = arith.constant 6.000000e+00 : f32
    %613 = vector.broadcast %cst_150 : f32 to vector<1x128xf32>
    %614 = arith.select %611, %613, %609 : vector<1x128xi1>, vector<1x128xf32>
    %615 = vector.extract_strided_slice %582 {offsets = [7, 0], sizes = [1, 128], strides = [1, 1]} : vector<8x128xf32> to vector<1x128xf32>
    %616 = arith.cmpf olt, %615, %612 : vector<1x128xf32>
    %cst_151 = arith.constant 7.000000e+00 : f32
    %617 = vector.broadcast %cst_151 : f32 to vector<1x128xf32>
    %618 = arith.select %616, %617, %614 : vector<1x128xi1>, vector<1x128xf32>
    %619 = vector.broadcast %618 : vector<1x128xf32> to vector<8x128xf32>
    %620 = vector.broadcast %264 : vector<8x1xf32> to vector<8x128xf32>
    %621 = arith.cmpf oeq, %619, %620 : vector<8x128xf32>
    %622 = arith.extui %621 : vector<8x128xi1> to vector<8x128xi32>
    %623 = arith.sitofp %622 : vector<8x128xi32> to vector<8x128xf32>
    %cst_152 = arith.constant dense<0.000000e+00> : vector<8x8xf32>
    %624 = tpu.matmul %623, %257, %cst_152 {dimension_numbers = #tpu.dot_dimension_numbers<[1], [1], [0], [0], [0, 0, 1, 0], [], []>} : vector<8x128xf32>, vector<8x128xf32>, vector<8x8xf32> -> vector<8x8xf32>
    %cst_153 = arith.constant dense<0.000000e+00> : vector<8xf32>
    %625 = vector.multi_reduction <add>, %623, %cst_153 [1] : vector<8x128xf32> to vector<8xf32>
    %626 = vector.shape_cast %625 : vector<8xf32> to vector<8x1xf32>
    %cst_154 = arith.constant 1.000000e+00 : f32
    %627 = vector.broadcast %cst_154 : f32 to vector<8x1xf32>
    %628 = arith.maximumf %626, %627 : vector<8x1xf32>
    %629 = tpu.reciprocal %628 {approx = true} : vector<8x1xf32> -> vector<8x1xf32>
    %630 = vector.broadcast %629 : vector<8x1xf32> to vector<8x8xf32>
    %631 = arith.mulf %624, %630 : vector<8x8xf32>
    %cst_155 = arith.constant 0.000000e+00 : f32
    %632 = vector.broadcast %cst_155 : f32 to vector<8x1xf32>
    %633 = arith.cmpf ogt, %626, %632 : vector<8x1xf32>
    %634 = vector.shape_cast %633 : vector<8x1xi1> to vector<8x1xi1>
    %635 = vector.broadcast %634 : vector<8x1xi1> to vector<8x8xi1>
    %636 = arith.select %635, %631, %574 : vector<8x8xi1>, vector<8x8xf32>
    %c6_i32_156 = arith.constant 6 : i32
    %cst_157 = arith.constant dense<0.000000e+00> : vector<8x128xf32>
    %637 = tpu.matmul %636, %257, %cst_157 {dimension_numbers = #tpu.dot_dimension_numbers<[1], [0], [0], [1], [0, 0, 1, 1], [], []>} : vector<8x8xf32>, vector<8x128xf32>, vector<8x128xf32> -> vector<8x128xf32>
    %638 = arith.mulf %636, %636 : vector<8x8xf32>
    %cst_158 = arith.constant dense<0.000000e+00> : vector<8xf32>
    %639 = vector.multi_reduction <add>, %638, %cst_158 [1] : vector<8x8xf32> to vector<8xf32>
    %640 = vector.shape_cast %639 : vector<8xf32> to vector<8x1xf32>
    %cst_159 = arith.constant 2.000000e+00 : f32
    %641 = vector.broadcast %cst_159 : f32 to vector<8x128xf32>
    %642 = arith.mulf %641, %637 : vector<8x128xf32>
    %643 = vector.broadcast %640 : vector<8x1xf32> to vector<8x128xf32>
    %644 = arith.subf %643, %642 : vector<8x128xf32>
    %645 = vector.extract_strided_slice %644 {offsets = [0, 0], sizes = [1, 128], strides = [1, 1]} : vector<8x128xf32> to vector<1x128xf32>
    %cst_160 = arith.constant 0.000000e+00 : f32
    %646 = vector.broadcast %cst_160 : f32 to vector<1x128xf32>
    %647 = vector.extract_strided_slice %644 {offsets = [1, 0], sizes = [1, 128], strides = [1, 1]} : vector<8x128xf32> to vector<1x128xf32>
    %648 = arith.cmpf olt, %647, %645 : vector<1x128xf32>
    %649 = arith.select %648, %647, %645 : vector<1x128xi1>, vector<1x128xf32>
    %cst_161 = arith.constant 1.000000e+00 : f32
    %650 = vector.broadcast %cst_161 : f32 to vector<1x128xf32>
    %651 = arith.select %648, %650, %646 : vector<1x128xi1>, vector<1x128xf32>
    %652 = vector.extract_strided_slice %644 {offsets = [2, 0], sizes = [1, 128], strides = [1, 1]} : vector<8x128xf32> to vector<1x128xf32>
    %653 = arith.cmpf olt, %652, %649 : vector<1x128xf32>
    %654 = arith.select %653, %652, %649 : vector<1x128xi1>, vector<1x128xf32>
    %cst_162 = arith.constant 2.000000e+00 : f32
    %655 = vector.broadcast %cst_162 : f32 to vector<1x128xf32>
    %656 = arith.select %653, %655, %651 : vector<1x128xi1>, vector<1x128xf32>
    %657 = vector.extract_strided_slice %644 {offsets = [3, 0], sizes = [1, 128], strides = [1, 1]} : vector<8x128xf32> to vector<1x128xf32>
    %658 = arith.cmpf olt, %657, %654 : vector<1x128xf32>
    %659 = arith.select %658, %657, %654 : vector<1x128xi1>, vector<1x128xf32>
    %cst_163 = arith.constant 3.000000e+00 : f32
    %660 = vector.broadcast %cst_163 : f32 to vector<1x128xf32>
    %661 = arith.select %658, %660, %656 : vector<1x128xi1>, vector<1x128xf32>
    %662 = vector.extract_strided_slice %644 {offsets = [4, 0], sizes = [1, 128], strides = [1, 1]} : vector<8x128xf32> to vector<1x128xf32>
    %663 = arith.cmpf olt, %662, %659 : vector<1x128xf32>
    %664 = arith.select %663, %662, %659 : vector<1x128xi1>, vector<1x128xf32>
    %cst_164 = arith.constant 4.000000e+00 : f32
    %665 = vector.broadcast %cst_164 : f32 to vector<1x128xf32>
    %666 = arith.select %663, %665, %661 : vector<1x128xi1>, vector<1x128xf32>
    %667 = vector.extract_strided_slice %644 {offsets = [5, 0], sizes = [1, 128], strides = [1, 1]} : vector<8x128xf32> to vector<1x128xf32>
    %668 = arith.cmpf olt, %667, %664 : vector<1x128xf32>
    %669 = arith.select %668, %667, %664 : vector<1x128xi1>, vector<1x128xf32>
    %cst_165 = arith.constant 5.000000e+00 : f32
    %670 = vector.broadcast %cst_165 : f32 to vector<1x128xf32>
    %671 = arith.select %668, %670, %666 : vector<1x128xi1>, vector<1x128xf32>
    %672 = vector.extract_strided_slice %644 {offsets = [6, 0], sizes = [1, 128], strides = [1, 1]} : vector<8x128xf32> to vector<1x128xf32>
    %673 = arith.cmpf olt, %672, %669 : vector<1x128xf32>
    %674 = arith.select %673, %672, %669 : vector<1x128xi1>, vector<1x128xf32>
    %cst_166 = arith.constant 6.000000e+00 : f32
    %675 = vector.broadcast %cst_166 : f32 to vector<1x128xf32>
    %676 = arith.select %673, %675, %671 : vector<1x128xi1>, vector<1x128xf32>
    %677 = vector.extract_strided_slice %644 {offsets = [7, 0], sizes = [1, 128], strides = [1, 1]} : vector<8x128xf32> to vector<1x128xf32>
    %678 = arith.cmpf olt, %677, %674 : vector<1x128xf32>
    %cst_167 = arith.constant 7.000000e+00 : f32
    %679 = vector.broadcast %cst_167 : f32 to vector<1x128xf32>
    %680 = arith.select %678, %679, %676 : vector<1x128xi1>, vector<1x128xf32>
    %681 = vector.broadcast %680 : vector<1x128xf32> to vector<8x128xf32>
    %682 = vector.broadcast %264 : vector<8x1xf32> to vector<8x128xf32>
    %683 = arith.cmpf oeq, %681, %682 : vector<8x128xf32>
    %684 = arith.extui %683 : vector<8x128xi1> to vector<8x128xi32>
    %685 = arith.sitofp %684 : vector<8x128xi32> to vector<8x128xf32>
    %cst_168 = arith.constant dense<0.000000e+00> : vector<8x8xf32>
    %686 = tpu.matmul %685, %257, %cst_168 {dimension_numbers = #tpu.dot_dimension_numbers<[1], [1], [0], [0], [0, 0, 1, 0], [], []>} : vector<8x128xf32>, vector<8x128xf32>, vector<8x8xf32> -> vector<8x8xf32>
    %cst_169 = arith.constant dense<0.000000e+00> : vector<8xf32>
    %687 = vector.multi_reduction <add>, %685, %cst_169 [1] : vector<8x128xf32> to vector<8xf32>
    %688 = vector.shape_cast %687 : vector<8xf32> to vector<8x1xf32>
    %cst_170 = arith.constant 1.000000e+00 : f32
    %689 = vector.broadcast %cst_170 : f32 to vector<8x1xf32>
    %690 = arith.maximumf %688, %689 : vector<8x1xf32>
    %691 = tpu.reciprocal %690 {approx = true} : vector<8x1xf32> -> vector<8x1xf32>
    %692 = vector.broadcast %691 : vector<8x1xf32> to vector<8x8xf32>
    %693 = arith.mulf %686, %692 : vector<8x8xf32>
    %cst_171 = arith.constant 0.000000e+00 : f32
    %694 = vector.broadcast %cst_171 : f32 to vector<8x1xf32>
    %695 = arith.cmpf ogt, %688, %694 : vector<8x1xf32>
    %696 = vector.shape_cast %695 : vector<8x1xi1> to vector<8x1xi1>
    %697 = vector.broadcast %696 : vector<8x1xi1> to vector<8x8xi1>
    %698 = arith.select %697, %693, %636 : vector<8x8xi1>, vector<8x8xf32>
    %c7_i32_172 = arith.constant 7 : i32
    %cst_173 = arith.constant dense<0.000000e+00> : vector<8x128xf32>
    %699 = tpu.matmul %698, %257, %cst_173 {dimension_numbers = #tpu.dot_dimension_numbers<[1], [0], [0], [1], [0, 0, 1, 1], [], []>} : vector<8x8xf32>, vector<8x128xf32>, vector<8x128xf32> -> vector<8x128xf32>
    %700 = arith.mulf %698, %698 : vector<8x8xf32>
    %cst_174 = arith.constant dense<0.000000e+00> : vector<8xf32>
    %701 = vector.multi_reduction <add>, %700, %cst_174 [1] : vector<8x8xf32> to vector<8xf32>
    %702 = vector.shape_cast %701 : vector<8xf32> to vector<8x1xf32>
    %cst_175 = arith.constant 2.000000e+00 : f32
    %703 = vector.broadcast %cst_175 : f32 to vector<8x128xf32>
    %704 = arith.mulf %703, %699 : vector<8x128xf32>
    %705 = vector.broadcast %702 : vector<8x1xf32> to vector<8x128xf32>
    %706 = arith.subf %705, %704 : vector<8x128xf32>
    %707 = vector.extract_strided_slice %706 {offsets = [0, 0], sizes = [1, 128], strides = [1, 1]} : vector<8x128xf32> to vector<1x128xf32>
    %cst_176 = arith.constant 0.000000e+00 : f32
    %708 = vector.broadcast %cst_176 : f32 to vector<1x128xf32>
    %709 = vector.extract_strided_slice %706 {offsets = [1, 0], sizes = [1, 128], strides = [1, 1]} : vector<8x128xf32> to vector<1x128xf32>
    %710 = arith.cmpf olt, %709, %707 : vector<1x128xf32>
    %711 = arith.select %710, %709, %707 : vector<1x128xi1>, vector<1x128xf32>
    %cst_177 = arith.constant 1.000000e+00 : f32
    %712 = vector.broadcast %cst_177 : f32 to vector<1x128xf32>
    %713 = arith.select %710, %712, %708 : vector<1x128xi1>, vector<1x128xf32>
    %714 = vector.extract_strided_slice %706 {offsets = [2, 0], sizes = [1, 128], strides = [1, 1]} : vector<8x128xf32> to vector<1x128xf32>
    %715 = arith.cmpf olt, %714, %711 : vector<1x128xf32>
    %716 = arith.select %715, %714, %711 : vector<1x128xi1>, vector<1x128xf32>
    %cst_178 = arith.constant 2.000000e+00 : f32
    %717 = vector.broadcast %cst_178 : f32 to vector<1x128xf32>
    %718 = arith.select %715, %717, %713 : vector<1x128xi1>, vector<1x128xf32>
    %719 = vector.extract_strided_slice %706 {offsets = [3, 0], sizes = [1, 128], strides = [1, 1]} : vector<8x128xf32> to vector<1x128xf32>
    %720 = arith.cmpf olt, %719, %716 : vector<1x128xf32>
    %721 = arith.select %720, %719, %716 : vector<1x128xi1>, vector<1x128xf32>
    %cst_179 = arith.constant 3.000000e+00 : f32
    %722 = vector.broadcast %cst_179 : f32 to vector<1x128xf32>
    %723 = arith.select %720, %722, %718 : vector<1x128xi1>, vector<1x128xf32>
    %724 = vector.extract_strided_slice %706 {offsets = [4, 0], sizes = [1, 128], strides = [1, 1]} : vector<8x128xf32> to vector<1x128xf32>
    %725 = arith.cmpf olt, %724, %721 : vector<1x128xf32>
    %726 = arith.select %725, %724, %721 : vector<1x128xi1>, vector<1x128xf32>
    %cst_180 = arith.constant 4.000000e+00 : f32
    %727 = vector.broadcast %cst_180 : f32 to vector<1x128xf32>
    %728 = arith.select %725, %727, %723 : vector<1x128xi1>, vector<1x128xf32>
    %729 = vector.extract_strided_slice %706 {offsets = [5, 0], sizes = [1, 128], strides = [1, 1]} : vector<8x128xf32> to vector<1x128xf32>
    %730 = arith.cmpf olt, %729, %726 : vector<1x128xf32>
    %731 = arith.select %730, %729, %726 : vector<1x128xi1>, vector<1x128xf32>
    %cst_181 = arith.constant 5.000000e+00 : f32
    %732 = vector.broadcast %cst_181 : f32 to vector<1x128xf32>
    %733 = arith.select %730, %732, %728 : vector<1x128xi1>, vector<1x128xf32>
    %734 = vector.extract_strided_slice %706 {offsets = [6, 0], sizes = [1, 128], strides = [1, 1]} : vector<8x128xf32> to vector<1x128xf32>
    %735 = arith.cmpf olt, %734, %731 : vector<1x128xf32>
    %736 = arith.select %735, %734, %731 : vector<1x128xi1>, vector<1x128xf32>
    %cst_182 = arith.constant 6.000000e+00 : f32
    %737 = vector.broadcast %cst_182 : f32 to vector<1x128xf32>
    %738 = arith.select %735, %737, %733 : vector<1x128xi1>, vector<1x128xf32>
    %739 = vector.extract_strided_slice %706 {offsets = [7, 0], sizes = [1, 128], strides = [1, 1]} : vector<8x128xf32> to vector<1x128xf32>
    %740 = arith.cmpf olt, %739, %736 : vector<1x128xf32>
    %cst_183 = arith.constant 7.000000e+00 : f32
    %741 = vector.broadcast %cst_183 : f32 to vector<1x128xf32>
    %742 = arith.select %740, %741, %738 : vector<1x128xi1>, vector<1x128xf32>
    %743 = vector.broadcast %742 : vector<1x128xf32> to vector<8x128xf32>
    %744 = vector.broadcast %264 : vector<8x1xf32> to vector<8x128xf32>
    %745 = arith.cmpf oeq, %743, %744 : vector<8x128xf32>
    %746 = arith.extui %745 : vector<8x128xi1> to vector<8x128xi32>
    %747 = arith.sitofp %746 : vector<8x128xi32> to vector<8x128xf32>
    %cst_184 = arith.constant dense<0.000000e+00> : vector<8x8xf32>
    %748 = tpu.matmul %747, %257, %cst_184 {dimension_numbers = #tpu.dot_dimension_numbers<[1], [1], [0], [0], [0, 0, 1, 0], [], []>} : vector<8x128xf32>, vector<8x128xf32>, vector<8x8xf32> -> vector<8x8xf32>
    %cst_185 = arith.constant dense<0.000000e+00> : vector<8xf32>
    %749 = vector.multi_reduction <add>, %747, %cst_185 [1] : vector<8x128xf32> to vector<8xf32>
    %750 = vector.shape_cast %749 : vector<8xf32> to vector<8x1xf32>
    %cst_186 = arith.constant 1.000000e+00 : f32
    %751 = vector.broadcast %cst_186 : f32 to vector<8x1xf32>
    %752 = arith.maximumf %750, %751 : vector<8x1xf32>
    %753 = tpu.reciprocal %752 {approx = true} : vector<8x1xf32> -> vector<8x1xf32>
    %754 = vector.broadcast %753 : vector<8x1xf32> to vector<8x8xf32>
    %755 = arith.mulf %748, %754 : vector<8x8xf32>
    %cst_187 = arith.constant 0.000000e+00 : f32
    %756 = vector.broadcast %cst_187 : f32 to vector<8x1xf32>
    %757 = arith.cmpf ogt, %750, %756 : vector<8x1xf32>
    %758 = vector.shape_cast %757 : vector<8x1xi1> to vector<8x1xi1>
    %759 = vector.broadcast %758 : vector<8x1xi1> to vector<8x8xi1>
    %760 = arith.select %759, %755, %698 : vector<8x8xi1>, vector<8x8xf32>
    %c8_i32 = arith.constant 8 : i32
    %cst_188 = arith.constant dense<0.000000e+00> : vector<8x128xf32>
    %761 = tpu.matmul %760, %257, %cst_188 {dimension_numbers = #tpu.dot_dimension_numbers<[1], [0], [0], [1], [0, 0, 1, 1], [], []>} : vector<8x8xf32>, vector<8x128xf32>, vector<8x128xf32> -> vector<8x128xf32>
    %762 = arith.mulf %760, %760 : vector<8x8xf32>
    %cst_189 = arith.constant dense<0.000000e+00> : vector<8xf32>
    %763 = vector.multi_reduction <add>, %762, %cst_189 [1] : vector<8x8xf32> to vector<8xf32>
    %764 = vector.shape_cast %763 : vector<8xf32> to vector<8x1xf32>
    %cst_190 = arith.constant 2.000000e+00 : f32
    %765 = vector.broadcast %cst_190 : f32 to vector<8x128xf32>
    %766 = arith.mulf %765, %761 : vector<8x128xf32>
    %767 = vector.broadcast %764 : vector<8x1xf32> to vector<8x128xf32>
    %768 = arith.subf %767, %766 : vector<8x128xf32>
    %769 = vector.extract_strided_slice %768 {offsets = [0, 0], sizes = [1, 128], strides = [1, 1]} : vector<8x128xf32> to vector<1x128xf32>
    %cst_191 = arith.constant 0.000000e+00 : f32
    %770 = vector.broadcast %cst_191 : f32 to vector<1x128xf32>
    %771 = vector.extract_strided_slice %768 {offsets = [1, 0], sizes = [1, 128], strides = [1, 1]} : vector<8x128xf32> to vector<1x128xf32>
    %772 = arith.cmpf olt, %771, %769 : vector<1x128xf32>
    %773 = arith.select %772, %771, %769 : vector<1x128xi1>, vector<1x128xf32>
    %cst_192 = arith.constant 1.000000e+00 : f32
    %774 = vector.broadcast %cst_192 : f32 to vector<1x128xf32>
    %775 = arith.select %772, %774, %770 : vector<1x128xi1>, vector<1x128xf32>
    %776 = vector.extract_strided_slice %768 {offsets = [2, 0], sizes = [1, 128], strides = [1, 1]} : vector<8x128xf32> to vector<1x128xf32>
    %777 = arith.cmpf olt, %776, %773 : vector<1x128xf32>
    %778 = arith.select %777, %776, %773 : vector<1x128xi1>, vector<1x128xf32>
    %cst_193 = arith.constant 2.000000e+00 : f32
    %779 = vector.broadcast %cst_193 : f32 to vector<1x128xf32>
    %780 = arith.select %777, %779, %775 : vector<1x128xi1>, vector<1x128xf32>
    %781 = vector.extract_strided_slice %768 {offsets = [3, 0], sizes = [1, 128], strides = [1, 1]} : vector<8x128xf32> to vector<1x128xf32>
    %782 = arith.cmpf olt, %781, %778 : vector<1x128xf32>
    %783 = arith.select %782, %781, %778 : vector<1x128xi1>, vector<1x128xf32>
    %cst_194 = arith.constant 3.000000e+00 : f32
    %784 = vector.broadcast %cst_194 : f32 to vector<1x128xf32>
    %785 = arith.select %782, %784, %780 : vector<1x128xi1>, vector<1x128xf32>
    %786 = vector.extract_strided_slice %768 {offsets = [4, 0], sizes = [1, 128], strides = [1, 1]} : vector<8x128xf32> to vector<1x128xf32>
    %787 = arith.cmpf olt, %786, %783 : vector<1x128xf32>
    %788 = arith.select %787, %786, %783 : vector<1x128xi1>, vector<1x128xf32>
    %cst_195 = arith.constant 4.000000e+00 : f32
    %789 = vector.broadcast %cst_195 : f32 to vector<1x128xf32>
    %790 = arith.select %787, %789, %785 : vector<1x128xi1>, vector<1x128xf32>
    %791 = vector.extract_strided_slice %768 {offsets = [5, 0], sizes = [1, 128], strides = [1, 1]} : vector<8x128xf32> to vector<1x128xf32>
    %792 = arith.cmpf olt, %791, %788 : vector<1x128xf32>
    %793 = arith.select %792, %791, %788 : vector<1x128xi1>, vector<1x128xf32>
    %cst_196 = arith.constant 5.000000e+00 : f32
    %794 = vector.broadcast %cst_196 : f32 to vector<1x128xf32>
    %795 = arith.select %792, %794, %790 : vector<1x128xi1>, vector<1x128xf32>
    %796 = vector.extract_strided_slice %768 {offsets = [6, 0], sizes = [1, 128], strides = [1, 1]} : vector<8x128xf32> to vector<1x128xf32>
    %797 = arith.cmpf olt, %796, %793 : vector<1x128xf32>
    %798 = arith.select %797, %796, %793 : vector<1x128xi1>, vector<1x128xf32>
    %cst_197 = arith.constant 6.000000e+00 : f32
    %799 = vector.broadcast %cst_197 : f32 to vector<1x128xf32>
    %800 = arith.select %797, %799, %795 : vector<1x128xi1>, vector<1x128xf32>
    %801 = vector.extract_strided_slice %768 {offsets = [7, 0], sizes = [1, 128], strides = [1, 1]} : vector<8x128xf32> to vector<1x128xf32>
    %802 = arith.cmpf olt, %801, %798 : vector<1x128xf32>
    %cst_198 = arith.constant 7.000000e+00 : f32
    %803 = vector.broadcast %cst_198 : f32 to vector<1x128xf32>
    %804 = arith.select %802, %803, %800 : vector<1x128xi1>, vector<1x128xf32>
    %805 = vector.broadcast %804 : vector<1x128xf32> to vector<8x128xf32>
    %806 = vector.broadcast %264 : vector<8x1xf32> to vector<8x128xf32>
    %807 = arith.cmpf oeq, %805, %806 : vector<8x128xf32>
    %808 = arith.extui %807 : vector<8x128xi1> to vector<8x128xi32>
    %809 = arith.sitofp %808 : vector<8x128xi32> to vector<8x128xf32>
    %cst_199 = arith.constant dense<0.000000e+00> : vector<8x8xf32>
    %810 = tpu.matmul %809, %257, %cst_199 {dimension_numbers = #tpu.dot_dimension_numbers<[1], [1], [0], [0], [0, 0, 1, 0], [], []>} : vector<8x128xf32>, vector<8x128xf32>, vector<8x8xf32> -> vector<8x8xf32>
    %cst_200 = arith.constant dense<0.000000e+00> : vector<8xf32>
    %811 = vector.multi_reduction <add>, %809, %cst_200 [1] : vector<8x128xf32> to vector<8xf32>
    %812 = vector.shape_cast %811 : vector<8xf32> to vector<8x1xf32>
    %cst_201 = arith.constant 1.000000e+00 : f32
    %813 = vector.broadcast %cst_201 : f32 to vector<8x1xf32>
    %814 = arith.maximumf %812, %813 : vector<8x1xf32>
    %815 = tpu.reciprocal %814 {approx = true} : vector<8x1xf32> -> vector<8x1xf32>
    %816 = vector.broadcast %815 : vector<8x1xf32> to vector<8x8xf32>
    %817 = arith.mulf %810, %816 : vector<8x8xf32>
    %cst_202 = arith.constant 0.000000e+00 : f32
    %818 = vector.broadcast %cst_202 : f32 to vector<8x1xf32>
    %819 = arith.cmpf ogt, %812, %818 : vector<8x1xf32>
    %820 = vector.shape_cast %819 : vector<8x1xi1> to vector<8x1xi1>
    %821 = vector.broadcast %820 : vector<8x1xi1> to vector<8x8xi1>
    %822 = arith.select %821, %817, %760 : vector<8x8xi1>, vector<8x8xf32>
    %cst_203 = arith.constant dense<0.000000e+00> : vector<8x128xf32>
    %823 = tpu.matmul %822, %257, %cst_203 {dimension_numbers = #tpu.dot_dimension_numbers<[1], [0], [0], [1], [0, 0, 1, 1], [], []>} : vector<8x8xf32>, vector<8x128xf32>, vector<8x128xf32> -> vector<8x128xf32>
    %824 = arith.mulf %822, %822 : vector<8x8xf32>
    %cst_204 = arith.constant dense<0.000000e+00> : vector<8xf32>
    %825 = vector.multi_reduction <add>, %824, %cst_204 [1] : vector<8x8xf32> to vector<8xf32>
    %826 = vector.shape_cast %825 : vector<8xf32> to vector<8x1xf32>
    %cst_205 = arith.constant 2.000000e+00 : f32
    %827 = vector.broadcast %cst_205 : f32 to vector<8x128xf32>
    %828 = arith.mulf %827, %823 : vector<8x128xf32>
    %829 = vector.broadcast %826 : vector<8x1xf32> to vector<8x128xf32>
    %830 = arith.subf %829, %828 : vector<8x128xf32>
    %831 = vector.extract_strided_slice %830 {offsets = [0, 0], sizes = [1, 128], strides = [1, 1]} : vector<8x128xf32> to vector<1x128xf32>
    %cst_206 = arith.constant 0.000000e+00 : f32
    %832 = vector.broadcast %cst_206 : f32 to vector<1x128xf32>
    %833 = vector.extract_strided_slice %830 {offsets = [1, 0], sizes = [1, 128], strides = [1, 1]} : vector<8x128xf32> to vector<1x128xf32>
    %834 = arith.cmpf olt, %833, %831 : vector<1x128xf32>
    %835 = arith.select %834, %833, %831 : vector<1x128xi1>, vector<1x128xf32>
    %cst_207 = arith.constant 1.000000e+00 : f32
    %836 = vector.broadcast %cst_207 : f32 to vector<1x128xf32>
    %837 = arith.select %834, %836, %832 : vector<1x128xi1>, vector<1x128xf32>
    %838 = vector.extract_strided_slice %830 {offsets = [2, 0], sizes = [1, 128], strides = [1, 1]} : vector<8x128xf32> to vector<1x128xf32>
    %839 = arith.cmpf olt, %838, %835 : vector<1x128xf32>
    %840 = arith.select %839, %838, %835 : vector<1x128xi1>, vector<1x128xf32>
    %cst_208 = arith.constant 2.000000e+00 : f32
    %841 = vector.broadcast %cst_208 : f32 to vector<1x128xf32>
    %842 = arith.select %839, %841, %837 : vector<1x128xi1>, vector<1x128xf32>
    %843 = vector.extract_strided_slice %830 {offsets = [3, 0], sizes = [1, 128], strides = [1, 1]} : vector<8x128xf32> to vector<1x128xf32>
    %844 = arith.cmpf olt, %843, %840 : vector<1x128xf32>
    %845 = arith.select %844, %843, %840 : vector<1x128xi1>, vector<1x128xf32>
    %cst_209 = arith.constant 3.000000e+00 : f32
    %846 = vector.broadcast %cst_209 : f32 to vector<1x128xf32>
    %847 = arith.select %844, %846, %842 : vector<1x128xi1>, vector<1x128xf32>
    %848 = vector.extract_strided_slice %830 {offsets = [4, 0], sizes = [1, 128], strides = [1, 1]} : vector<8x128xf32> to vector<1x128xf32>
    %849 = arith.cmpf olt, %848, %845 : vector<1x128xf32>
    %850 = arith.select %849, %848, %845 : vector<1x128xi1>, vector<1x128xf32>
    %cst_210 = arith.constant 4.000000e+00 : f32
    %851 = vector.broadcast %cst_210 : f32 to vector<1x128xf32>
    %852 = arith.select %849, %851, %847 : vector<1x128xi1>, vector<1x128xf32>
    %853 = vector.extract_strided_slice %830 {offsets = [5, 0], sizes = [1, 128], strides = [1, 1]} : vector<8x128xf32> to vector<1x128xf32>
    %854 = arith.cmpf olt, %853, %850 : vector<1x128xf32>
    %855 = arith.select %854, %853, %850 : vector<1x128xi1>, vector<1x128xf32>
    %cst_211 = arith.constant 5.000000e+00 : f32
    %856 = vector.broadcast %cst_211 : f32 to vector<1x128xf32>
    %857 = arith.select %854, %856, %852 : vector<1x128xi1>, vector<1x128xf32>
    %858 = vector.extract_strided_slice %830 {offsets = [6, 0], sizes = [1, 128], strides = [1, 1]} : vector<8x128xf32> to vector<1x128xf32>
    %859 = arith.cmpf olt, %858, %855 : vector<1x128xf32>
    %860 = arith.select %859, %858, %855 : vector<1x128xi1>, vector<1x128xf32>
    %cst_212 = arith.constant 6.000000e+00 : f32
    %861 = vector.broadcast %cst_212 : f32 to vector<1x128xf32>
    %862 = arith.select %859, %861, %857 : vector<1x128xi1>, vector<1x128xf32>
    %863 = vector.extract_strided_slice %830 {offsets = [7, 0], sizes = [1, 128], strides = [1, 1]} : vector<8x128xf32> to vector<1x128xf32>
    %864 = arith.cmpf olt, %863, %860 : vector<1x128xf32>
    %cst_213 = arith.constant 7.000000e+00 : f32
    %865 = vector.broadcast %cst_213 : f32 to vector<1x128xf32>
    %866 = arith.select %864, %865, %862 : vector<1x128xi1>, vector<1x128xf32>
    %c0_214 = arith.constant 0 : index
    %c0_215 = arith.constant 0 : index
    %867 = vector.load %arg3[%c0_214, %c0_215] : memref<1x128xf32, #tpu.memory_space<vmem>>, vector<1x128xf32>
    tpu.vector_store %arg3[%c0_214, %c0_215], %866 {strides = array<i32>} : memref<1x128xf32, #tpu.memory_space<vmem>>, vector<1x128xf32>,
    return
  }
}

</mosaic_0001>

<llo_original>
// kernel: open_spectral_fit_and_forward.1
$region0: #{open_spectral_fit_and_forward.1}
  #allocation0 [shape = 'u32[]', space=smem, size = 0x4, offset = 0x4, fixed_abs, tag = 'smem constant byte address 0x4 - core index']
  #allocation1 [shape = 'u32[144,128]{1,0:T(1,128)}', space=vmem, size = 0x12000, scoped, tag = 'internal scratch']
  %s0 = inlined_call_operand.vmem [shape: f32[128,640], index: 0, kind: input, shape index: {}]
  %s1 = inlined_call_operand.vmem [shape: f32[640,128], index: 1, kind: input, shape index: {}]
  %s2 = inlined_call_operand.vmem [shape: f32[8,128], index: 2, kind: input, shape index: {}]
  %s3 = inlined_call_operand.hbm [shape: f32[1,128], index: 3, kind: output, shape index: {}]
  %s4 = sld [smem:[#allocation0]]
  $region29: #{open_spectral_fit_and_forward.1} parent=0
    _
  %s6 = ssub.s32 1, %s4
  %s7 = scalar_select 0, %s6, %s4
  $region1: #{open_spectral_fit_and_forward.1} parent=0
    #allocation2 [shape = 'u8[512]{0}', space=vmem, size = 0x400, scoped, tag = 'output window, operand 0, single buffered']
    #allocation3 [shape = 's32[1]{0}', space=sflag, size = 0x4, scoped, tag = 'scoped memory for open_spectral_fit_and_forward.1']
    %8 = vsyncpa [#allocation3], 0
    // Predicated region
    $region2: #{open_spectral_fit_and_forward.1} parent=1 // pred_check
      _
    $region3: #{open_spectral_fit_and_forward.1} parent=1 // pred_check_branch
      %10 = sbr.rel (0) target = $region5
    $region4: #{open_spectral_fit_and_forward.1} parent=1 // pred_region
      _
    $region5: #{open_spectral_fit_and_forward.1} parent=1 // pred_fallthru
      _
    // Predicated region
    $region6: #{open_spectral_fit_and_forward.1} parent=1 // pred_check
      _
    $region7: #{open_spectral_fit_and_forward.1} parent=1 // pred_check_branch
      %12 = sbr.rel (0) target = $region9
    $region8: #{open_spectral_fit_and_forward.1} parent=1 // pred_region
      _
    $region9: #{open_spectral_fit_and_forward.1} parent=1 // pred_fallthru
      _
    // Predicated region
    $region10: #{open_spectral_fit_and_forward.1} parent=1 // pred_check
      _
    $region11: #{open_spectral_fit_and_forward.1} parent=1 // pred_check_branch
      %14 = sbr.rel (0) target = $region13
    $region12: #{open_spectral_fit_and_forward.1} parent=1 // pred_region
      _
    $region13: #{open_spectral_fit_and_forward.1} parent=1 // pred_fallthru
      _
    %v15 = vld [vmem:[%s0] sm:$0xff]
    %v16 = vld [vmem:[%s0 + $0x8] sm:$0xff]
    %v17 = vld [vmem:[%s0 + $0x10] sm:$0xff]
    %v18 = vld [vmem:[%s0 + $0x18] sm:$0xff]
    %v19 = vld [vmem:[%s0 + $0x20] sm:$0xff]
    %v20 = vld [vmem:[%s0 + $0x28] sm:$0xff]
    %v21 = vld [vmem:[%s0 + $0x30] sm:$0xff]
    %v22 = vld [vmem:[%s0 + $0x38] sm:$0xff]
    %v23 = vld [vmem:[%s0 + $0x40] sm:$0xff]
    %v24 = vld [vmem:[%s0 + $0x48] sm:$0xff]
    %v25 = vld [vmem:[%s0 + $0x50] sm:$0xff]
    %v26 = vld [vmem:[%s0 + $0x58] sm:$0xff]
    %v27 = vld [vmem:[%s0 + $0x60] sm:$0xff]
    %v28 = vld [vmem:[%s0 + $0x68] sm:$0xff]
    %v29 = vld [vmem:[%s0 + $0x70] sm:$0xff]
    %v30 = vld [vmem:[%s0 + $0x78] sm:$0xff]
    %v31 = vld [vmem:[%s0 + $0x80] sm:$0xff]
    %v32 = vld [vmem:[%s0 + $0x88] sm:$0xff]
    %v33 = vld [vmem:[%s0 + $0x90] sm:$0xff]
    %v34 = vld [vmem:[%s0 + $0x98] sm:$0xff]
    %v35 = vld [vmem:[%s0 + $0xa0] sm:$0xff]
    %v36 = vld [vmem:[%s0 + $0xa8] sm:$0xff]
    %v37 = vld [vmem:[%s0 + $0xb0] sm:$0xff]
    %v38 = vld [vmem:[%s0 + $0xb8] sm:$0xff]
    %v39 = vld [vmem:[%s0 + $0xc0] sm:$0xff]
    %v40 = vld [vmem:[%s0 + $0xc8] sm:$0xff]
    %v41 = vld [vmem:[%s0 + $0xd0] sm:$0xff]
    %v42 = vld [vmem:[%s0 + $0xd8] sm:$0xff]
    %v43 = vld [vmem:[%s0 + $0xe0] sm:$0xff]
    %v44 = vld [vmem:[%s0 + $0xe8] sm:$0xff]
    %v45 = vld [vmem:[%s0 + $0xf0] sm:$0xff]
    %v46 = vld [vmem:[%s0 + $0xf8] sm:$0xff]
    %v47 = vld [vmem:[%s0 + $0x100] sm:$0xff]
    %v48 = vld [vmem:[%s0 + $0x108] sm:$0xff]
    %v49 = vld [vmem:[%s0 + $0x110] sm:$0xff]
    %v50 = vld [vmem:[%s0 + $0x118] sm:$0xff]
    %v51 = vld [vmem:[%s0 + $0x120] sm:$0xff]
    %v52 = vld [vmem:[%s0 + $0x128] sm:$0xff]
    %v53 = vld [vmem:[%s0 + $0x130] sm:$0xff]
    %v54 = vld [vmem:[%s0 + $0x138] sm:$0xff]
    %v55 = vld [vmem:[%s0 + $0x140] sm:$0xff]
    %v56 = vld [vmem:[%s0 + $0x148] sm:$0xff]
    %v57 = vld [vmem:[%s0 + $0x150] sm:$0xff]
    %v58 = vld [vmem:[%s0 + $0x158] sm:$0xff]
    %v59 = vld [vmem:[%s0 + $0x160] sm:$0xff]
    %v60 = vld [vmem:[%s0 + $0x168] sm:$0xff]
    %v61 = vld [vmem:[%s0 + $0x170] sm:$0xff]
    %v62 = vld [vmem:[%s0 + $0x178] sm:$0xff]
    %v63 = vld [vmem:[%s0 + $0x180] sm:$0xff]
    %v64 = vld [vmem:[%s0 + $0x188] sm:$0xff]
    %v65 = vld [vmem:[%s0 + $0x190] sm:$0xff]
    %v66 = vld [vmem:[%s0 + $0x198] sm:$0xff]
    %v67 = vld [vmem:[%s0 + $0x1a0] sm:$0xff]
    %v68 = vld [vmem:[%s0 + $0x1a8] sm:$0xff]
    %v69 = vld [vmem:[%s0 + $0x1b0] sm:$0xff]
    %v70 = vld [vmem:[%s0 + $0x1b8] sm:$0xff]
    %v71 = vld [vmem:[%s0 + $0x1c0] sm:$0xff]
    %v72 = vld [vmem:[%s0 + $0x1c8] sm:$0xff]
    %v73 = vld [vmem:[%s0 + $0x1d0] sm:$0xff]
    %v74 = vld [vmem:[%s0 + $0x1d8] sm:$0xff]
    %v75 = vld [vmem:[%s0 + $0x1e0] sm:$0xff]
    %v76 = vld [vmem:[%s0 + $0x1e8] sm:$0xff]
    %v77 = vld [vmem:[%s0 + $0x1f0] sm:$0xff]
    %v78 = vld [vmem:[%s0 + $0x1f8] sm:$0xff]
    %v79 = vld [vmem:[%s0 + $0x200] sm:$0xff]
    %v80 = vld [vmem:[%s0 + $0x208] sm:$0xff]
    %v81 = vld [vmem:[%s0 + $0x210] sm:$0xff]
    %v82 = vld [vmem:[%s0 + $0x218] sm:$0xff]
    %v83 = vld [vmem:[%s0 + $0x220] sm:$0xff]
    %v84 = vld [vmem:[%s0 + $0x228] sm:$0xff]
    %v85 = vld [vmem:[%s0 + $0x230] sm:$0xff]
    %v86 = vld [vmem:[%s0 + $0x238] sm:$0xff]
    %v87 = vld [vmem:[%s0 + $0x240] sm:$0xff]
    %v88 = vld [vmem:[%s0 + $0x248] sm:$0xff]
    %v89 = vld [vmem:[%s0 + $0x250] sm:$0xff]
    %v90 = vld [vmem:[%s0 + $0x258] sm:$0xff]
    %v91 = vld [vmem:[%s0 + $0x260] sm:$0xff]
    %v92 = vld [vmem:[%s0 + $0x268] sm:$0xff]
    %v93 = vld [vmem:[%s0 + $0x270] sm:$0xff]
    %v94 = vld [vmem:[%s0 + $0x278] sm:$0xff]
    %v95 = vld [vmem:[%s1] sm:$0xff]
    %v96 = vld [vmem:[%s1 + $0x8] sm:$0xff]
    %v97 = vld [vmem:[%s1 + $0x10] sm:$0xff]
    %v98 = vld [vmem:[%s1 + $0x18] sm:$0xff]
    %v99 = vld [vmem:[%s1 + $0x20] sm:$0xff]
    %v100 = vld [vmem:[%s1 + $0x28] sm:$0xff]
    %v101 = vld [vmem:[%s1 + $0x30] sm:$0xff]
    %v102 = vld [vmem:[%s1 + $0x38] sm:$0xff]
    %v103 = vld [vmem:[%s1 + $0x40] sm:$0xff]
    %v104 = vld [vmem:[%s1 + $0x48] sm:$0xff]
    %v105 = vld [vmem:[%s1 + $0x50] sm:$0xff]
    %v106 = vld [vmem:[%s1 + $0x58] sm:$0xff]
    %v107 = vld [vmem:[%s1 + $0x60] sm:$0xff]
    %v108 = vld [vmem:[%s1 + $0x68] sm:$0xff]
    %v109 = vld [vmem:[%s1 + $0x70] sm:$0xff]
    %v110 = vld [vmem:[%s1 + $0x78] sm:$0xff]
    %v111 = vld [vmem:[%s1 + $0x80] sm:$0xff]
    %v112 = vld [vmem:[%s1 + $0x88] sm:$0xff]
    %v113 = vld [vmem:[%s1 + $0x90] sm:$0xff]
    %v114 = vld [vmem:[%s1 + $0x98] sm:$0xff]
    %v115 = vld [vmem:[%s1 + $0xa0] sm:$0xff]
    %v116 = vld [vmem:[%s1 + $0xa8] sm:$0xff]
    %v117 = vld [vmem:[%s1 + $0xb0] sm:$0xff]
    %v118 = vld [vmem:[%s1 + $0xb8] sm:$0xff]
    %v119 = vld [vmem:[%s1 + $0xc0] sm:$0xff]
    %v120 = vld [vmem:[%s1 + $0xc8] sm:$0xff]
    %v121 = vld [vmem:[%s1 + $0xd0] sm:$0xff]
    %v122 = vld [vmem:[%s1 + $0xd8] sm:$0xff]
    %v123 = vld [vmem:[%s1 + $0xe0] sm:$0xff]
    %v124 = vld [vmem:[%s1 + $0xe8] sm:$0xff]
    %v125 = vld [vmem:[%s1 + $0xf0] sm:$0xff]
    %v126 = vld [vmem:[%s1 + $0xf8] sm:$0xff]
    %v127 = vld [vmem:[%s1 + $0x100] sm:$0xff]
    %v128 = vld [vmem:[%s1 + $0x108] sm:$0xff]
    %v129 = vld [vmem:[%s1 + $0x110] sm:$0xff]
    %v130 = vld [vmem:[%s1 + $0x118] sm:$0xff]
    %v131 = vld [vmem:[%s1 + $0x120] sm:$0xff]
    %v132 = vld [vmem:[%s1 + $0x128] sm:$0xff]
    %v133 = vld [vmem:[%s1 + $0x130] sm:$0xff]
    %v134 = vld [vmem:[%s1 + $0x138] sm:$0xff]
    %v135 = vld [vmem:[%s1 + $0x140] sm:$0xff]
    %v136 = vld [vmem:[%s1 + $0x148] sm:$0xff]
    %v137 = vld [vmem:[%s1 + $0x150] sm:$0xff]
    %v138 = vld [vmem:[%s1 + $0x158] sm:$0xff]
    %v139 = vld [vmem:[%s1 + $0x160] sm:$0xff]
    %v140 = vld [vmem:[%s1 + $0x168] sm:$0xff]
    %v141 = vld [vmem:[%s1 + $0x170] sm:$0xff]
    %v142 = vld [vmem:[%s1 + $0x178] sm:$0xff]
    %v143 = vld [vmem:[%s1 + $0x180] sm:$0xff]
    %v144 = vld [vmem:[%s1 + $0x188] sm:$0xff]
    %v145 = vld [vmem:[%s1 + $0x190] sm:$0xff]
    %v146 = vld [vmem:[%s1 + $0x198] sm:$0xff]
    %v147 = vld [vmem:[%s1 + $0x1a0] sm:$0xff]
    %v148 = vld [vmem:[%s1 + $0x1a8] sm:$0xff]
    %v149 = vld [vmem:[%s1 + $0x1b0] sm:$0xff]
    %v150 = vld [vmem:[%s1 + $0x1b8] sm:$0xff]
    %v151 = vld [vmem:[%s1 + $0x1c0] sm:$0xff]
    %v152 = vld [vmem:[%s1 + $0x1c8] sm:$0xff]
    %v153 = vld [vmem:[%s1 + $0x1d0] sm:$0xff]
    %v154 = vld [vmem:[%s1 + $0x1d8] sm:$0xff]
    %v155 = vld [vmem:[%s1 + $0x1e0] sm:$0xff]
    %v156 = vld [vmem:[%s1 + $0x1e8] sm:$0xff]
    %v157 = vld [vmem:[%s1 + $0x1f0] sm:$0xff]
    %v158 = vld [vmem:[%s1 + $0x1f8] sm:$0xff]
    %v159 = vld [vmem:[%s1 + $0x200] sm:$0xff]
    %v160 = vld [vmem:[%s1 + $0x208] sm:$0xff]
    %v161 = vld [vmem:[%s1 + $0x210] sm:$0xff]
    %v162 = vld [vmem:[%s1 + $0x218] sm:$0xff]
    %v163 = vld [vmem:[%s1 + $0x220] sm:$0xff]
    %v164 = vld [vmem:[%s1 + $0x228] sm:$0xff]
    %v165 = vld [vmem:[%s1 + $0x230] sm:$0xff]
    %v166 = vld [vmem:[%s1 + $0x238] sm:$0xff]
    %v167 = vld [vmem:[%s1 + $0x240] sm:$0xff]
    %v168 = vld [vmem:[%s1 + $0x248] sm:$0xff]
    %v169 = vld [vmem:[%s1 + $0x250] sm:$0xff]
    %v170 = vld [vmem:[%s1 + $0x258] sm:$0xff]
    %v171 = vld [vmem:[%s1 + $0x260] sm:$0xff]
    %v172 = vld [vmem:[%s1 + $0x268] sm:$0xff]
    %v173 = vld [vmem:[%s1 + $0x270] sm:$0xff]
    %v174 = vld [vmem:[%s1 + $0x278] sm:$0xff]
    %175 = vmatprep.subr.mxu0 0.0
    %176 = vmatpush1.msra.mxu0 %v95
    %177 = vmatprep.subr.mxu0 0.0
    %178 = vmatpush1.msra.mxu0 %v96
    %179 = vmatprep.subr.mxu0 0.0
    %180 = vmatpush1.msra.mxu0 %v97
    %181 = vmatprep.subr.mxu0 0.0
    %182 = vmatpush1.msra.mxu0 %v98
    %183 = vmatprep.subr.mxu0 0.0
    %184 = vmatpush1.msra.mxu0 %v99
    %185 = vmatprep.subr.mxu0 0.0
    %186 = vmatpush1.msra.mxu0 %v100
    %187 = vmatprep.subr.mxu0 0.0
    %188 = vmatpush1.msra.mxu0 %v101
    %189 = vmatprep.subr.mxu0 0.0
    %190 = vmatpush1.msra.mxu0 %v102
    %191 = vmatprep.subr.mxu0 0.0
    %192 = vmatpush1.msra.mxu0 %v103
    %193 = vmatprep.subr.mxu0 0.0
    %194 = vmatpush1.msra.mxu0 %v104
    %195 = vmatprep.subr.mxu0 0.0
    %196 = vmatpush1.msra.mxu0 %v105
    %197 = vmatprep.subr.mxu0 0.0
    %198 = vmatpush1.msra.mxu0 %v106
    %199 = vmatprep.subr.mxu0 0.0
    %200 = vmatpush1.msra.mxu0 %v107
    %201 = vmatprep.subr.mxu0 0.0
    %202 = vmatpush1.msra.mxu0 %v108
    %203 = vmatprep.subr.mxu0 0.0
    %204 = vmatpush1.msra.mxu0 %v109
    %205 = vmatprep.subr.mxu0 0.0
    %206 = vmatpush1.msra.mxu0 %v110
    %207 = vmatprep.subr.mxu0 0.0
    %208 = vmatpush1.msra.mxu0 %v111
    %209 = vmatprep.subr.mxu0 0.0
    %210 = vmatpush1.msra.mxu0 %v112
    %211 = vmatprep.subr.mxu0 0.0
    %212 = vmatpush1.msra.mxu0 %v113
    %213 = vmatprep.subr.mxu0 0.0
    %214 = vmatpush1.msra.mxu0 %v114
    %215 = vmatprep.subr.mxu0 0.0
    %216 = vmatpush1.msra.mxu0 %v115
    %217 = vmatprep.subr.mxu0 0.0
    %218 = vmatpush1.msra.mxu0 %v116
    %219 = vmatprep.subr.mxu0 0.0
    %220 = vmatpush1.msra.mxu0 %v117
    %221 = vmatprep.subr.mxu0 0.0
    %222 = vmatpush1.msra.mxu0 %v118
    %223 = vmatprep.subr.mxu0 0.0
    %224 = vmatpush1.msra.mxu0 %v119
    %225 = vmatprep.subr.mxu0 0.0
    %226 = vmatpush1.msra.mxu0 %v120
    %227 = vmatprep.subr.mxu0 0.0
    %228 = vmatpush1.msra.mxu0 %v121
    %229 = vmatprep.subr.mxu0 0.0
    %230 = vmatpush1.msra.mxu0 %v122
    %231 = vmatprep.subr.mxu0 0.0
    %232 = vmatpush1.msra.mxu0 %v123
    %233 = vmatprep.subr.mxu0 0.0
    %234 = vmatpush1.msra.mxu0 %v124
    %235 = vmatprep.subr.mxu0 0.0
    %236 = vmatpush1.msra.mxu0 %v125
    %237 = vmatprep.subr.mxu0 0.0
    %238 = vmatpush1.msra.mxu0 %v126
    %239 = vmatprep.mubr.f32.mxu0 %v16
    %240 = vmatmul.mubr.f32.gmra.mrb[0].mxu0 %v15
    %v241 = vpop.f32.mrb[0].mxu0
    %v242 = vadd.f32 0.0, %v241
    %v243 = vpop.f32.mrb[0].mxu0
    %244 = vmatprep.mubr.f32.mxu0 %v21
    %245 = vmatmul.mubr.f32.gmra.mrb[0].mxu0 %v20
    %v246 = vpop.f32.mrb[0].mxu0
    %v247 = vadd.f32 0.0, %v246
    %v248 = vpop.f32.mrb[0].mxu0
    %249 = vmatprep.mubr.f32.mxu0 %v26
    %250 = vmatmul.mubr.f32.gmra.mrb[0].mxu0 %v25
    %v251 = vpop.f32.mrb[0].mxu0
    %v252 = vadd.f32 0.0, %v251
    %v253 = vpop.f32.mrb[0].mxu0
    %254 = vmatprep.mubr.f32.mxu0 %v31
    %255 = vmatmul.mubr.f32.gmra.mrb[0].mxu0 %v30
    %v256 = vpop.f32.mrb[0].mxu0
    %v257 = vadd.f32 0.0, %v256
    %v258 = vpop.f32.mrb[0].mxu0
    %259 = vmatprep.mubr.f32.mxu0 %v36
    %260 = vmatmul.mubr.f32.gmra.mrb[0].mxu0 %v35
    %v261 = vpop.f32.mrb[0].mxu0
    %v262 = vadd.f32 0.0, %v261
    %v263 = vpop.f32.mrb[0].mxu0
    %264 = vmatprep.mubr.f32.mxu0 %v41
    %265 = vmatmul.mubr.f32.gmra.mrb[0].mxu0 %v40
    %v266 = vpop.f32.mrb[0].mxu0
    %v267 = vadd.f32 0.0, %v266
    %v268 = vpop.f32.mrb[0].mxu0
    %269 = vmatprep.mubr.f32.mxu0 %v46
    %270 = vmatmul.mubr.f32.gmra.mrb[0].mxu0 %v45
    %v271 = vpop.f32.mrb[0].mxu0
    %v272 = vadd.f32 0.0, %v271
    %v273 = vpop.f32.mrb[0].mxu0
    %274 = vmatprep.mubr.f32.mxu0 %v51
    %275 = vmatmul.mubr.f32.gmra.mrb[0].mxu0 %v50
    %v276 = vpop.f32.mrb[0].mxu0
    %v277 = vadd.f32 0.0, %v276
    %v278 = vpop.f32.mrb[0].mxu0
    %279 = vmatprep.mubr.f32.mxu0 %v56
    %280 = vmatmul.mubr.f32.gmra.mrb[0].mxu0 %v55
    %v281 = vpop.f32.mrb[0].mxu0
    %v282 = vadd.f32 0.0, %v281
    %v283 = vpop.f32.mrb[0].mxu0
    %284 = vmatprep.mubr.f32.mxu0 %v61
    %285 = vmatmul.mubr.f32.gmra.mrb[0].mxu0 %v60
    %v286 = vpop.f32.mrb[0].mxu0
    %v287 = vadd.f32 0.0, %v286
    %v288 = vpop.f32.mrb[0].mxu0
    %289 = vmatprep.mubr.f32.mxu0 %v66
    %290 = vmatmul.mubr.f32.gmra.mrb[0].mxu0 %v65
    %v291 = vpop.f32.mrb[0].mxu0
    %v292 = vadd.f32 0.0, %v291
    %v293 = vpop.f32.mrb[0].mxu0
    %294 = vmatprep.mubr.f32.mxu0 %v71
    %295 = vmatmul.mubr.f32.gmra.mrb[0].mxu0 %v70
    %v296 = vpop.f32.mrb[0].mxu0
    %v297 = vadd.f32 0.0, %v296
    %v298 = vpop.f32.mrb[0].mxu0
    %299 = vmatprep.mubr.f32.mxu0 %v76
    %300 = vmatmul.mubr.f32.gmra.mrb[0].mxu0 %v75
    %v301 = vpop.f32.mrb[0].mxu0
    %v302 = vadd.f32 0.0, %v301
    %v303 = vpop.f32.mrb[0].mxu0
    %304 = vmatprep.mubr.f32.mxu0 %v81
    %305 = vmatmul.mubr.f32.gmra.mrb[0].mxu0 %v80
    %v306 = vpop.f32.mrb[0].mxu0
    %v307 = vadd.f32 0.0, %v306
    %v308 = vpop.f32.mrb[0].mxu0
    %309 = vmatprep.mubr.f32.mxu0 %v86
    %310 = vmatmul.mubr.f32.gmra.mrb[0].mxu0 %v85
    %v311 = vpop.f32.mrb[0].mxu0
    %v312 = vadd.f32 0.0, %v311
    %v313 = vpop.f32.mrb[0].mxu0
    %314 = vmatprep.mubr.f32.mxu0 %v91
    %315 = vmatmul.mubr.f32.gmra.mrb[0].mxu0 %v90
    %v316 = vpop.f32.mrb[0].mxu0
    %v317 = vadd.f32 0.0, %v316
    %v318 = vpop.f32.mrb[0].mxu0
    %319 = vdwg.mxu0
    %320 = vmatprep.subr.mxu0 0.0
    %321 = vmatpush1.msra.mxu0 %v127
    %322 = vmatprep.subr.mxu0 0.0
    %323 = vmatpush1.msra.mxu0 %v128
    %324 = vmatprep.subr.mxu0 0.0
    %325 = vmatpush1.msra.mxu0 %v129
    %326 = vmatprep.subr.mxu0 0.0
    %327 = vmatpush1.msra.mxu0 %v130
    %328 = vmatprep.subr.mxu0 0.0
    %329 = vmatpush1.msra.mxu0 %v131
    %330 = vmatprep.subr.mxu0 0.0
    %331 = vmatpush1.msra.mxu0 %v132
    %332 = vmatprep.subr.mxu0 0.0
    %333 = vmatpush1.msra.mxu0 %v133
    %334 = vmatprep.subr.mxu0 0.0
    %335 = vmatpush1.msra.mxu0 %v134
    %336 = vmatprep.subr.mxu0 0.0
    %337 = vmatpush1.msra.mxu0 %v135
    %338 = vmatprep.subr.mxu0 0.0
    %339 = vmatpush1.msra.mxu0 %v136
    %340 = vmatprep.subr.mxu0 0.0
    %341 = vmatpush1.msra.mxu0 %v137
    %342 = vmatprep.subr.mxu0 0.0
    %343 = vmatpush1.msra.mxu0 %v138
    %344 = vmatprep.subr.mxu0 0.0
    %345 = vmatpush1.msra.mxu0 %v139
    %346 = vmatprep.subr.mxu0 0.0
    %347 = vmatpush1.msra.mxu0 %v140
    %348 = vmatprep.subr.mxu0 0.0
    %349 = vmatpush1.msra.mxu0 %v141
    %350 = vmatprep.subr.mxu0 0.0
    %351 = vmatpush1.msra.mxu0 %v142
    %352 = vmatprep.subr.mxu0 0.0
    %353 = vmatpush1.msra.mxu0 %v143
    %354 = vmatprep.subr.mxu0 0.0
    %355 = vmatpush1.msra.mxu0 %v144
    %356 = vmatprep.subr.mxu0 0.0
    %357 = vmatpush1.msra.mxu0 %v145
    %358 = vmatprep.subr.mxu0 0.0
    %359 = vmatpush1.msra.mxu0 %v146
    %360 = vmatprep.subr.mxu0 0.0
    %361 = vmatpush1.msra.mxu0 %v147
    %362 = vmatprep.subr.mxu0 0.0
    %363 = vmatpush1.msra.mxu0 %v148
    %364 = vmatprep.subr.mxu0 0.0
    %365 = vmatpush1.msra.mxu0 %v149
    %366 = vmatprep.subr.mxu0 0.0
    %367 = vmatpush1.msra.mxu0 %v150
    %368 = vmatprep.subr.mxu0 0.0
    %369 = vmatpush1.msra.mxu0 %v151
    %370 = vmatprep.subr.mxu0 0.0
    %371 = vmatpush1.msra.mxu0 %v152
    %372 = vmatprep.subr.mxu0 0.0
    %373 = vmatpush1.msra.mxu0 %v153
    %374 = vmatprep.subr.mxu0 0.0
    %375 = vmatpush1.msra.mxu0 %v154
    %376 = vmatprep.subr.mxu0 0.0
    %377 = vmatpush1.msra.mxu0 %v155
    %378 = vmatprep.subr.mxu0 0.0
    %379 = vmatpush1.msra.mxu0 %v156
    %380 = vmatprep.subr.mxu0 0.0
    %381 = vmatpush1.msra.mxu0 %v157
    %382 = vmatprep.subr.mxu0 0.0
    %383 = vmatpush1.msra.mxu0 %v158
    %384 = vmatprep.mubr.f32.mxu0 %v18
    %385 = vmatmul.mubr.f32.gmra.mrb[0].mxu0 %v17
    %v386 = vpop.f32.mrb[0].mxu0
    %v387 = vadd.f32 %v242, %v386
    %v388 = vpop.f32.mrb[0].mxu0
    %389 = vmatprep.mubr.f32.mxu0 %v23
    %390 = vmatmul.mubr.f32.gmra.mrb[0].mxu0 %v22
    %v391 = vpop.f32.mrb[0].mxu0
    %v392 = vadd.f32 %v247, %v391
    %v393 = vpop.f32.mrb[0].mxu0
    %394 = vmatprep.mubr.f32.mxu0 %v28
    %395 = vmatmul.mubr.f32.gmra.mrb[0].mxu0 %v27
    %v396 = vpop.f32.mrb[0].mxu0
    %v397 = vadd.f32 %v252, %v396
    %v398 = vpop.f32.mrb[0].mxu0
    %399 = vmatprep.mubr.f32.mxu0 %v33
    %400 = vmatmul.mubr.f32.gmra.mrb[0].mxu0 %v32
    %v401 = vpop.f32.mrb[0].mxu0
    %v402 = vadd.f32 %v257, %v401
    %v403 = vpop.f32.mrb[0].mxu0
    %404 = vmatprep.mubr.f32.mxu0 %v38
    %405 = vmatmul.mubr.f32.gmra.mrb[0].mxu0 %v37
    %v406 = vpop.f32.mrb[0].mxu0
    %v407 = vadd.f32 %v262, %v406
    %v408 = vpop.f32.mrb[0].mxu0
    %409 = vmatprep.mubr.f32.mxu0 %v43
    %410 = vmatmul.mubr.f32.gmra.mrb[0].mxu0 %v42
    %v411 = vpop.f32.mrb[0].mxu0
    %v412 = vadd.f32 %v267, %v411
    %v413 = vpop.f32.mrb[0].mxu0
    %414 = vmatprep.mubr.f32.mxu0 %v48
    %415 = vmatmul.mubr.f32.gmra.mrb[0].mxu0 %v47
    %v416 = vpop.f32.mrb[0].mxu0
    %v417 = vadd.f32 %v272, %v416
    %v418 = vpop.f32.mrb[0].mxu0
    %419 = vmatprep.mubr.f32.mxu0 %v53
    %420 = vmatmul.mubr.f32.gmra.mrb[0].mxu0 %v52
    %v421 = vpop.f32.mrb[0].mxu0
    %v422 = vadd.f32 %v277, %v421
    %v423 = vpop.f32.mrb[0].mxu0
    %424 = vmatprep.mubr.f32.mxu0 %v58
    %425 = vmatmul.mubr.f32.gmra.mrb[0].mxu0 %v57
    %v426 = vpop.f32.mrb[0].mxu0
    %v427 = vadd.f32 %v282, %v426
    %v428 = vpop.f32.mrb[0].mxu0
    %429 = vmatprep.mubr.f32.mxu0 %v63
    %430 = vmatmul.mubr.f32.gmra.mrb[0].mxu0 %v62
    %v431 = vpop.f32.mrb[0].mxu0
    %v432 = vadd.f32 %v287, %v431
    %v433 = vpop.f32.mrb[0].mxu0
    %434 = vmatprep.mubr.f32.mxu0 %v68
    %435 = vmatmul.mubr.f32.gmra.mrb[0].mxu0 %v67
    %v436 = vpop.f32.mrb[0].mxu0
    %v437 = vadd.f32 %v292, %v436
    %v438 = vpop.f32.mrb[0].mxu0
    %439 = vmatprep.mubr.f32.mxu0 %v73
    %440 = vmatmul.mubr.f32.gmra.mrb[0].mxu0 %v72
    %v441 = vpop.f32.mrb[0].mxu0
    %v442 = vadd.f32 %v297, %v441
    %v443 = vpop.f32.mrb[0].mxu0
    %444 = vmatprep.mubr.f32.mxu0 %v78
    %445 = vmatmul.mubr.f32.gmra.mrb[0].mxu0 %v77
    %v446 = vpop.f32.mrb[0].mxu0
    %v447 = vadd.f32 %v302, %v446
    %v448 = vpop.f32.mrb[0].mxu0
    %449 = vmatprep.mubr.f32.mxu0 %v83
    %450 = vmatmul.mubr.f32.gmra.mrb[0].mxu0 %v82
    %v451 = vpop.f32.mrb[0].mxu0
    %v452 = vadd.f32 %v307, %v451
    %v453 = vpop.f32.mrb[0].mxu0
    %454 = vmatprep.mubr.f32.mxu0 %v88
    %455 = vmatmul.mubr.f32.gmra.mrb[0].mxu0 %v87
    %v456 = vpop.f32.mrb[0].mxu0
    %v457 = vadd.f32 %v312, %v456
    %v458 = vpop.f32.mrb[0].mxu0
    %459 = vmatprep.mubr.f32.mxu0 %v93
    %460 = vmatmul.mubr.f32.gmra.mrb[0].mxu0 %v92
    %v461 = vpop.f32.mrb[0].mxu0
    %v462 = vadd.f32 %v317, %v461
    %v463 = vpop.f32.mrb[0].mxu0
    %464 = vdwg.mxu0
    %465 = vmatprep.subr.mxu0 0.0
    %466 = vmatpush1.msra.mxu0 %v159
    %467 = vmatprep.subr.mxu0 0.0
    %468 = vmatpush1.msra.mxu0 %v160
    %469 = vmatprep.subr.mxu0 0.0
    %470 = vmatpush1.msra.mxu0 %v161
    %471 = vmatprep.subr.mxu0 0.0
    %472 = vmatpush1.msra.mxu0 %v162
    %473 = vmatprep.subr.mxu0 0.0
    %474 = vmatpush1.msra.mxu0 %v163
    %475 = vmatprep.subr.mxu0 0.0
    %476 = vmatpush1.msra.mxu0 %v164
    %477 = vmatprep.subr.mxu0 0.0
    %478 = vmatpush1.msra.mxu0 %v165
    %479 = vmatprep.subr.mxu0 0.0
    %480 = vmatpush1.msra.mxu0 %v166
    %481 = vmatprep.subr.mxu0 0.0
    %482 = vmatpush1.msra.mxu0 %v167
    %483 = vmatprep.subr.mxu0 0.0
    %484 = vmatpush1.msra.mxu0 %v168
    %485 = vmatprep.subr.mxu0 0.0
    %486 = vmatpush1.msra.mxu0 %v169
    %487 = vmatprep.subr.mxu0 0.0
    %488 = vmatpush1.msra.mxu0 %v170
    %489 = vmatprep.subr.mxu0 0.0
    %490 = vmatpush1.msra.mxu0 %v171
    %491 = vmatprep.subr.mxu0 0.0
    %492 = vmatpush1.msra.mxu0 %v172
    %493 = vmatprep.subr.mxu0 0.0
    %494 = vmatpush1.msra.mxu0 %v173
    %495 = vmatprep.subr.mxu0 0.0
    %496 = vmatpush1.msra.mxu0 %v174
    %497 = vmatprep.subr.mxu0 0.0
    %498 = vmatpush1.msra.mxu0 0.0
    %499 = vmatprep.subr.mxu0 0.0
    %500 = vmatpush1.msra.mxu0 0.0
    %501 = vmatprep.subr.mxu0 0.0
    %502 = vmatpush1.msra.mxu0 0.0
    %503 = vmatprep.subr.mxu0 0.0
    %504 = vmatpush1.msra.mxu0 0.0
    %505 = vmatprep.subr.mxu0 0.0
    %506 = vmatpush1.msra.mxu0 0.0
    %507 = vmatprep.subr.mxu0 0.0
    %508 = vmatpush1.msra.mxu0 0.0
    %509 = vmatprep.subr.mxu0 0.0
    %510 = vmatpush1.msra.mxu0 0.0
    %511 = vmatprep.subr.mxu0 0.0
    %512 = vmatpush1.msra.mxu0 0.0
    %513 = vmatprep.subr.mxu0 0.0
    %514 = vmatpush1.msra.mxu0 0.0
    %515 = vmatprep.subr.mxu0 0.0
    %516 = vmatpush1.msra.mxu0 0.0
    %517 = vmatprep.subr.mxu0 0.0
    %518 = vmatpush1.msra.mxu0 0.0
    %519 = vmatprep.subr.mxu0 0.0
    %520 = vmatpush1.msra.mxu0 0.0
    %521 = vmatprep.subr.mxu0 0.0
    %522 = vmatpush1.msra.mxu0 0.0
    %523 = vmatprep.subr.mxu0 0.0
    %524 = vmatpush1.msra.mxu0 0.0
    %525 = vmatprep.subr.mxu0 0.0
    %526 = vmatpush1.msra.mxu0 0.0
    %527 = vmatprep.subr.mxu0 0.0
    %528 = vmatpush1.msra.mxu0 0.0
    %529 = vmatprep.mubr.f32.mxu0 0.0
    %530 = vmatmul.mubr.f32.gmra.mrb[0].mxu0 %v19
    %v531 = vpop.f32.mrb[0].mxu0
    %v532 = vadd.f32 %v387, %v531
    %v533 = vpop.f32.mrb[0].mxu0
    %534 = vmatprep.mubr.f32.mxu0 0.0
    %535 = vmatmul.mubr.f32.gmra.mrb[0].mxu0 %v24
    %v536 = vpop.f32.mrb[0].mxu0
    %v537 = vadd.f32 %v392, %v536
    %v538 = vpop.f32.mrb[0].mxu0
    %539 = vmatprep.mubr.f32.mxu0 0.0
    %540 = vmatmul.mubr.f32.gmra.mrb[0].mxu0 %v29
    %v541 = vpop.f32.mrb[0].mxu0
    %v542 = vadd.f32 %v397, %v541
    %v543 = vpop.f32.mrb[0].mxu0
    %544 = vmatprep.mubr.f32.mxu0 0.0
    %545 = vmatmul.mubr.f32.gmra.mrb[0].mxu0 %v34
    %v546 = vpop.f32.mrb[0].mxu0
    %v547 = vadd.f32 %v402, %v546
    %v548 = vpop.f32.mrb[0].mxu0
    %549 = vmatprep.mubr.f32.mxu0 0.0
    %550 = vmatmul.mubr.f32.gmra.mrb[0].mxu0 %v39
    %v551 = vpop.f32.mrb[0].mxu0
    %v552 = vadd.f32 %v407, %v551
    %v553 = vpop.f32.mrb[0].mxu0
    %554 = vmatprep.mubr.f32.mxu0 0.0
    %555 = vmatmul.mubr.f32.gmra.mrb[0].mxu0 %v44
    %v556 = vpop.f32.mrb[0].mxu0
    %v557 = vadd.f32 %v412, %v556
    %v558 = vpop.f32.mrb[0].mxu0
    %559 = vmatprep.mubr.f32.mxu0 0.0
    %560 = vmatmul.mubr.f32.gmra.mrb[0].mxu0 %v49
    %v561 = vpop.f32.mrb[0].mxu0
    %v562 = vadd.f32 %v417, %v561
    %v563 = vpop.f32.mrb[0].mxu0
    %564 = vmatprep.mubr.f32.mxu0 0.0
    %565 = vmatmul.mubr.f32.gmra.mrb[0].mxu0 %v54
    %v566 = vpop.f32.mrb[0].mxu0
    %v567 = vadd.f32 %v422, %v566
    %v568 = vpop.f32.mrb[0].mxu0
    %569 = vmatprep.mubr.f32.mxu0 0.0
    %570 = vmatmul.mubr.f32.gmra.mrb[0].mxu0 %v59
    %v571 = vpop.f32.mrb[0].mxu0
    %v572 = vadd.f32 %v427, %v571
    %v573 = vpop.f32.mrb[0].mxu0
    %574 = vmatprep.mubr.f32.mxu0 0.0
    %575 = vmatmul.mubr.f32.gmra.mrb[0].mxu0 %v64
    %v576 = vpop.f32.mrb[0].mxu0
    %v577 = vadd.f32 %v432, %v576
    %v578 = vpop.f32.mrb[0].mxu0
    %579 = vmatprep.mubr.f32.mxu0 0.0
    %580 = vmatmul.mubr.f32.gmra.mrb[0].mxu0 %v69
    %v581 = vpop.f32.mrb[0].mxu0
    %v582 = vadd.f32 %v437, %v581
    %v583 = vpop.f32.mrb[0].mxu0
    %584 = vmatprep.mubr.f32.mxu0 0.0
    %585 = vmatmul.mubr.f32.gmra.mrb[0].mxu0 %v74
    %v586 = vpop.f32.mrb[0].mxu0
    %v587 = vadd.f32 %v442, %v586
    %v588 = vpop.f32.mrb[0].mxu0
    %589 = vmatprep.mubr.f32.mxu0 0.0
    %590 = vmatmul.mubr.f32.gmra.mrb[0].mxu0 %v79
    %v591 = vpop.f32.mrb[0].mxu0
    %v592 = vadd.f32 %v447, %v591
    %v593 = vpop.f32.mrb[0].mxu0
    %594 = vmatprep.mubr.f32.mxu0 0.0
    %595 = vmatmul.mubr.f32.gmra.mrb[0].mxu0 %v84
    %v596 = vpop.f32.mrb[0].mxu0
    %v597 = vadd.f32 %v452, %v596
    %v598 = vpop.f32.mrb[0].mxu0
    %599 = vmatprep.mubr.f32.mxu0 0.0
    %600 = vmatmul.mubr.f32.gmra.mrb[0].mxu0 %v89
    %v601 = vpop.f32.mrb[0].mxu0
    %v602 = vadd.f32 %v457, %v601
    %v603 = vpop.f32.mrb[0].mxu0
    %604 = vmatprep.mubr.f32.mxu0 0.0
    %605 = vmatmul.mubr.f32.gmra.mrb[0].mxu0 %v94
    %v606 = vpop.f32.mrb[0].mxu0
    %v607 = vadd.f32 %v462, %v606
    %v608 = vpop.f32.mrb[0].mxu0
    %609 = vdwg.mxu0
    %v610 = vmin.f32 %v532, 1.0
    %v611 = vmin.f32 %v537, 1.0
    %v612 = vmin.f32 %v542, 1.0
    %v613 = vmin.f32 %v547, 1.0
    %v614 = vmin.f32 %v552, 1.0
    %v615 = vmin.f32 %v557, 1.0
    %v616 = vmin.f32 %v562, 1.0
    %v617 = vmin.f32 %v567, 1.0
    %v618 = vmin.f32 %v572, 1.0
    %v619 = vmin.f32 %v577, 1.0
    %v620 = vmin.f32 %v582, 1.0
    %v621 = vmin.f32 %v587, 1.0
    %v622 = vmin.f32 %v592, 1.0
    %v623 = vmin.f32 %v597, 1.0
    %v624 = vmin.f32 %v602, 1.0
    %v625 = vmin.f32 %v607, 1.0
    %626 = vxpose.xlu0.b32.start [1/16] %v610, 128
    %627 = vxpose.xlu0.b32.cont [2/16] %v611, 128
    %628 = vxpose.xlu0.b32.cont [3/16] %v612, 128
    %629 = vxpose.xlu0.b32.cont [4/16] %v613, 128
    %630 = vxpose.xlu0.b32.cont [5/16] %v614, 128
    %631 = vxpose.xlu0.b32.cont [6/16] %v615, 128
    %632 = vxpose.xlu0.b32.cont [7/16] %v616, 128
    %633 = vxpose.xlu0.b32.cont [8/16] %v617, 128
    %634 = vxpose.xlu0.b32.cont [9/16] %v618, 128
    %635 = vxpose.xlu0.b32.cont [10/16] %v619, 128
    %636 = vxpose.xlu0.b32.cont [11/16] %v620, 128
    %637 = vxpose.xlu0.b32.cont [12/16] %v621, 128
    %638 = vxpose.xlu0.b32.cont [13/16] %v622, 128
    %639 = vxpose.xlu0.b32.cont [14/16] %v623, 128
    %640 = vxpose.xlu0.b32.cont [15/16] %v624, 128
    %641 = vxpose.xlu0.b32.end [16/16] %v625, 128
    %v642 = vpop.trf.xlu0
    %v643 = vpop.trf.xlu0
    %v644 = vpop.trf.xlu0
    %v645 = vpop.trf.xlu0
    %v646 = vpop.trf.xlu0
    %v647 = vpop.trf.xlu0
    %v648 = vpop.trf.xlu0
    %v649 = vpop.trf.xlu0
    %v650 = vpop.trf.xlu0
    %v651 = vpop.trf.xlu0
    %v652 = vpop.trf.xlu0
    %v653 = vpop.trf.xlu0
    %v654 = vpop.trf.xlu0
    %v655 = vpop.trf.xlu0
    %v656 = vpop.trf.xlu0
    %v657 = vpop.trf.xlu0
    %v658 = vmax.f32 %v610, %v642
    %v659 = vmax.f32 %v611, %v643
    %v660 = vmax.f32 %v612, %v644
    %v661 = vmax.f32 %v613, %v645
    %v662 = vmax.f32 %v614, %v646
    %v663 = vmax.f32 %v615, %v647
    %v664 = vmax.f32 %v616, %v648
    %v665 = vmax.f32 %v617, %v649
    %v666 = vmax.f32 %v618, %v650
    %v667 = vmax.f32 %v619, %v651
    %v668 = vmax.f32 %v620, %v652
    %v669 = vmax.f32 %v621, %v653
    %v670 = vmax.f32 %v622, %v654
    %v671 = vmax.f32 %v623, %v655
    %v672 = vmax.f32 %v624, %v656
    %v673 = vmax.f32 %v625, %v657
    %v674 = vlaneseq
    %v675 = vshrl.u32 %v674, 7
    %v676 = vadd.s32 %v675, 8
    %v677 = vadd.s32 %v675, 16
    %v678 = vadd.s32 %v675, 24
    %v679 = vadd.s32 %v675, 32
    %v680 = vadd.s32 %v675, 40
    %v681 = vadd.s32 %v675, 48
    %v682 = vadd.s32 %v675, 56
    %v683 = vadd.s32 %v675, 64
    %v684 = vadd.s32 %v675, 72
    %v685 = vadd.s32 %v675, 80
    %v686 = vadd.s32 %v675, 88
    %v687 = vadd.s32 %v675, 96
    %v688 = vadd.s32 %v675, 104
    %v689 = vadd.s32 %v675, 112
    %v690 = vadd.s32 %v675, 120
    %v691 = vlaneseq
    %v692 = vand.u32 %v691, 127
    %vm693 = vcmp.eq.s32.totalorder %v675, %v692
    %vm694 = vcmp.eq.s32.totalorder %v676, %v692
    %vm695 = vcmp.eq.s32.totalorder %v677, %v692
    %vm696 = vcmp.eq.s32.totalorder %v678, %v692
    %vm697 = vcmp.eq.s32.totalorder %v679, %v692
    %vm698 = vcmp.eq.s32.totalorder %v680, %v692
    %vm699 = vcmp.eq.s32.totalorder %v681, %v692
    %vm700 = vcmp.eq.s32.totalorder %v682, %v692
    %vm701 = vcmp.eq.s32.totalorder %v683, %v692
    %vm702 = vcmp.eq.s32.totalorder %v684, %v692
    %vm703 = vcmp.eq.s32.totalorder %v685, %v692
    %vm704 = vcmp.eq.s32.totalorder %v686, %v692
    %vm705 = vcmp.eq.s32.totalorder %v687, %v692
    %vm706 = vcmp.eq.s32.totalorder %v688, %v692
    %vm707 = vcmp.eq.s32.totalorder %v689, %v692
    %vm708 = vcmp.eq.s32.totalorder %v690, %v692
    %v709 = vsel %vm693, 0.0, %v658
    %v710 = vsel %vm694, 0.0, %v659
    %v711 = vsel %vm695, 0.0, %v660
    %v712 = vsel %vm696, 0.0, %v661
    %v713 = vsel %vm697, 0.0, %v662
    %v714 = vsel %vm698, 0.0, %v663
    %v715 = vsel %vm699, 0.0, %v664
    %v716 = vsel %vm700, 0.0, %v665
    %v717 = vsel %vm701, 0.0, %v666
    %v718 = vsel %vm702, 0.0, %v667
    %v719 = vsel %vm703, 0.0, %v668
    %v720 = vsel %vm704, 0.0, %v669
    %v721 = vsel %vm705, 0.0, %v670
    %v722 = vsel %vm706, 0.0, %v671
    %v723 = vsel %vm707, 0.0, %v672
    %v724 = vsel %vm708, 0.0, %v673
    %725 = vmatprep.subr.mxu0 0.0
    %726 = vmatpush1.msra.mxu0 1.0
    %727 = vmatprep.subr.mxu0 0.0
    %728 = vmatpush1.msra.mxu0 1.0
    %729 = vmatprep.subr.mxu0 0.0
    %730 = vmatpush1.msra.mxu0 1.0
    %731 = vmatprep.subr.mxu0 0.0
    %732 = vmatpush1.msra.mxu0 1.0
    %733 = vmatprep.subr.mxu0 0.0
    %734 = vmatpush1.msra.mxu0 1.0
    %735 = vmatprep.subr.mxu0 0.0
    %736 = vmatpush1.msra.mxu0 1.0
    %737 = vmatprep.subr.mxu0 0.0
    %738 = vmatpush1.msra.mxu0 1.0
    %739 = vmatprep.subr.mxu0 0.0
    %740 = vmatpush1.msra.mxu0 1.0
    %741 = vmatprep.subr.mxu0 0.0
    %742 = vmatpush1.msra.mxu0 1.0
    %743 = vmatprep.subr.mxu0 0.0
    %744 = vmatpush1.msra.mxu0 1.0
    %745 = vmatprep.subr.mxu0 0.0
    %746 = vmatpush1.msra.mxu0 1.0
    %747 = vmatprep.subr.mxu0 0.0
    %748 = vmatpush1.msra.mxu0 1.0
    %749 = vmatprep.subr.mxu0 0.0
    %750 = vmatpush1.msra.mxu0 1.0
    %751 = vmatprep.subr.mxu0 0.0
    %752 = vmatpush1.msra.mxu0 1.0
    %753 = vmatprep.subr.mxu0 0.0
    %754 = vmatpush1.msra.mxu0 1.0
    %755 = vmatprep.subr.mxu0 0.0
    %756 = vmatpush1.msra.mxu0 1.0
    %757 = vmatprep.subr.mxu0 0.0
    %758 = vmatpush1.msra.mxu0 0.0
    %759 = vmatprep.subr.mxu0 0.0
    %760 = vmatpush1.msra.mxu0 0.0
    %761 = vmatprep.subr.mxu0 0.0
    %762 = vmatpush1.msra.mxu0 0.0
    %763 = vmatprep.subr.mxu0 0.0
    %764 = vmatpush1.msra.mxu0 0.0
    %765 = vmatprep.subr.mxu0 0.0
    %766 = vmatpush1.msra.mxu0 0.0
    %767 = vmatprep.subr.mxu0 0.0
    %768 = vmatpush1.msra.mxu0 0.0
    %769 = vmatprep.subr.mxu0 0.0
    %770 = vmatpush1.msra.mxu0 0.0
    %771 = vmatprep.subr.mxu0 0.0
    %772 = vmatpush1.msra.mxu0 0.0
    %773 = vmatprep.subr.mxu0 0.0
    %774 = vmatpush1.msra.mxu0 0.0
    %775 = vmatprep.subr.mxu0 0.0
    %776 = vmatpush1.msra.mxu0 0.0
    %777 = vmatprep.subr.mxu0 0.0
    %778 = vmatpush1.msra.mxu0 0.0
    %779 = vmatprep.subr.mxu0 0.0
    %780 = vmatpush1.msra.mxu0 0.0
    %781 = vmatprep.subr.mxu0 0.0
    %782 = vmatpush1.msra.mxu0 0.0
    %783 = vmatprep.subr.mxu0 0.0
    %784 = vmatpush1.msra.mxu0 0.0
    %785 = vmatprep.subr.mxu0 0.0
    %786 = vmatpush1.msra.mxu0 0.0
    %787 = vmatprep.subr.mxu0 0.0
    %788 = vmatpush1.msra.mxu0 0.0
    %789 = vmatprep.mubr.f32.mxu0 0.0
    %790 = vmatmul.mubr.f32.gmra.mrb[0].mxu0 %v709
    %v791 = vpop.f32.mrb[0].mxu0
    %v792 = vadd.f32 0.0, %v791
    %v793 = vpop.f32.mrb[0].mxu0
    %794 = vmatprep.mubr.f32.mxu0 0.0
    %795 = vmatmul.mubr.f32.gmra.mrb[0].mxu0 %v710
    %v796 = vpop.f32.mrb[0].mxu0
    %v797 = vadd.f32 0.0, %v796
    %v798 = vpop.f32.mrb[0].mxu0
    %799 = vmatprep.mubr.f32.mxu0 0.0
    %800 = vmatmul.mubr.f32.gmra.mrb[0].mxu0 %v711
    %v801 = vpop.f32.mrb[0].mxu0
    %v802 = vadd.f32 0.0, %v801
    %v803 = vpop.f32.mrb[0].mxu0
    %804 = vmatprep.mubr.f32.mxu0 0.0
    %805 = vmatmul.mubr.f32.gmra.mrb[0].mxu0 %v712
    %v806 = vpop.f32.mrb[0].mxu0
    %v807 = vadd.f32 0.0, %v806
    %v808 = vpop.f32.mrb[0].mxu0
    %809 = vmatprep.mubr.f32.mxu0 0.0
    %810 = vmatmul.mubr.f32.gmra.mrb[0].mxu0 %v713
    %v811 = vpop.f32.mrb[0].mxu0
    %v812 = vadd.f32 0.0, %v811
    %v813 = vpop.f32.mrb[0].mxu0
    %814 = vmatprep.mubr.f32.mxu0 0.0
    %815 = vmatmul.mubr.f32.gmra.mrb[0].mxu0 %v714
    %v816 = vpop.f32.mrb[0].mxu0
    %v817 = vadd.f32 0.0, %v816
    %v818 = vpop.f32.mrb[0].mxu0
    %819 = vmatprep.mubr.f32.mxu0 0.0
    %820 = vmatmul.mubr.f32.gmra.mrb[0].mxu0 %v715
    %v821 = vpop.f32.mrb[0].mxu0
    %v822 = vadd.f32 0.0, %v821
    %v823 = vpop.f32.mrb[0].mxu0
    %824 = vmatprep.mubr.f32.mxu0 0.0
    %825 = vmatmul.mubr.f32.gmra.mrb[0].mxu0 %v716
    %v826 = vpop.f32.mrb[0].mxu0
    %v827 = vadd.f32 0.0, %v826
    %v828 = vpop.f32.mrb[0].mxu0
    %829 = vmatprep.mubr.f32.mxu0 0.0
    %830 = vmatmul.mubr.f32.gmra.mrb[0].mxu0 %v717
    %v831 = vpop.f32.mrb[0].mxu0
    %v832 = vadd.f32 0.0, %v831
    %v833 = vpop.f32.mrb[0].mxu0
    %834 = vmatprep.mubr.f32.mxu0 0.0
    %835 = vmatmul.mubr.f32.gmra.mrb[0].mxu0 %v718
    %v836 = vpop.f32.mrb[0].mxu0
    %v837 = vadd.f32 0.0, %v836
    %v838 = vpop.f32.mrb[0].mxu0
    %839 = vmatprep.mubr.f32.mxu0 0.0
    %840 = vmatmul.mubr.f32.gmra.mrb[0].mxu0 %v719
    %v841 = vpop.f32.mrb[0].mxu0
    %v842 = vadd.f32 0.0, %v841
    %v843 = vpop.f32.mrb[0].mxu0
    %844 = vmatprep.mubr.f32.mxu0 0.0
    %845 = vmatmul.mubr.f32.gmra.mrb[0].mxu0 %v720
    %v846 = vpop.f32.mrb[0].mxu0
    %v847 = vadd.f32 0.0, %v846
    %v848 = vpop.f32.mrb[0].mxu0
    %849 = vmatprep.mubr.f32.mxu0 0.0
    %850 = vmatmul.mubr.f32.gmra.mrb[0].mxu0 %v721
    %v851 = vpop.f32.mrb[0].mxu0
    %v852 = vadd.f32 0.0, %v851
    %v853 = vpop.f32.mrb[0].mxu0
    %854 = vmatprep.mubr.f32.mxu0 0.0
    %855 = vmatmul.mubr.f32.gmra.mrb[0].mxu0 %v722
    %v856 = vpop.f32.mrb[0].mxu0
    %v857 = vadd.f32 0.0, %v856
    %v858 = vpop.f32.mrb[0].mxu0
    %859 = vmatprep.mubr.f32.mxu0 0.0
    %860 = vmatmul.mubr.f32.gmra.mrb[0].mxu0 %v723
    %v861 = vpop.f32.mrb[0].mxu0
    %v862 = vadd.f32 0.0, %v861
    %v863 = vpop.f32.mrb[0].mxu0
    %864 = vmatprep.mubr.f32.mxu0 0.0
    %865 = vmatmul.mubr.f32.gmra.mrb[0].mxu0 %v724
    %v866 = vpop.f32.mrb[0].mxu0
    %v867 = vadd.f32 0.0, %v866
    %v868 = vpop.f32.mrb[0].mxu0
    %869 = vdwg.mxu0
    %870 = vmatprep.subr.mxu0 0.0
    %871 = vmatpush1.msra.mxu0 %v709
    %872 = vmatprep.subr.mxu0 0.0
    %873 = vmatpush1.msra.mxu0 %v710
    %874 = vmatprep.subr.mxu0 0.0
    %875 = vmatpush1.msra.mxu0 %v711
    %876 = vmatprep.subr.mxu0 0.0
    %877 = vmatpush1.msra.mxu0 %v712
    %878 = vmatprep.subr.mxu0 0.0
    %879 = vmatpush1.msra.mxu0 %v713
    %880 = vmatprep.subr.mxu0 0.0
    %881 = vmatpush1.msra.mxu0 %v714
    %882 = vmatprep.subr.mxu0 0.0
    %883 = vmatpush1.msra.mxu0 %v715
    %884 = vmatprep.subr.mxu0 0.0
    %885 = vmatpush1.msra.mxu0 %v716
    %886 = vmatprep.subr.mxu0 0.0
    %887 = vmatpush1.msra.mxu0 %v717
    %888 = vmatprep.subr.mxu0 0.0
    %889 = vmatpush1.msra.mxu0 %v718
    %890 = vmatprep.subr.mxu0 0.0
    %891 = vmatpush1.msra.mxu0 %v719
    %892 = vmatprep.subr.mxu0 0.0
    %893 = vmatpush1.msra.mxu0 %v720
    %894 = vmatprep.subr.mxu0 0.0
    %895 = vmatpush1.msra.mxu0 %v721
    %896 = vmatprep.subr.mxu0 0.0
    %897 = vmatpush1.msra.mxu0 %v722
    %898 = vmatprep.subr.mxu0 0.0
    %899 = vmatpush1.msra.mxu0 %v723
    %900 = vmatprep.subr.mxu0 0.0
    %901 = vmatpush1.msra.mxu0 %v724
    %902 = vmatprep.subr.mxu0 0.0
    %903 = vmatpush1.msra.mxu0 0.0
    %904 = vmatprep.subr.mxu0 0.0
    %905 = vmatpush1.msra.mxu0 0.0
    %906 = vmatprep.subr.mxu0 0.0
    %907 = vmatpush1.msra.mxu0 0.0
    %908 = vmatprep.subr.mxu0 0.0
    %909 = vmatpush1.msra.mxu0 0.0
    %910 = vmatprep.subr.mxu0 0.0
    %911 = vmatpush1.msra.mxu0 0.0
    %912 = vmatprep.subr.mxu0 0.0
    %913 = vmatpush1.msra.mxu0 0.0
    %914 = vmatprep.subr.mxu0 0.0
    %915 = vmatpush1.msra.mxu0 0.0
    %916 = vmatprep.subr.mxu0 0.0
    %917 = vmatpush1.msra.mxu0 0.0
    %918 = vmatprep.subr.mxu0 0.0
    %919 = vmatpush1.msra.mxu0 0.0
    %920 = vmatprep.subr.mxu0 0.0
    %921 = vmatpush1.msra.mxu0 0.0
    %922 = vmatprep.subr.mxu0 0.0
    %923 = vmatpush1.msra.mxu0 0.0
    %924 = vmatprep.subr.mxu0 0.0
    %925 = vmatpush1.msra.mxu0 0.0
    %926 = vmatprep.subr.mxu0 0.0
    %927 = vmatpush1.msra.mxu0 0.0
    %928 = vmatprep.subr.mxu0 0.0
    %929 = vmatpush1.msra.mxu0 0.0
    %930 = vmatprep.subr.mxu0 0.0
    %931 = vmatpush1.msra.mxu0 0.0
    %932 = vmatprep.subr.mxu0 0.0
    %933 = vmatpush1.msra.mxu0 0.0
    %934 = vmatprep.mubr.f32.mxu0 0.0
    %935 = vmatmul.mubr.f32.gmra.mrb[0].mxu0 1.0
    %v936 = vpop.f32.mrb[0].mxu0
    %v937 = vadd.f32 0.0, %v936
    %v938 = vpop.f32.mrb[0].mxu0
    %939 = vdwg.mxu0
    %v940 = vmax.f32 %v792, 1e-12
    %v941 = vmax.f32 %v797, 1e-12
    %v942 = vmax.f32 %v802, 1e-12
    %v943 = vmax.f32 %v807, 1e-12
    %v944 = vmax.f32 %v812, 1e-12
    %v945 = vmax.f32 %v817, 1e-12
    %v946 = vmax.f32 %v822, 1e-12
    %v947 = vmax.f32 %v827, 1e-12
    %v948 = vmax.f32 %v832, 1e-12
    %v949 = vmax.f32 %v837, 1e-12
    %v950 = vmax.f32 %v842, 1e-12
    %v951 = vmax.f32 %v847, 1e-12
    %v952 = vmax.f32 %v852, 1e-12
    %v953 = vmax.f32 %v857, 1e-12
    %v954 = vmax.f32 %v862, 1e-12
    %v955 = vmax.f32 %v867, 1e-12
    %v956 = vrsqrt.pop %v940
    %v957 = vrsqrt.pop %v941
    %v958 = vrsqrt.pop %v942
    %v959 = vrsqrt.pop %v943
    %v960 = vrsqrt.pop %v944
    %v961 = vrsqrt.pop %v945
    %v962 = vrsqrt.pop %v946
    %v963 = vrsqrt.pop %v947
    %v964 = vrsqrt.pop %v948
    %v965 = vrsqrt.pop %v949
    %v966 = vrsqrt.pop %v950
    %v967 = vrsqrt.pop %v951
    %v968 = vrsqrt.pop %v952
    %v969 = vrsqrt.pop %v953
    %v970 = vrsqrt.pop %v954
    %v971 = vrsqrt.pop %v955
    %v972 = vmax.f32 %v937, 1e-12
    %v973 = vrsqrt.pop %v972
    %975 = vset.pattern.permute.xlu0 0
    %976 = vperm.xlu0 %975, %v956
    %v977 = vpop.permute.xlu0 %976
    %980 = vset.pattern.permute.xlu0 0
    %981 = vperm.xlu0 %980, %v957
    %v982 = vpop.permute.xlu0 %981
    %985 = vset.pattern.permute.xlu0 0
    %986 = vperm.xlu0 %985, %v958
    %v987 = vpop.permute.xlu0 %986
    %990 = vset.pattern.permute.xlu0 0
    %991 = vperm.xlu0 %990, %v959
    %v992 = vpop.permute.xlu0 %991
    %995 = vset.pattern.permute.xlu0 0
    %996 = vperm.xlu0 %995, %v960
    %v997 = vpop.permute.xlu0 %996
    %1000 = vset.pattern.permute.xlu0 0
    %1001 = vperm.xlu0 %1000, %v961
    %v1002 = vpop.permute.xlu0 %1001
    %1005 = vset.pattern.permute.xlu0 0
    %1006 = vperm.xlu0 %1005, %v962
    %v1007 = vpop.permute.xlu0 %1006
    %1010 = vset.pattern.permute.xlu0 0
    %1011 = vperm.xlu0 %1010, %v963
    %v1012 = vpop.permute.xlu0 %1011
    %1015 = vset.pattern.permute.xlu0 0
    %1016 = vperm.xlu0 %1015, %v964
    %v1017 = vpop.permute.xlu0 %1016
    %1020 = vset.pattern.permute.xlu0 0
    %1021 = vperm.xlu0 %1020, %v965
    %v1022 = vpop.permute.xlu0 %1021
    %1025 = vset.pattern.permute.xlu0 0
    %1026 = vperm.xlu0 %1025, %v966
    %v1027 = vpop.permute.xlu0 %1026
    %1030 = vset.pattern.permute.xlu0 0
    %1031 = vperm.xlu0 %1030, %v967
    %v1032 = vpop.permute.xlu0 %1031
    %1035 = vset.pattern.permute.xlu0 0
    %1036 = vperm.xlu0 %1035, %v968
    %v1037 = vpop.permute.xlu0 %1036
    %1040 = vset.pattern.permute.xlu0 0
    %1041 = vperm.xlu0 %1040, %v969
    %v1042 = vpop.permute.xlu0 %1041
    %1045 = vset.pattern.permute.xlu0 0
    %1046 = vperm.xlu0 %1045, %v970
    %v1047 = vpop.permute.xlu0 %1046
    %1050 = vset.pattern.permute.xlu0 0
    %1051 = vperm.xlu0 %1050, %v971
    %v1052 = vpop.permute.xlu0 %1051
    %v1054 = vmul.f32 %v709, %v977
    %v1055 = vmul.f32 %v710, %v982
    %v1056 = vmul.f32 %v711, %v987
    %v1057 = vmul.f32 %v712, %v992
    %v1058 = vmul.f32 %v713, %v997
    %v1059 = vmul.f32 %v714, %v1002
    %v1060 = vmul.f32 %v715, %v1007
    %v1061 = vmul.f32 %v716, %v1012
    %v1062 = vmul.f32 %v717, %v1017
    %v1063 = vmul.f32 %v718, %v1022
    %v1064 = vmul.f32 %v719, %v1027
    %v1065 = vmul.f32 %v720, %v1032
    %v1066 = vmul.f32 %v721, %v1037
    %v1067 = vmul.f32 %v722, %v1042
    %v1068 = vmul.f32 %v723, %v1047
    %v1069 = vmul.f32 %v724, %v1052
    %v1070 = vlaneseq
    %v1071 = vshrl.u32 %v1070, 7
    %v1072 = vsub.s32 0, %v1071
    %v1073 = vrot.slane %v973, %v1072
    %v1074 = vmul.f32 %v1054, %v1073
    %v1075 = vmul.f32 %v1055, %v1073
    %v1076 = vmul.f32 %v1056, %v1073
    %v1077 = vmul.f32 %v1057, %v1073
    %v1078 = vmul.f32 %v1058, %v1073
    %v1079 = vmul.f32 %v1059, %v1073
    %v1080 = vmul.f32 %v1060, %v1073
    %v1081 = vmul.f32 %v1061, %v1073
    %v1082 = vmul.f32 %v1062, %v1073
    %v1083 = vmul.f32 %v1063, %v1073
    %v1084 = vmul.f32 %v1064, %v1073
    %v1085 = vmul.f32 %v1065, %v1073
    %v1086 = vmul.f32 %v1066, %v1073
    %v1087 = vmul.f32 %v1067, %v1073
    %v1088 = vmul.f32 %v1068, %v1073
    %v1089 = vmul.f32 %v1069, %v1073
    %v1090 = vadd.f32 %v1074, 1.0
    %v1091 = vadd.f32 %v1075, 1.0
    %v1092 = vadd.f32 %v1076, 1.0
    %v1093 = vadd.f32 %v1077, 1.0
    %v1094 = vadd.f32 %v1078, 1.0
    %v1095 = vadd.f32 %v1079, 1.0
    %v1096 = vadd.f32 %v1080, 1.0
    %v1097 = vadd.f32 %v1081, 1.0
    %v1098 = vadd.f32 %v1082, 1.0
    %v1099 = vadd.f32 %v1083, 1.0
    %v1100 = vadd.f32 %v1084, 1.0
    %v1101 = vadd.f32 %v1085, 1.0
    %v1102 = vadd.f32 %v1086, 1.0
    %v1103 = vadd.f32 %v1087, 1.0
    %v1104 = vadd.f32 %v1088, 1.0
    %v1105 = vadd.f32 %v1089, 1.0
    %v1106 = vsel %vm693, %v1090, %v1074
    %v1107 = vsel %vm694, %v1091, %v1075
    %v1108 = vsel %vm695, %v1092, %v1076
    %v1109 = vsel %vm696, %v1093, %v1077
    %v1110 = vsel %vm697, %v1094, %v1078
    %v1111 = vsel %vm698, %v1095, %v1079
    %v1112 = vsel %vm699, %v1096, %v1080
    %v1113 = vsel %vm700, %v1097, %v1081
    %v1114 = vsel %vm701, %v1098, %v1082
    %v1115 = vsel %vm702, %v1099, %v1083
    %v1116 = vsel %vm703, %v1100, %v1084
    %v1117 = vsel %vm704, %v1101, %v1085
    %v1118 = vsel %vm705, %v1102, %v1086
    %v1119 = vsel %vm706, %v1103, %v1087
    %v1120 = vsel %vm707, %v1104, %v1088
    %v1121 = vsel %vm708, %v1105, %v1089
    %v1122 = vld [vmem:[%s2] sm:$0xff]
    %v1123 = vlaneseq
    %v1124 = vshrl.u32 %v1123, 7
    %v1125 = vsub.s32 0, %v1124
    %v1126 = vrot.slane %v1122, %v1125
    %v1127 = vmul.f32 %v1126, 0.0
    %1128 = vadd.xlane.f32.xlu0 %v1127
    %v1129 = vpop.xlane.xlu0 %1128
    %v1130 = vmul.f32 %v1129, 0.0
    %v1131 = vrot.slane %v1130, 4
    %v1132 = vadd.f32 %v1130, %v1131
    %v1133 = vrot.slane %v1132, 2
    %v1134 = vadd.f32 %v1132, %v1133
    %v1135 = vrot.slane %v1134, 1
    %v1136 = vadd.f32 %v1134, %v1135
    %v1137 = vsub.f32 %v1122, %v1136
    %v1138 = vmul.f32 %v1137, %v1137
    %vm1139 = vcmask 1040384
    %v1140 = vsel %vm1139, %v1138, 0.0
    %1141 = vadd.xlane.f32.xlu0 %v1140
    %v1142 = vpop.xlane.xlu0 %1141
    %v1143 = vmax.f32 %v1142, 1e-30
    %v1144 = vrsqrt.pop %v1143
    %v1145 = vmul.f32 %v1137, %v1144
    %vm1146 = vcmp.eq.s32.totalorder %v675, 0
    %v1147 = vsel %vm1146, 1, 0
    %vm1148 = vcmp.eq.s32.totalorder %v1147, 1
    %v1149 = vlaneseq
    %v1150 = vshrl.u32 %v1149, 7
    %v1151 = vsub.s32 0, %v1150
    %v1152 = vrot.slane %v1145, %v1151
    %v1153 = vsel %vm1148, %v1152, 0.0
    %v1154 = vadd.f32 %v1153, 0.0
    %v1155 = vlaneseq
    %v1156 = vshrl.u32 %v1155, 7
    %v1157 = vsub.s32 1, %v1156
    %v1158 = vrot.slane %v1122, %v1157
    %v1159 = vmul.f32 %v1154, %v1158
    %1160 = vadd.xlane.f32.xlu0 %v1159
    %v1161 = vpop.xlane.xlu0 %1160
    %v1162 = vmul.f32 %v1161, %v1154
    %v1163 = vrot.slane %v1162, 4
    %v1164 = vadd.f32 %v1162, %v1163
    %v1165 = vrot.slane %v1164, 2
    %v1166 = vadd.f32 %v1164, %v1165
    %v1167 = vrot.slane %v1166, 1
    %v1168 = vadd.f32 %v1166, %v1167
    %v1169 = vsub.f32 %v1122, %v1168
    %v1170 = vmul.f32 %v1169, %v1169
    %vm1171 = vcmask 1041409
    %v1172 = vsel %vm1171, %v1170, 0.0
    %1173 = vadd.xlane.f32.xlu0 %v1172
    %v1174 = vpop.xlane.xlu0 %1173
    %v1175 = vmax.f32 %v1174, 1e-30
    %v1176 = vrsqrt.pop %v1175
    %v1177 = vmul.f32 %v1169, %v1176
    %vm1178 = vcmp.eq.s32.totalorder %v675, 1
    %v1179 = vsel %vm1178, 1, 0
    %vm1180 = vcmp.eq.s32.totalorder %v1179, 1
    %v1181 = vlaneseq
    %v1182 = vshrl.u32 %v1181, 7
    %v1183 = vsub.s32 1, %v1182
    %v1184 = vrot.slane %v1177, %v1183
    %v1185 = vsel %vm1180, %v1184, 0.0
    %v1186 = vadd.f32 %v1154, %v1185
    %v1187 = vlaneseq
    %v1188 = vshrl.u32 %v1187, 7
    %v1189 = vsub.s32 2, %v1188
    %v1190 = vrot.slane %v1122, %v1189
    %v1191 = vmul.f32 %v1186, %v1190
    %1192 = vadd.xlane.f32.xlu0 %v1191
    %v1193 = vpop.xlane.xlu0 %1192
    %v1194 = vmul.f32 %v1193, %v1186
    %v1195 = vrot.slane %v1194, 4
    %v1196 = vadd.f32 %v1194, %v1195
    %v1197 = vrot.slane %v1196, 2
    %v1198 = vadd.f32 %v1196, %v1197
    %v1199 = vrot.slane %v1198, 1
    %v1200 = vadd.f32 %v1198, %v1199
    %v1201 = vsub.f32 %v1122, %v1200
    %v1202 = vmul.f32 %v1201, %v1201
    %vm1203 = vcmask 1042434
    %v1204 = vsel %vm1203, %v1202, 0.0
    %1205 = vadd.xlane.f32.xlu0 %v1204
    %v1206 = vpop.xlane.xlu0 %1205
    %v1207 = vmax.f32 %v1206, 1e-30
    %v1208 = vrsqrt.pop %v1207
    %v1209 = vmul.f32 %v1201, %v1208
    %vm1210 = vcmp.eq.s32.totalorder %v675, 2
    %v1211 = vsel %vm1210, 1, 0
    %vm1212 = vcmp.eq.s32.totalorder %v1211, 1
    %v1213 = vlaneseq
    %v1214 = vshrl.u32 %v1213, 7
    %v1215 = vsub.s32 2, %v1214
    %v1216 = vrot.slane %v1209, %v1215
    %v1217 = vsel %vm1212, %v1216, 0.0
    %v1218 = vadd.f32 %v1186, %v1217
    %v1219 = vlaneseq
    %v1220 = vshrl.u32 %v1219, 7
    %v1221 = vsub.s32 3, %v1220
    %v1222 = vrot.slane %v1122, %v1221
    %v1223 = vmul.f32 %v1218, %v1222
    %1224 = vadd.xlane.f32.xlu0 %v1223
    %v1225 = vpop.xlane.xlu0 %1224
    %v1226 = vmul.f32 %v1225, %v1218
    %v1227 = vrot.slane %v1226, 4
    %v1228 = vadd.f32 %v1226, %v1227
    %v1229 = vrot.slane %v1228, 2
    %v1230 = vadd.f32 %v1228, %v1229
    %v1231 = vrot.slane %v1230, 1
    %v1232 = vadd.f32 %v1230, %v1231
    %v1233 = vsub.f32 %v1122, %v1232
    %v1234 = vmul.f32 %v1233, %v1233
    %vm1235 = vcmask 1043459
    %v1236 = vsel %vm1235, %v1234, 0.0
    %1237 = vadd.xlane.f32.xlu0 %v1236
    %v1238 = vpop.xlane.xlu0 %1237
    %v1239 = vmax.f32 %v1238, 1e-30
    %v1240 = vrsqrt.pop %v1239
    %v1241 = vmul.f32 %v1233, %v1240
    %vm1242 = vcmp.eq.s32.totalorder %v675, 3
    %v1243 = vsel %vm1242, 1, 0
    %vm1244 = vcmp.eq.s32.totalorder %v1243, 1
    %v1245 = vlaneseq
    %v1246 = vshrl.u32 %v1245, 7
    %v1247 = vsub.s32 3, %v1246
    %v1248 = vrot.slane %v1241, %v1247
    %v1249 = vsel %vm1244, %v1248, 0.0
    %v1250 = vadd.f32 %v1218, %v1249
    %v1251 = vlaneseq
    %v1252 = vshrl.u32 %v1251, 7
    %v1253 = vsub.s32 4, %v1252
    %v1254 = vrot.slane %v1122, %v1253
    %v1255 = vmul.f32 %v1250, %v1254
    %1256 = vadd.xlane.f32.xlu0 %v1255
    %v1257 = vpop.xlane.xlu0 %1256
    %v1258 = vmul.f32 %v1257, %v1250
    %v1259 = vrot.slane %v1258, 4
    %v1260 = vadd.f32 %v1258, %v1259
    %v1261 = vrot.slane %v1260, 2
    %v1262 = vadd.f32 %v1260, %v1261
    %v1263 = vrot.slane %v1262, 1
    %v1264 = vadd.f32 %v1262, %v1263
    %v1265 = vsub.f32 %v1122, %v1264
    %v1266 = vmul.f32 %v1265, %v1265
    %vm1267 = vcmask 1044484
    %v1268 = vsel %vm1267, %v1266, 0.0
    %1269 = vadd.xlane.f32.xlu0 %v1268
    %v1270 = vpop.xlane.xlu0 %1269
    %v1271 = vmax.f32 %v1270, 1e-30
    %v1272 = vrsqrt.pop %v1271
    %v1273 = vmul.f32 %v1265, %v1272
    %vm1274 = vcmp.eq.s32.totalorder %v675, 4
    %v1275 = vsel %vm1274, 1, 0
    %vm1276 = vcmp.eq.s32.totalorder %v1275, 1
    %v1277 = vlaneseq
    %v1278 = vshrl.u32 %v1277, 7
    %v1279 = vsub.s32 4, %v1278
    %v1280 = vrot.slane %v1273, %v1279
    %v1281 = vsel %vm1276, %v1280, 0.0
    %v1282 = vadd.f32 %v1250, %v1281
    %v1283 = vlaneseq
    %v1284 = vshrl.u32 %v1283, 7
    %v1285 = vsub.s32 5, %v1284
    %v1286 = vrot.slane %v1122, %v1285
    %v1287 = vmul.f32 %v1282, %v1286
    %1288 = vadd.xlane.f32.xlu0 %v1287
    %v1289 = vpop.xlane.xlu0 %1288
    %v1290 = vmul.f32 %v1289, %v1282
    %v1291 = vrot.slane %v1290, 4
    %v1292 = vadd.f32 %v1290, %v1291
    %v1293 = vrot.slane %v1292, 2
    %v1294 = vadd.f32 %v1292, %v1293
    %v1295 = vrot.slane %v1294, 1
    %v1296 = vadd.f32 %v1294, %v1295
    %v1297 = vsub.f32 %v1122, %v1296
    %v1298 = vmul.f32 %v1297, %v1297
    %vm1299 = vcmask 1045509
    %v1300 = vsel %vm1299, %v1298, 0.0
    %1301 = vadd.xlane.f32.xlu0 %v1300
    %v1302 = vpop.xlane.xlu0 %1301
    %v1303 = vmax.f32 %v1302, 1e-30
    %v1304 = vrsqrt.pop %v1303
    %v1305 = vmul.f32 %v1297, %v1304
    %vm1306 = vcmp.eq.s32.totalorder %v675, 5
    %v1307 = vsel %vm1306, 1, 0
    %vm1308 = vcmp.eq.s32.totalorder %v1307, 1
    %v1309 = vlaneseq
    %v1310 = vshrl.u32 %v1309, 7
    %v1311 = vsub.s32 5, %v1310
    %v1312 = vrot.slane %v1305, %v1311
    %v1313 = vsel %vm1308, %v1312, 0.0
    %v1314 = vadd.f32 %v1282, %v1313
    %v1315 = vlaneseq
    %v1316 = vshrl.u32 %v1315, 7
    %v1317 = vsub.s32 6, %v1316
    %v1318 = vrot.slane %v1122, %v1317
    %v1319 = vmul.f32 %v1314, %v1318
    %1320 = vadd.xlane.f32.xlu0 %v1319
    %v1321 = vpop.xlane.xlu0 %1320
    %v1322 = vmul.f32 %v1321, %v1314
    %v1323 = vrot.slane %v1322, 4
    %v1324 = vadd.f32 %v1322, %v1323
    %v1325 = vrot.slane %v1324, 2
    %v1326 = vadd.f32 %v1324, %v1325
    %v1327 = vrot.slane %v1326, 1
    %v1328 = vadd.f32 %v1326, %v1327
    %v1329 = vsub.f32 %v1122, %v1328
    %v1330 = vmul.f32 %v1329, %v1329
    %vm1331 = vcmask 1046534
    %v1332 = vsel %vm1331, %v1330, 0.0
    %1333 = vadd.xlane.f32.xlu0 %v1332
    %v1334 = vpop.xlane.xlu0 %1333
    %v1335 = vmax.f32 %v1334, 1e-30
    %v1336 = vrsqrt.pop %v1335
    %v1337 = vmul.f32 %v1329, %v1336
    %vm1338 = vcmp.eq.s32.totalorder %v675, 6
    %v1339 = vsel %vm1338, 1, 0
    %vm1340 = vcmp.eq.s32.totalorder %v1339, 1
    %v1341 = vlaneseq
    %v1342 = vshrl.u32 %v1341, 7
    %v1343 = vsub.s32 6, %v1342
    %v1344 = vrot.slane %v1337, %v1343
    %v1345 = vsel %vm1340, %v1344, 0.0
    %v1346 = vadd.f32 %v1314, %v1345
    %v1347 = vlaneseq
    %v1348 = vshrl.u32 %v1347, 7
    %v1349 = vsub.s32 7, %v1348
    %v1350 = vrot.slane %v1122, %v1349
    %v1351 = vmul.f32 %v1346, %v1350
    %1352 = vadd.xlane.f32.xlu0 %v1351
    %v1353 = vpop.xlane.xlu0 %1352
    %v1354 = vmul.f32 %v1353, %v1346
    %v1355 = vrot.slane %v1354, 4
    %v1356 = vadd.f32 %v1354, %v1355
    %v1357 = vrot.slane %v1356, 2
    %v1358 = vadd.f32 %v1356, %v1357
    %v1359 = vrot.slane %v1358, 1
    %v1360 = vadd.f32 %v1358, %v1359
    %v1361 = vsub.f32 %v1122, %v1360
    %v1362 = vmul.f32 %v1361, %v1361
    %vm1363 = vcmask 1047559
    %v1364 = vsel %vm1363, %v1362, 0.0
    %1365 = vadd.xlane.f32.xlu0 %v1364
    %v1366 = vpop.xlane.xlu0 %1365
    %v1367 = vmax.f32 %v1366, 1e-30
    %v1368 = vrsqrt.pop %v1367
    %v1369 = vmul.f32 %v1361, %v1368
    %vm1370 = vcmp.eq.s32.totalorder %v675, 7
    %v1371 = vsel %vm1370, 1, 0
    %vm1372 = vcmp.eq.s32.totalorder %v1371, 1
    %v1373 = vlaneseq
    %v1374 = vshrl.u32 %v1373, 7
    %v1375 = vsub.s32 7, %v1374
    %v1376 = vrot.slane %v1369, %v1375
    %v1377 = vsel %vm1372, %v1376, 0.0
    %v1378 = vadd.f32 %v1346, %v1377
    loop: start=0, step=1, limit=50
    $region14: #{open_spectral_fit_and_forward.1} parent=1 // loop_pre_header
      _
    $region15: #{open_spectral_fit_and_forward.1} parent=1 // loop_header
      %s1380 = sphi 0, %s1384
      %p1381 = scmp.ge.s32.totalorder %s1380, 50
      %v1385 = vphi %v1378, %v1679
    $region16: #{open_spectral_fit_and_forward.1} parent=1 // loop_header_branch
      %1383 = sbr.rel (%p1381) target = $region20
    $region17: #{open_spectral_fit_and_forward.1} parent=1 // loop_body
      %1386 = vmatprep.subr.mxu0 0.0
      %1387 = vmatpush1.msra.mxu0 %v1106
      %1388 = vmatprep.subr.mxu0 0.0
      %1389 = vmatpush1.msra.mxu0 %v1107
      %1390 = vmatprep.subr.mxu0 0.0
      %1391 = vmatpush1.msra.mxu0 %v1108
      %1392 = vmatprep.subr.mxu0 0.0
      %1393 = vmatpush1.msra.mxu0 %v1109
      %1394 = vmatprep.subr.mxu0 0.0
      %1395 = vmatpush1.msra.mxu0 %v1110
      %1396 = vmatprep.subr.mxu0 0.0
      %1397 = vmatpush1.msra.mxu0 %v1111
      %1398 = vmatprep.subr.mxu0 0.0
      %1399 = vmatpush1.msra.mxu0 %v1112
      %1400 = vmatprep.subr.mxu0 0.0
      %1401 = vmatpush1.msra.mxu0 %v1113
      %1402 = vmatprep.subr.mxu0 0.0
      %1403 = vmatpush1.msra.mxu0 %v1114
      %1404 = vmatprep.subr.mxu0 0.0
      %1405 = vmatpush1.msra.mxu0 %v1115
      %1406 = vmatprep.subr.mxu0 0.0
      %1407 = vmatpush1.msra.mxu0 %v1116
      %1408 = vmatprep.subr.mxu0 0.0
      %1409 = vmatpush1.msra.mxu0 %v1117
      %1410 = vmatprep.subr.mxu0 0.0
      %1411 = vmatpush1.msra.mxu0 %v1118
      %1412 = vmatprep.subr.mxu0 0.0
      %1413 = vmatpush1.msra.mxu0 %v1119
      %1414 = vmatprep.subr.mxu0 0.0
      %1415 = vmatpush1.msra.mxu0 %v1120
      %1416 = vmatprep.subr.mxu0 0.0
      %1417 = vmatpush1.msra.mxu0 %v1121
      %1418 = vmatprep.subr.mxu0 0.0
      %1419 = vmatpush1.msra.mxu0 0.0
      %1420 = vmatprep.subr.mxu0 0.0
      %1421 = vmatpush1.msra.mxu0 0.0
      %1422 = vmatprep.subr.mxu0 0.0
      %1423 = vmatpush1.msra.mxu0 0.0
      %1424 = vmatprep.subr.mxu0 0.0
      %1425 = vmatpush1.msra.mxu0 0.0
      %1426 = vmatprep.subr.mxu0 0.0
      %1427 = vmatpush1.msra.mxu0 0.0
      %1428 = vmatprep.subr.mxu0 0.0
      %1429 = vmatpush1.msra.mxu0 0.0
      %1430 = vmatprep.subr.mxu0 0.0
      %1431 = vmatpush1.msra.mxu0 0.0
      %1432 = vmatprep.subr.mxu0 0.0
      %1433 = vmatpush1.msra.mxu0 0.0
      %1434 = vmatprep.subr.mxu0 0.0
      %1435 = vmatpush1.msra.mxu0 0.0
      %1436 = vmatprep.subr.mxu0 0.0
      %1437 = vmatpush1.msra.mxu0 0.0
      %1438 = vmatprep.subr.mxu0 0.0
      %1439 = vmatpush1.msra.mxu0 0.0
      %1440 = vmatprep.subr.mxu0 0.0
      %1441 = vmatpush1.msra.mxu0 0.0
      %1442 = vmatprep.subr.mxu0 0.0
      %1443 = vmatpush1.msra.mxu0 0.0
      %1444 = vmatprep.subr.mxu0 0.0
      %1445 = vmatpush1.msra.mxu0 0.0
      %1446 = vmatprep.subr.mxu0 0.0
      %1447 = vmatpush1.msra.mxu0 0.0
      %1448 = vmatprep.subr.mxu0 0.0
      %1449 = vmatpush1.msra.mxu0 0.0
      %1450 = vmatprep.mubr.f32.mxu0 0.0
      %1451 = vmatmul.mubr.f32.gmra.mrb[0].mxu0 %v1385
      %v1452 = vpop.f32.mrb[0].mxu0
      %v1453 = vadd.f32 0.0, %v1452
      %v1454 = vpop.f32.mrb[0].mxu0
      %1455 = vdwg.mxu0
      %v1456 = vlaneseq
      %v1457 = vshrl.u32 %v1456, 7
      %v1458 = vsub.s32 0, %v1457
      %v1459 = vrot.slane %v1453, %v1458
      %v1460 = vmul.f32 %v1459, 0.0
      %1461 = vadd.xlane.f32.xlu0 %v1460
      %v1462 = vpop.xlane.xlu0 %1461
      %v1463 = vmul.f32 %v1462, 0.0
      %v1464 = vrot.slane %v1463, 4
      %v1465 = vadd.f32 %v1463, %v1464
      %v1466 = vrot.slane %v1465, 2
      %v1467 = vadd.f32 %v1465, %v1466
      %v1468 = vrot.slane %v1467, 1
      %v1469 = vadd.f32 %v1467, %v1468
      %v1470 = vsub.f32 %v1453, %v1469
      %v1471 = vmul.f32 %v1470, %v1470
      %v1472 = vsel %vm1139, %v1471, 0.0
      %1473 = vadd.xlane.f32.xlu0 %v1472
      %v1474 = vpop.xlane.xlu0 %1473
      %v1475 = vmax.f32 %v1474, 1e-30
      %v1476 = vrsqrt.pop %v1475
      %v1477 = vmul.f32 %v1470, %v1476
      %v1478 = vlaneseq
      %v1479 = vshrl.u32 %v1478, 7
      %v1480 = vsub.s32 0, %v1479
      %v1481 = vrot.slane %v1477, %v1480
      %v1482 = vsel %vm1148, %v1481, 0.0
      %v1483 = vadd.f32 %v1482, 0.0
      %v1484 = vlaneseq
      %v1485 = vshrl.u32 %v1484, 7
      %v1486 = vsub.s32 1, %v1485
      %v1487 = vrot.slane %v1453, %v1486
      %v1488 = vmul.f32 %v1483, %v1487
      %1489 = vadd.xlane.f32.xlu0 %v1488
      %v1490 = vpop.xlane.xlu0 %1489
      %v1491 = vmul.f32 %v1490, %v1483
      %v1492 = vrot.slane %v1491, 4
      %v1493 = vadd.f32 %v1491, %v1492
      %v1494 = vrot.slane %v1493, 2
      %v1495 = vadd.f32 %v1493, %v1494
      %v1496 = vrot.slane %v1495, 1
      %v1497 = vadd.f32 %v1495, %v1496
      %v1498 = vsub.f32 %v1453, %v1497
      %v1499 = vmul.f32 %v1498, %v1498
      %v1500 = vsel %vm1171, %v1499, 0.0
      %1501 = vadd.xlane.f32.xlu0 %v1500
      %v1502 = vpop.xlane.xlu0 %1501
      %v1503 = vmax.f32 %v1502, 1e-30
      %v1504 = vrsqrt.pop %v1503
      %v1505 = vmul.f32 %v1498, %v1504
      %v1506 = vlaneseq
      %v1507 = vshrl.u32 %v1506, 7
      %v1508 = vsub.s32 1, %v1507
      %v1509 = vrot.slane %v1505, %v1508
      %v1510 = vsel %vm1180, %v1509, 0.0
      %v1511 = vadd.f32 %v1483, %v1510
      %v1512 = vlaneseq
      %v1513 = vshrl.u32 %v1512, 7
      %v1514 = vsub.s32 2, %v1513
      %v1515 = vrot.slane %v1453, %v1514
      %v1516 = vmul.f32 %v1511, %v1515
      %1517 = vadd.xlane.f32.xlu0 %v1516
      %v1518 = vpop.xlane.xlu0 %1517
      %v1519 = vmul.f32 %v1518, %v1511
      %v1520 = vrot.slane %v1519, 4
      %v1521 = vadd.f32 %v1519, %v1520
      %v1522 = vrot.slane %v1521, 2
      %v1523 = vadd.f32 %v1521, %v1522
      %v1524 = vrot.slane %v1523, 1
      %v1525 = vadd.f32 %v1523, %v1524
      %v1526 = vsub.f32 %v1453, %v1525
      %v1527 = vmul.f32 %v1526, %v1526
      %v1528 = vsel %vm1203, %v1527, 0.0
      %1529 = vadd.xlane.f32.xlu0 %v1528
      %v1530 = vpop.xlane.xlu0 %1529
      %v1531 = vmax.f32 %v1530, 1e-30
      %v1532 = vrsqrt.pop %v1531
      %v1533 = vmul.f32 %v1526, %v1532
      %v1534 = vlaneseq
      %v1535 = vshrl.u32 %v1534, 7
      %v1536 = vsub.s32 2, %v1535
      %v1537 = vrot.slane %v1533, %v1536
      %v1538 = vsel %vm1212, %v1537, 0.0
      %v1539 = vadd.f32 %v1511, %v1538
      %v1540 = vlaneseq
      %v1541 = vshrl.u32 %v1540, 7
      %v1542 = vsub.s32 3, %v1541
      %v1543 = vrot.slane %v1453, %v1542
      %v1544 = vmul.f32 %v1539, %v1543
      %1545 = vadd.xlane.f32.xlu0 %v1544
      %v1546 = vpop.xlane.xlu0 %1545
      %v1547 = vmul.f32 %v1546, %v1539
      %v1548 = vrot.slane %v1547, 4
      %v1549 = vadd.f32 %v1547, %v1548
      %v1550 = vrot.slane %v1549, 2
      %v1551 = vadd.f32 %v1549, %v1550
      %v1552 = vrot.slane %v1551, 1
      %v1553 = vadd.f32 %v1551, %v1552
      %v1554 = vsub.f32 %v1453, %v1553
      %v1555 = vmul.f32 %v1554, %v1554
      %v1556 = vsel %vm1235, %v1555, 0.0
      %1557 = vadd.xlane.f32.xlu0 %v1556
      %v1558 = vpop.xlane.xlu0 %1557
      %v1559 = vmax.f32 %v1558, 1e-30
      %v1560 = vrsqrt.pop %v1559
      %v1561 = vmul.f32 %v1554, %v1560
      %v1562 = vlaneseq
      %v1563 = vshrl.u32 %v1562, 7
      %v1564 = vsub.s32 3, %v1563
      %v1565 = vrot.slane %v1561, %v1564
      %v1566 = vsel %vm1244, %v1565, 0.0
      %v1567 = vadd.f32 %v1539, %v1566
      %v1568 = vlaneseq
      %v1569 = vshrl.u32 %v1568, 7
      %v1570 = vsub.s32 4, %v1569
      %v1571 = vrot.slane %v1453, %v1570
      %v1572 = vmul.f32 %v1567, %v1571
      %1573 = vadd.xlane.f32.xlu0 %v1572
      %v1574 = vpop.xlane.xlu0 %1573
      %v1575 = vmul.f32 %v1574, %v1567
      %v1576 = vrot.slane %v1575, 4
      %v1577 = vadd.f32 %v1575, %v1576
      %v1578 = vrot.slane %v1577, 2
      %v1579 = vadd.f32 %v1577, %v1578
      %v1580 = vrot.slane %v1579, 1
      %v1581 = vadd.f32 %v1579, %v1580
      %v1582 = vsub.f32 %v1453, %v1581
      %v1583 = vmul.f32 %v1582, %v1582
      %v1584 = vsel %vm1267, %v1583, 0.0
      %1585 = vadd.xlane.f32.xlu0 %v1584
      %v1586 = vpop.xlane.xlu0 %1585
      %v1587 = vmax.f32 %v1586, 1e-30
      %v1588 = vrsqrt.pop %v1587
      %v1589 = vmul.f32 %v1582, %v1588
      %v1590 = vlaneseq
      %v1591 = vshrl.u32 %v1590, 7
      %v1592 = vsub.s32 4, %v1591
      %v1593 = vrot.slane %v1589, %v1592
      %v1594 = vsel %vm1276, %v1593, 0.0
      %v1595 = vadd.f32 %v1567, %v1594
      %v1596 = vlaneseq
      %v1597 = vshrl.u32 %v1596, 7
      %v1598 = vsub.s32 5, %v1597
      %v1599 = vrot.slane %v1453, %v1598
      %v1600 = vmul.f32 %v1595, %v1599
      %1601 = vadd.xlane.f32.xlu0 %v1600
      %v1602 = vpop.xlane.xlu0 %1601
      %v1603 = vmul.f32 %v1602, %v1595
      %v1604 = vrot.slane %v1603, 4
      %v1605 = vadd.f32 %v1603, %v1604
      %v1606 = vrot.slane %v1605, 2
      %v1607 = vadd.f32 %v1605, %v1606
      %v1608 = vrot.slane %v1607, 1
      %v1609 = vadd.f32 %v1607, %v1608
      %v1610 = vsub.f32 %v1453, %v1609
      %v1611 = vmul.f32 %v1610, %v1610
      %v1612 = vsel %vm1299, %v1611, 0.0
      %1613 = vadd.xlane.f32.xlu0 %v1612
      %v1614 = vpop.xlane.xlu0 %1613
      %v1615 = vmax.f32 %v1614, 1e-30
      %v1616 = vrsqrt.pop %v1615
      %v1617 = vmul.f32 %v1610, %v1616
      %v1618 = vlaneseq
      %v1619 = vshrl.u32 %v1618, 7
      %v1620 = vsub.s32 5, %v1619
      %v1621 = vrot.slane %v1617, %v1620
      %v1622 = vsel %vm1308, %v1621, 0.0
      %v1623 = vadd.f32 %v1595, %v1622
      %v1624 = vlaneseq
      %v1625 = vshrl.u32 %v1624, 7
      %v1626 = vsub.s32 6, %v1625
      %v1627 = vrot.slane %v1453, %v1626
      %v1628 = vmul.f32 %v1623, %v1627
      %1629 = vadd.xlane.f32.xlu0 %v1628
      %v1630 = vpop.xlane.xlu0 %1629
      %v1631 = vmul.f32 %v1630, %v1623
      %v1632 = vrot.slane %v1631, 4
      %v1633 = vadd.f32 %v1631, %v1632
      %v1634 = vrot.slane %v1633, 2
      %v1635 = vadd.f32 %v1633, %v1634
      %v1636 = vrot.slane %v1635, 1
      %v1637 = vadd.f32 %v1635, %v1636
      %v1638 = vsub.f32 %v1453, %v1637
      %v1639 = vmul.f32 %v1638, %v1638
      %v1640 = vsel %vm1331, %v1639, 0.0
      %1641 = vadd.xlane.f32.xlu0 %v1640
      %v1642 = vpop.xlane.xlu0 %1641
      %v1643 = vmax.f32 %v1642, 1e-30
      %v1644 = vrsqrt.pop %v1643
      %v1645 = vmul.f32 %v1638, %v1644
      %v1646 = vlaneseq
      %v1647 = vshrl.u32 %v1646, 7
      %v1648 = vsub.s32 6, %v1647
      %v1649 = vrot.slane %v1645, %v1648
      %v1650 = vsel %vm1340, %v1649, 0.0
      %v1651 = vadd.f32 %v1623, %v1650
      %v1652 = vlaneseq
      %v1653 = vshrl.u32 %v1652, 7
      %v1654 = vsub.s32 7, %v1653
      %v1655 = vrot.slane %v1453, %v1654
      %v1656 = vmul.f32 %v1651, %v1655
      %1657 = vadd.xlane.f32.xlu0 %v1656
      %v1658 = vpop.xlane.xlu0 %1657
      %v1659 = vmul.f32 %v1658, %v1651
      %v1660 = vrot.slane %v1659, 4
      %v1661 = vadd.f32 %v1659, %v1660
      %v1662 = vrot.slane %v1661, 2
      %v1663 = vadd.f32 %v1661, %v1662
      %v1664 = vrot.slane %v1663, 1
      %v1665 = vadd.f32 %v1663, %v1664
      %v1666 = vsub.f32 %v1453, %v1665
      %v1667 = vmul.f32 %v1666, %v1666
      %v1668 = vsel %vm1363, %v1667, 0.0
      %1669 = vadd.xlane.f32.xlu0 %v1668
      %v1670 = vpop.xlane.xlu0 %1669
      %v1671 = vmax.f32 %v1670, 1e-30
      %v1672 = vrsqrt.pop %v1671
      %v1673 = vmul.f32 %v1666, %v1672
      %v1674 = vlaneseq
      %v1675 = vshrl.u32 %v1674, 7
      %v1676 = vsub.s32 7, %v1675
      %v1677 = vrot.slane %v1673, %v1676
      %v1678 = vsel %vm1372, %v1677, 0.0
      %v1679 = vadd.f32 %v1651, %v1678
    $region18: #{open_spectral_fit_and_forward.1} parent=1 // loop_footer
      %s1384 = sadd.s32 1, %s1380
    $region19: #{open_spectral_fit_and_forward.1} parent=1 // loop_footer_branch
      %1379 = sbr.rel target = $region15
    $region20: #{open_spectral_fit_and_forward.1} parent=1 // loop_exit
      _
    %v1680 = vmul.f32 %v1385, %v1385
    %v1681 = vrot.slane %v1680, 4
    %v1682 = vadd.f32 %v1680, %v1681
    %v1683 = vrot.slane %v1682, 2
    %v1684 = vadd.f32 %v1682, %v1683
    %v1685 = vrot.slane %v1684, 1
    %v1686 = vadd.f32 %v1684, %v1685
    %v1687 = vmax.f32 %v1686, 1e-24
    %v1688 = vrsqrt.pop %v1687
    %v1689 = vmul.f32 %v1385, %v1688
    %v1690 = vsel %vm693, 1, 0
    %v1691 = vcvt.s32.f32 %v1690
    %1692 = vmatprep.subr.mxu0 0.0
    %1693 = vmatpush1.xpose.msra.mxu0 %v1689
    %1694 = vmatprep.subr.mxu0 0.0
    %1695 = vmatpush1.xpose.msra.mxu0 0.0
    %1696 = vmatprep.subr.mxu0 0.0
    %1697 = vmatpush1.xpose.msra.mxu0 0.0
    %1698 = vmatprep.subr.mxu0 0.0
    %1699 = vmatpush1.xpose.msra.mxu0 0.0
    %1700 = vmatprep.subr.mxu0 0.0
    %1701 = vmatpush1.xpose.msra.mxu0 0.0
    %1702 = vmatprep.subr.mxu0 0.0
    %1703 = vmatpush1.xpose.msra.mxu0 0.0
    %1704 = vmatprep.subr.mxu0 0.0
    %1705 = vmatpush1.xpose.msra.mxu0 0.0
    %1706 = vmatprep.subr.mxu0 0.0
    %1707 = vmatpush1.xpose.msra.mxu0 0.0
    %1708 = vmatprep.subr.mxu0 0.0
    %1709 = vmatpush1.xpose.msra.mxu0 0.0
    %1710 = vmatprep.subr.mxu0 0.0
    %1711 = vmatpush1.xpose.msra.mxu0 0.0
    %1712 = vmatprep.subr.mxu0 0.0
    %1713 = vmatpush1.xpose.msra.mxu0 0.0
    %1714 = vmatprep.subr.mxu0 0.0
    %1715 = vmatpush1.xpose.msra.mxu0 0.0
    %1716 = vmatprep.subr.mxu0 0.0
    %1717 = vmatpush1.xpose.msra.mxu0 0.0
    %1718 = vmatprep.subr.mxu0 0.0
    %1719 = vmatpush1.xpose.msra.mxu0 0.0
    %1720 = vmatprep.subr.mxu0 0.0
    %1721 = vmatpush1.xpose.msra.mxu0 0.0
    %1722 = vmatprep.subr.mxu0 0.0
    %1723 = vmatpush1.xpose.msra.mxu0 0.0
    %1724 = vmatprep.subr.mxu0 0.0
    %1725 = vmatpush1.xpose.msra.mxu0 0.0
    %1726 = vmatprep.subr.mxu0 0.0
    %1727 = vmatpush1.xpose.msra.mxu0 0.0
    %1728 = vmatprep.subr.mxu0 0.0
    %1729 = vmatpush1.xpose.msra.mxu0 0.0
    %1730 = vmatprep.subr.mxu0 0.0
    %1731 = vmatpush1.xpose.msra.mxu0 0.0
    %1732 = vmatprep.subr.mxu0 0.0
    %1733 = vmatpush1.xpose.msra.mxu0 0.0
    %1734 = vmatprep.subr.mxu0 0.0
    %1735 = vmatpush1.xpose.msra.mxu0 0.0
    %1736 = vmatprep.subr.mxu0 0.0
    %1737 = vmatpush1.xpose.msra.mxu0 0.0
    %1738 = vmatprep.subr.mxu0 0.0
    %1739 = vmatpush1.xpose.msra.mxu0 0.0
    %1740 = vmatprep.subr.mxu0 0.0
    %1741 = vmatpush1.xpose.msra.mxu0 0.0
    %1742 = vmatprep.subr.mxu0 0.0
    %1743 = vmatpush1.xpose.msra.mxu0 0.0
    %1744 = vmatprep.subr.mxu0 0.0
    %1745 = vmatpush1.xpose.msra.mxu0 0.0
    %1746 = vmatprep.subr.mxu0 0.0
    %1747 = vmatpush1.xpose.msra.mxu0 0.0
    %1748 = vmatprep.subr.mxu0 0.0
    %1749 = vmatpush1.xpose.msra.mxu0 0.0
    %1750 = vmatprep.subr.mxu0 0.0
    %1751 = vmatpush1.xpose.msra.mxu0 0.0
    %1752 = vmatprep.subr.mxu0 0.0
    %1753 = vmatpush1.xpose.msra.mxu0 0.0
    %1754 = vmatprep.subr.mxu0 0.0
    %1755 = vmatpush1.xpose.msra.mxu0 0.0
    %1756 = vmatprep.mubr.f32.mxu0 0.0
    %1757 = vmatmul.mubr.f32.gmra.mrb[0].mxu0 %v1691
    %v1758 = vpop.f32.mrb[0].mxu0
    %v1759 = vadd.f32 0.0, %v1758
    %v1760 = vpop.f32.mrb[0].mxu0
    %1761 = vdwg.mxu0
    %v1762 = vcvt.s32.f32 %v675
    %vm1763 = vcmask 64512
    %v1765 = vsel %vm1763, %v1759, 0
    %1767 = vmatprep.subr.mxu0 0.0
    %1768 = vmatpush1.msra.mxu0 %v1689
    %1769 = vmatprep.subr.mxu0 0.0
    %1770 = vmatpush1.msra.mxu0 0.0
    %1771 = vmatprep.subr.mxu0 0.0
    %1772 = vmatpush1.msra.mxu0 0.0
    %1773 = vmatprep.subr.mxu0 0.0
    %1774 = vmatpush1.msra.mxu0 0.0
    %1775 = vmatprep.subr.mxu0 0.0
    %1776 = vmatpush1.msra.mxu0 0.0
    %1777 = vmatprep.subr.mxu0 0.0
    %1778 = vmatpush1.msra.mxu0 0.0
    %1779 = vmatprep.subr.mxu0 0.0
    %1780 = vmatpush1.msra.mxu0 0.0
    %1781 = vmatprep.subr.mxu0 0.0
    %1782 = vmatpush1.msra.mxu0 0.0
    %1783 = vmatprep.subr.mxu0 0.0
    %1784 = vmatpush1.msra.mxu0 0.0
    %1785 = vmatprep.subr.mxu0 0.0
    %1786 = vmatpush1.msra.mxu0 0.0
    %1787 = vmatprep.subr.mxu0 0.0
    %1788 = vmatpush1.msra.mxu0 0.0
    %1789 = vmatprep.subr.mxu0 0.0
    %1790 = vmatpush1.msra.mxu0 0.0
    %1791 = vmatprep.subr.mxu0 0.0
    %1792 = vmatpush1.msra.mxu0 0.0
    %1793 = vmatprep.subr.mxu0 0.0
    %1794 = vmatpush1.msra.mxu0 0.0
    %1795 = vmatprep.subr.mxu0 0.0
    %1796 = vmatpush1.msra.mxu0 0.0
    %1797 = vmatprep.subr.mxu0 0.0
    %1798 = vmatpush1.msra.mxu0 0.0
    %1799 = vmatprep.subr.mxu0 0.0
    %1800 = vmatpush1.msra.mxu0 0.0
    %1801 = vmatprep.subr.mxu0 0.0
    %1802 = vmatpush1.msra.mxu0 0.0
    %1803 = vmatprep.subr.mxu0 0.0
    %1804 = vmatpush1.msra.mxu0 0.0
    %1805 = vmatprep.subr.mxu0 0.0
    %1806 = vmatpush1.msra.mxu0 0.0
    %1807 = vmatprep.subr.mxu0 0.0
    %1808 = vmatpush1.msra.mxu0 0.0
    %1809 = vmatprep.subr.mxu0 0.0
    %1810 = vmatpush1.msra.mxu0 0.0
    %1811 = vmatprep.subr.mxu0 0.0
    %1812 = vmatpush1.msra.mxu0 0.0
    %1813 = vmatprep.subr.mxu0 0.0
    %1814 = vmatpush1.msra.mxu0 0.0
    %1815 = vmatprep.subr.mxu0 0.0
    %1816 = vmatpush1.msra.mxu0 0.0
    %1817 = vmatprep.subr.mxu0 0.0
    %1818 = vmatpush1.msra.mxu0 0.0
    %1819 = vmatprep.subr.mxu0 0.0
    %1820 = vmatpush1.msra.mxu0 0.0
    %1821 = vmatprep.subr.mxu0 0.0
    %1822 = vmatpush1.msra.mxu0 0.0
    %1823 = vmatprep.subr.mxu0 0.0
    %1824 = vmatpush1.msra.mxu0 0.0
    %1825 = vmatprep.subr.mxu0 0.0
    %1826 = vmatpush1.msra.mxu0 0.0
    %1827 = vmatprep.subr.mxu0 0.0
    %1828 = vmatpush1.msra.mxu0 0.0
    %1829 = vmatprep.subr.mxu0 0.0
    %1830 = vmatpush1.msra.mxu0 0.0
    %1831 = vmatprep.mubr.f32.mxu0 0.0
    %1832 = vmatmul.mubr.f32.gmra.mrb[0].mxu0 %v1765
    %v1833 = vpop.f32.mrb[0].mxu0
    %v1834 = vadd.f32 0.0, %v1833
    %v1835 = vpop.f32.mrb[0].mxu0
    %1836 = vdwg.mxu0
    %v1837 = vmul.f32 %v1759, %v1759
    %v1838 = vsel %vm1763, %v1837, 0.0
    %1839 = vadd.xlane.f32.xlu0 %v1838
    %v1840 = vpop.xlane.xlu0 %1839
    %v1841 = vmul.f32 %v1834, 2.0
    %v1842 = vsub.f32 %v1840, %v1841
    %v1844 = vrot.slane %v1842, 7
    %vm1846 = vcmp.lt.f32.partialorder %v1842, %v1844
    %v1847 = vsel %vm1846, %v1842, %v1844
    %v1848 = vsel %vm1846, 1.0, 0.0
    %v1850 = vrot.slane %v1847, 7
    %vm1852 = vcmp.lt.f32.partialorder %v1842, %v1850
    %v1853 = vsel %vm1852, %v1842, %v1850
    %v1855 = vrot.slane %v1848, 7
    %v1857 = vsel %vm1852, 2.0, %v1855
    %v1859 = vrot.slane %v1853, 7
    %vm1861 = vcmp.lt.f32.partialorder %v1842, %v1859
    %v1862 = vsel %vm1861, %v1842, %v1859
    %v1864 = vrot.slane %v1857, 7
    %v1866 = vsel %vm1861, 3.0, %v1864
    %v1868 = vrot.slane %v1862, 7
    %vm1870 = vcmp.lt.f32.partialorder %v1842, %v1868
    %v1871 = vsel %vm1870, %v1842, %v1868
    %v1873 = vrot.slane %v1866, 7
    %v1875 = vsel %vm1870, 4.0, %v1873
    %v1877 = vrot.slane %v1871, 7
    %vm1879 = vcmp.lt.f32.partialorder %v1842, %v1877
    %v1880 = vsel %vm1879, %v1842, %v1877
    %v1882 = vrot.slane %v1875, 7
    %v1884 = vsel %vm1879, 5.0, %v1882
    %v1886 = vrot.slane %v1880, 7
    %vm1888 = vcmp.lt.f32.partialorder %v1842, %v1886
    %v1889 = vsel %vm1888, %v1842, %v1886
    %v1891 = vrot.slane %v1884, 7
    %v1893 = vsel %vm1888, 6.0, %v1891
    %v1895 = vrot.slane %v1889, 7
    %vm1897 = vcmp.lt.f32.partialorder %v1842, %v1895
    %v1899 = vrot.slane %v1893, 7
    %v1901 = vsel %vm1897, 7.0, %v1899
    %v1902 = vlaneseq
    %v1903 = vshrl.u32 %v1902, 7
    %v1904 = vsub.s32 7, %v1903
    %v1905 = vrot.slane %v1901, %v1904
    %vm1906 = vcmp.eq.f32.partialorder %v1905, %v1762
    %v1907 = vsel %vm1906, 1, 0
    %v1908 = vcvt.s32.f32 %v1907
    %1909 = vmatprep.subr.mxu0 0.0
    %1910 = vmatpush1.xpose.msra.mxu0 %v1689
    %1911 = vmatprep.subr.mxu0 0.0
    %1912 = vmatpush1.xpose.msra.mxu0 0.0
    %1913 = vmatprep.subr.mxu0 0.0
    %1914 = vmatpush1.xpose.msra.mxu0 0.0
    %1915 = vmatprep.subr.mxu0 0.0
    %1916 = vmatpush1.xpose.msra.mxu0 0.0
    %1917 = vmatprep.subr.mxu0 0.0
    %1918 = vmatpush1.xpose.msra.mxu0 0.0
    %1919 = vmatprep.subr.mxu0 0.0
    %1920 = vmatpush1.xpose.msra.mxu0 0.0
    %1921 = vmatprep.subr.mxu0 0.0
    %1922 = vmatpush1.xpose.msra.mxu0 0.0
    %1923 = vmatprep.subr.mxu0 0.0
    %1924 = vmatpush1.xpose.msra.mxu0 0.0
    %1925 = vmatprep.subr.mxu0 0.0
    %1926 = vmatpush1.xpose.msra.mxu0 0.0
    %1927 = vmatprep.subr.mxu0 0.0
    %1928 = vmatpush1.xpose.msra.mxu0 0.0
    %1929 = vmatprep.subr.mxu0 0.0
    %1930 = vmatpush1.xpose.msra.mxu0 0.0
    %1931 = vmatprep.subr.mxu0 0.0
    %1932 = vmatpush1.xpose.msra.mxu0 0.0
    %1933 = vmatprep.subr.mxu0 0.0
    %1934 = vmatpush1.xpose.msra.mxu0 0.0
    %1935 = vmatprep.subr.mxu0 0.0
    %1936 = vmatpush1.xpose.msra.mxu0 0.0
    %1937 = vmatprep.subr.mxu0 0.0
    %1938 = vmatpush1.xpose.msra.mxu0 0.0
    %1939 = vmatprep.subr.mxu0 0.0
    %1940 = vmatpush1.xpose.msra.mxu0 0.0
    %1941 = vmatprep.subr.mxu0 0.0
    %1942 = vmatpush1.xpose.msra.mxu0 0.0
    %1943 = vmatprep.subr.mxu0 0.0
    %1944 = vmatpush1.xpose.msra.mxu0 0.0
    %1945 = vmatprep.subr.mxu0 0.0
    %1946 = vmatpush1.xpose.msra.mxu0 0.0
    %1947 = vmatprep.subr.mxu0 0.0
    %1948 = vmatpush1.xpose.msra.mxu0 0.0
    %1949 = vmatprep.subr.mxu0 0.0
    %1950 = vmatpush1.xpose.msra.mxu0 0.0
    %1951 = vmatprep.subr.mxu0 0.0
    %1952 = vmatpush1.xpose.msra.mxu0 0.0
    %1953 = vmatprep.subr.mxu0 0.0
    %1954 = vmatpush1.xpose.msra.mxu0 0.0
    %1955 = vmatprep.subr.mxu0 0.0
    %1956 = vmatpush1.xpose.msra.mxu0 0.0
    %1957 = vmatprep.subr.mxu0 0.0
    %1958 = vmatpush1.xpose.msra.mxu0 0.0
    %1959 = vmatprep.subr.mxu0 0.0
    %1960 = vmatpush1.xpose.msra.mxu0 0.0
    %1961 = vmatprep.subr.mxu0 0.0
    %1962 = vmatpush1.xpose.msra.mxu0 0.0
    %1963 = vmatprep.subr.mxu0 0.0
    %1964 = vmatpush1.xpose.msra.mxu0 0.0
    %1965 = vmatprep.subr.mxu0 0.0
    %1966 = vmatpush1.xpose.msra.mxu0 0.0
    %1967 = vmatprep.subr.mxu0 0.0
    %1968 = vmatpush1.xpose.msra.mxu0 0.0
    %1969 = vmatprep.subr.mxu0 0.0
    %1970 = vmatpush1.xpose.msra.mxu0 0.0
    %1971 = vmatprep.subr.mxu0 0.0
    %1972 = vmatpush1.xpose.msra.mxu0 0.0
    %1973 = vmatprep.mubr.f32.mxu0 0.0
    %1974 = vmatmul.mubr.f32.gmra.mrb[0].mxu0 %v1908
    %v1975 = vpop.f32.mrb[0].mxu0
    %v1976 = vadd.f32 0.0, %v1975
    %v1977 = vpop.f32.mrb[0].mxu0
    %1978 = vdwg.mxu0
    %1979 = vadd.xlane.f32.xlu0 %v1908
    %v1980 = vpop.xlane.xlu0 %1979
    %v1981 = vmax.f32 %v1980, 1.0
    %v1982 = vrcp.pop %v1981
    %v1983 = vmul.f32 %v1976, %v1982
    %vm1984 = vcmp.gt.f32.partialorder %v1980, 0.0
    %v1985 = vsel %vm1984, 1, 0
    %vm1986 = vcmp.eq.s32.totalorder %v1985, 1
    %v1987 = vsel %vm1986, %v1983, %v1759
    %v1989 = vsel %vm1763, %v1987, 0
    %1991 = vmatprep.subr.mxu0 0.0
    %1992 = vmatpush1.msra.mxu0 %v1689
    %1993 = vmatprep.subr.mxu0 0.0
    %1994 = vmatpush1.msra.mxu0 0.0
    %1995 = vmatprep.subr.mxu0 0.0
    %1996 = vmatpush1.msra.mxu0 0.0
    %1997 = vmatprep.subr.mxu0 0.0
    %1998 = vmatpush1.msra.mxu0 0.0
    %1999 = vmatprep.subr.mxu0 0.0
    %2000 = vmatpush1.msra.mxu0 0.0
    %2001 = vmatprep.subr.mxu0 0.0
    %2002 = vmatpush1.msra.mxu0 0.0
    %2003 = vmatprep.subr.mxu0 0.0
    %2004 = vmatpush1.msra.mxu0 0.0
    %2005 = vmatprep.subr.mxu0 0.0
    %2006 = vmatpush1.msra.mxu0 0.0
    %2007 = vmatprep.subr.mxu0 0.0
    %2008 = vmatpush1.msra.mxu0 0.0
    %2009 = vmatprep.subr.mxu0 0.0
    %2010 = vmatpush1.msra.mxu0 0.0
    %2011 = vmatprep.subr.mxu0 0.0
    %2012 = vmatpush1.msra.mxu0 0.0
    %2013 = vmatprep.subr.mxu0 0.0
    %2014 = vmatpush1.msra.mxu0 0.0
    %2015 = vmatprep.subr.mxu0 0.0
    %2016 = vmatpush1.msra.mxu0 0.0
    %2017 = vmatprep.subr.mxu0 0.0
    %2018 = vmatpush1.msra.mxu0 0.0
    %2019 = vmatprep.subr.mxu0 0.0
    %2020 = vmatpush1.msra.mxu0 0.0
    %2021 = vmatprep.subr.mxu0 0.0
    %2022 = vmatpush1.msra.mxu0 0.0
    %2023 = vmatprep.subr.mxu0 0.0
    %2024 = vmatpush1.msra.mxu0 0.0
    %2025 = vmatprep.subr.mxu0 0.0
    %2026 = vmatpush1.msra.mxu0 0.0
    %2027 = vmatprep.subr.mxu0 0.0
    %2028 = vmatpush1.msra.mxu0 0.0
    %2029 = vmatprep.subr.mxu0 0.0
    %2030 = vmatpush1.msra.mxu0 0.0
    %2031 = vmatprep.subr.mxu0 0.0
    %2032 = vmatpush1.msra.mxu0 0.0
    %2033 = vmatprep.subr.mxu0 0.0
    %2034 = vmatpush1.msra.mxu0 0.0
    %2035 = vmatprep.subr.mxu0 0.0
    %2036 = vmatpush1.msra.mxu0 0.0
    %2037 = vmatprep.subr.mxu0 0.0
    %2038 = vmatpush1.msra.mxu0 0.0
    %2039 = vmatprep.subr.mxu0 0.0
    %2040 = vmatpush1.msra.mxu0 0.0
    %2041 = vmatprep.subr.mxu0 0.0
    %2042 = vmatpush1.msra.mxu0 0.0
    %2043 = vmatprep.subr.mxu0 0.0
    %2044 = vmatpush1.msra.mxu0 0.0
    %2045 = vmatprep.subr.mxu0 0.0
    %2046 = vmatpush1.msra.mxu0 0.0
    %2047 = vmatprep.subr.mxu0 0.0
    %2048 = vmatpush1.msra.mxu0 0.0
    %2049 = vmatprep.subr.mxu0 0.0
    %2050 = vmatpush1.msra.mxu0 0.0
    %2051 = vmatprep.subr.mxu0 0.0
    %2052 = vmatpush1.msra.mxu0 0.0
    %2053 = vmatprep.subr.mxu0 0.0
    %2054 = vmatpush1.msra.mxu0 0.0
    %2055 = vmatprep.mubr.f32.mxu0 0.0
    %2056 = vmatmul.mubr.f32.gmra.mrb[0].mxu0 %v1989
    %v2057 = vpop.f32.mrb[0].mxu0
    %v2058 = vadd.f32 0.0, %v2057
    %v2059 = vpop.f32.mrb[0].mxu0
    %2060 = vdwg.mxu0
    %v2061 = vmul.f32 %v1987, %v1987
    %v2062 = vsel %vm1763, %v2061, 0.0
    %2063 = vadd.xlane.f32.xlu0 %v2062
    %v2064 = vpop.xlane.xlu0 %2063
    %v2065 = vmul.f32 %v2058, 2.0
    %v2066 = vsub.f32 %v2064, %v2065
    %v2068 = vrot.slane %v2066, 7
    %vm2070 = vcmp.lt.f32.partialorder %v2066, %v2068
    %v2071 = vsel %vm2070, %v2066, %v2068
    %v2072 = vsel %vm2070, 1.0, 0.0
    %v2074 = vrot.slane %v2071, 7
    %vm2076 = vcmp.lt.f32.partialorder %v2066, %v2074
    %v2077 = vsel %vm2076, %v2066, %v2074
    %v2079 = vrot.slane %v2072, 7
    %v2081 = vsel %vm2076, 2.0, %v2079
    %v2083 = vrot.slane %v2077, 7
    %vm2085 = vcmp.lt.f32.partialorder %v2066, %v2083
    %v2086 = vsel %vm2085, %v2066, %v2083
    %v2088 = vrot.slane %v2081, 7
    %v2090 = vsel %vm2085, 3.0, %v2088
    %v2092 = vrot.slane %v2086, 7
    %vm2094 = vcmp.lt.f32.partialorder %v2066, %v2092
    %v2095 = vsel %vm2094, %v2066, %v2092
    %v2097 = vrot.slane %v2090, 7
    %v2099 = vsel %vm2094, 4.0, %v2097
    %v2101 = vrot.slane %v2095, 7
    %vm2103 = vcmp.lt.f32.partialorder %v2066, %v2101
    %v2104 = vsel %vm2103, %v2066, %v2101
    %v2106 = vrot.slane %v2099, 7
    %v2108 = vsel %vm2103, 5.0, %v2106
    %v2110 = vrot.slane %v2104, 7
    %vm2112 = vcmp.lt.f32.partialorder %v2066, %v2110
    %v2113 = vsel %vm2112, %v2066, %v2110
    %v2115 = vrot.slane %v2108, 7
    %v2117 = vsel %vm2112, 6.0, %v2115
    %v2119 = vrot.slane %v2113, 7
    %vm2121 = vcmp.lt.f32.partialorder %v2066, %v2119
    %v2123 = vrot.slane %v2117, 7
    %v2125 = vsel %vm2121, 7.0, %v2123
    %v2126 = vlaneseq
    %v2127 = vshrl.u32 %v2126, 7
    %v2128 = vsub.s32 7, %v2127
    %v2129 = vrot.slane %v2125, %v2128
    %vm2130 = vcmp.eq.f32.partialorder %v2129, %v1762
    %v2131 = vsel %vm2130, 1, 0
    %v2132 = vcvt.s32.f32 %v2131
    %2133 = vmatprep.subr.mxu0 0.0
    %2134 = vmatpush1.xpose.msra.mxu0 %v1689
    %2135 = vmatprep.subr.mxu0 0.0
    %2136 = vmatpush1.xpose.msra.mxu0 0.0
    %2137 = vmatprep.subr.mxu0 0.0
    %2138 = vmatpush1.xpose.msra.mxu0 0.0
    %2139 = vmatprep.subr.mxu0 0.0
    %2140 = vmatpush1.xpose.msra.mxu0 0.0
    %2141 = vmatprep.subr.mxu0 0.0
    %2142 = vmatpush1.xpose.msra.mxu0 0.0
    %2143 = vmatprep.subr.mxu0 0.0
    %2144 = vmatpush1.xpose.msra.mxu0 0.0
    %2145 = vmatprep.subr.mxu0 0.0
    %2146 = vmatpush1.xpose.msra.mxu0 0.0
    %2147 = vmatprep.subr.mxu0 0.0
    %2148 = vmatpush1.xpose.msra.mxu0 0.0
    %2149 = vmatprep.subr.mxu0 0.0
    %2150 = vmatpush1.xpose.msra.mxu0 0.0
    %2151 = vmatprep.subr.mxu0 0.0
    %2152 = vmatpush1.xpose.msra.mxu0 0.0
    %2153 = vmatprep.subr.mxu0 0.0
    %2154 = vmatpush1.xpose.msra.mxu0 0.0
    %2155 = vmatprep.subr.mxu0 0.0
    %2156 = vmatpush1.xpose.msra.mxu0 0.0
    %2157 = vmatprep.subr.mxu0 0.0
    %2158 = vmatpush1.xpose.msra.mxu0 0.0
    %2159 = vmatprep.subr.mxu0 0.0
    %2160 = vmatpush1.xpose.msra.mxu0 0.0
    %2161 = vmatprep.subr.mxu0 0.0
    %2162 = vmatpush1.xpose.msra.mxu0 0.0
    %2163 = vmatprep.subr.mxu0 0.0
    %2164 = vmatpush1.xpose.msra.mxu0 0.0
    %2165 = vmatprep.subr.mxu0 0.0
    %2166 = vmatpush1.xpose.msra.mxu0 0.0
    %2167 = vmatprep.subr.mxu0 0.0
    %2168 = vmatpush1.xpose.msra.mxu0 0.0
    %2169 = vmatprep.subr.mxu0 0.0
    %2170 = vmatpush1.xpose.msra.mxu0 0.0
    %2171 = vmatprep.subr.mxu0 0.0
    %2172 = vmatpush1.xpose.msra.mxu0 0.0
    %2173 = vmatprep.subr.mxu0 0.0
    %2174 = vmatpush1.xpose.msra.mxu0 0.0
    %2175 = vmatprep.subr.mxu0 0.0
    %2176 = vmatpush1.xpose.msra.mxu0 0.0
    %2177 = vmatprep.subr.mxu0 0.0
    %2178 = vmatpush1.xpose.msra.mxu0 0.0
    %2179 = vmatprep.subr.mxu0 0.0
    %2180 = vmatpush1.xpose.msra.mxu0 0.0
    %2181 = vmatprep.subr.mxu0 0.0
    %2182 = vmatpush1.xpose.msra.mxu0 0.0
    %2183 = vmatprep.subr.mxu0 0.0
    %2184 = vmatpush1.xpose.msra.mxu0 0.0
    %2185 = vmatprep.subr.mxu0 0.0
    %2186 = vmatpush1.xpose.msra.mxu0 0.0
    %2187 = vmatprep.subr.mxu0 0.0
    %2188 = vmatpush1.xpose.msra.mxu0 0.0
    %2189 = vmatprep.subr.mxu0 0.0
    %2190 = vmatpush1.xpose.msra.mxu0 0.0
    %2191 = vmatprep.subr.mxu0 0.0
    %2192 = vmatpush1.xpose.msra.mxu0 0.0
    %2193 = vmatprep.subr.mxu0 0.0
    %2194 = vmatpush1.xpose.msra.mxu0 0.0
    %2195 = vmatprep.subr.mxu0 0.0
    %2196 = vmatpush1.xpose.msra.mxu0 0.0
    %2197 = vmatprep.mubr.f32.mxu0 0.0
    %2198 = vmatmul.mubr.f32.gmra.mrb[0].mxu0 %v2132
    %v2199 = vpop.f32.mrb[0].mxu0
    %v2200 = vadd.f32 0.0, %v2199
    %v2201 = vpop.f32.mrb[0].mxu0
    %2202 = vdwg.mxu0
    %2203 = vadd.xlane.f32.xlu0 %v2132
    %v2204 = vpop.xlane.xlu0 %2203
    %v2205 = vmax.f32 %v2204, 1.0
    %v2206 = vrcp.pop %v2205
    %v2207 = vmul.f32 %v2200, %v2206
    %vm2208 = vcmp.gt.f32.partialorder %v2204, 0.0
    %v2209 = vsel %vm2208, 1, 0
    %vm2210 = vcmp.eq.s32.totalorder %v2209, 1
    %v2211 = vsel %vm2210, %v2207, %v1987
    %v2213 = vsel %vm1763, %v2211, 0
    %2215 = vmatprep.subr.mxu0 0.0
    %2216 = vmatpush1.msra.mxu0 %v1689
    %2217 = vmatprep.subr.mxu0 0.0
    %2218 = vmatpush1.msra.mxu0 0.0
    %2219 = vmatprep.subr.mxu0 0.0
    %2220 = vmatpush1.msra.mxu0 0.0
    %2221 = vmatprep.subr.mxu0 0.0
    %2222 = vmatpush1.msra.mxu0 0.0
    %2223 = vmatprep.subr.mxu0 0.0
    %2224 = vmatpush1.msra.mxu0 0.0
    %2225 = vmatprep.subr.mxu0 0.0
    %2226 = vmatpush1.msra.mxu0 0.0
    %2227 = vmatprep.subr.mxu0 0.0
    %2228 = vmatpush1.msra.mxu0 0.0
    %2229 = vmatprep.subr.mxu0 0.0
    %2230 = vmatpush1.msra.mxu0 0.0
    %2231 = vmatprep.subr.mxu0 0.0
    %2232 = vmatpush1.msra.mxu0 0.0
    %2233 = vmatprep.subr.mxu0 0.0
    %2234 = vmatpush1.msra.mxu0 0.0
    %2235 = vmatprep.subr.mxu0 0.0
    %2236 = vmatpush1.msra.mxu0 0.0
    %2237 = vmatprep.subr.mxu0 0.0
    %2238 = vmatpush1.msra.mxu0 0.0
    %2239 = vmatprep.subr.mxu0 0.0
    %2240 = vmatpush1.msra.mxu0 0.0
    %2241 = vmatprep.subr.mxu0 0.0
    %2242 = vmatpush1.msra.mxu0 0.0
    %2243 = vmatprep.subr.mxu0 0.0
    %2244 = vmatpush1.msra.mxu0 0.0
    %2245 = vmatprep.subr.mxu0 0.0
    %2246 = vmatpush1.msra.mxu0 0.0
    %2247 = vmatprep.subr.mxu0 0.0
    %2248 = vmatpush1.msra.mxu0 0.0
    %2249 = vmatprep.subr.mxu0 0.0
    %2250 = vmatpush1.msra.mxu0 0.0
    %2251 = vmatprep.subr.mxu0 0.0
    %2252 = vmatpush1.msra.mxu0 0.0
    %2253 = vmatprep.subr.mxu0 0.0
    %2254 = vmatpush1.msra.mxu0 0.0
    %2255 = vmatprep.subr.mxu0 0.0
    %2256 = vmatpush1.msra.mxu0 0.0
    %2257 = vmatprep.subr.mxu0 0.0
    %2258 = vmatpush1.msra.mxu0 0.0
    %2259 = vmatprep.subr.mxu0 0.0
    %2260 = vmatpush1.msra.mxu0 0.0
    %2261 = vmatprep.subr.mxu0 0.0
    %2262 = vmatpush1.msra.mxu0 0.0
    %2263 = vmatprep.subr.mxu0 0.0
    %2264 = vmatpush1.msra.mxu0 0.0
    %2265 = vmatprep.subr.mxu0 0.0
    %2266 = vmatpush1.msra.mxu0 0.0
    %2267 = vmatprep.subr.mxu0 0.0
    %2268 = vmatpush1.msra.mxu0 0.0
    %2269 = vmatprep.subr.mxu0 0.0
    %2270 = vmatpush1.msra.mxu0 0.0
    %2271 = vmatprep.subr.mxu0 0.0
    %2272 = vmatpush1.msra.mxu0 0.0
    %2273 = vmatprep.subr.mxu0 0.0
    %2274 = vmatpush1.msra.mxu0 0.0
    %2275 = vmatprep.subr.mxu0 0.0
    %2276 = vmatpush1.msra.mxu0 0.0
    %2277 = vmatprep.subr.mxu0 0.0
    %2278 = vmatpush1.msra.mxu0 0.0
    %2279 = vmatprep.mubr.f32.mxu0 0.0
    %2280 = vmatmul.mubr.f32.gmra.mrb[0].mxu0 %v2213
    %v2281 = vpop.f32.mrb[0].mxu0
    %v2282 = vadd.f32 0.0, %v2281
    %v2283 = vpop.f32.mrb[0].mxu0
    %2284 = vdwg.mxu0
    %v2285 = vmul.f32 %v2211, %v2211
    %v2286 = vsel %vm1763, %v2285, 0.0
    %2287 = vadd.xlane.f32.xlu0 %v2286
    %v2288 = vpop.xlane.xlu0 %2287
    %v2289 = vmul.f32 %v2282, 2.0
    %v2290 = vsub.f32 %v2288, %v2289
    %v2292 = vrot.slane %v2290, 7
    %vm2294 = vcmp.lt.f32.partialorder %v2290, %v2292
    %v2295 = vsel %vm2294, %v2290, %v2292
    %v2296 = vsel %vm2294, 1.0, 0.0
    %v2298 = vrot.slane %v2295, 7
    %vm2300 = vcmp.lt.f32.partialorder %v2290, %v2298
    %v2301 = vsel %vm2300, %v2290, %v2298
    %v2303 = vrot.slane %v2296, 7
    %v2305 = vsel %vm2300, 2.0, %v2303
    %v2307 = vrot.slane %v2301, 7
    %vm2309 = vcmp.lt.f32.partialorder %v2290, %v2307
    %v2310 = vsel %vm2309, %v2290, %v2307
    %v2312 = vrot.slane %v2305, 7
    %v2314 = vsel %vm2309, 3.0, %v2312
    %v2316 = vrot.slane %v2310, 7
    %vm2318 = vcmp.lt.f32.partialorder %v2290, %v2316
    %v2319 = vsel %vm2318, %v2290, %v2316
    %v2321 = vrot.slane %v2314, 7
    %v2323 = vsel %vm2318, 4.0, %v2321
    %v2325 = vrot.slane %v2319, 7
    %vm2327 = vcmp.lt.f32.partialorder %v2290, %v2325
    %v2328 = vsel %vm2327, %v2290, %v2325
    %v2330 = vrot.slane %v2323, 7
    %v2332 = vsel %vm2327, 5.0, %v2330
    %v2334 = vrot.slane %v2328, 7
    %vm2336 = vcmp.lt.f32.partialorder %v2290, %v2334
    %v2337 = vsel %vm2336, %v2290, %v2334
    %v2339 = vrot.slane %v2332, 7
    %v2341 = vsel %vm2336, 6.0, %v2339
    %v2343 = vrot.slane %v2337, 7
    %vm2345 = vcmp.lt.f32.partialorder %v2290, %v2343
    %v2347 = vrot.slane %v2341, 7
    %v2349 = vsel %vm2345, 7.0, %v2347
    %v2350 = vlaneseq
    %v2351 = vshrl.u32 %v2350, 7
    %v2352 = vsub.s32 7, %v2351
    %v2353 = vrot.slane %v2349, %v2352
    %vm2354 = vcmp.eq.f32.partialorder %v2353, %v1762
    %v2355 = vsel %vm2354, 1, 0
    %v2356 = vcvt.s32.f32 %v2355
    %2357 = vmatprep.subr.mxu0 0.0
    %2358 = vmatpush1.xpose.msra.mxu0 %v1689
    %2359 = vmatprep.subr.mxu0 0.0
    %2360 = vmatpush1.xpose.msra.mxu0 0.0
    %2361 = vmatprep.subr.mxu0 0.0
    %2362 = vmatpush1.xpose.msra.mxu0 0.0
    %2363 = vmatprep.subr.mxu0 0.0
    %2364 = vmatpush1.xpose.msra.mxu0 0.0
    %2365 = vmatprep.subr.mxu0 0.0
    %2366 = vmatpush1.xpose.msra.mxu0 0.0
    %2367 = vmatprep.subr.mxu0 0.0
    %2368 = vmatpush1.xpose.msra.mxu0 0.0
    %2369 = vmatprep.subr.mxu0 0.0
    %2370 = vmatpush1.xpose.msra.mxu0 0.0
    %2371 = vmatprep.subr.mxu0 0.0
    %2372 = vmatpush1.xpose.msra.mxu0 0.0
    %2373 = vmatprep.subr.mxu0 0.0
    %2374 = vmatpush1.xpose.msra.mxu0 0.0
    %2375 = vmatprep.subr.mxu0 0.0
    %2376 = vmatpush1.xpose.msra.mxu0 0.0
    %2377 = vmatprep.subr.mxu0 0.0
    %2378 = vmatpush1.xpose.msra.mxu0 0.0
    %2379 = vmatprep.subr.mxu0 0.0
    %2380 = vmatpush1.xpose.msra.mxu0 0.0
    %2381 = vmatprep.subr.mxu0 0.0
    %2382 = vmatpush1.xpose.msra.mxu0 0.0
    %2383 = vmatprep.subr.mxu0 0.0
    %2384 = vmatpush1.xpose.msra.mxu0 0.0
    %2385 = vmatprep.subr.mxu0 0.0
    %2386 = vmatpush1.xpose.msra.mxu0 0.0
    %2387 = vmatprep.subr.mxu0 0.0
    %2388 = vmatpush1.xpose.msra.mxu0 0.0
    %2389 = vmatprep.subr.mxu0 0.0
    %2390 = vmatpush1.xpose.msra.mxu0 0.0
    %2391 = vmatprep.subr.mxu0 0.0
    %2392 = vmatpush1.xpose.msra.mxu0 0.0
    %2393 = vmatprep.subr.mxu0 0.0
    %2394 = vmatpush1.xpose.msra.mxu0 0.0
    %2395 = vmatprep.subr.mxu0 0.0
    %2396 = vmatpush1.xpose.msra.mxu0 0.0
    %2397 = vmatprep.subr.mxu0 0.0
    %2398 = vmatpush1.xpose.msra.mxu0 0.0
    %2399 = vmatprep.subr.mxu0 0.0
    %2400 = vmatpush1.xpose.msra.mxu0 0.0
    %2401 = vmatprep.subr.mxu0 0.0
    %2402 = vmatpush1.xpose.msra.mxu0 0.0
    %2403 = vmatprep.subr.mxu0 0.0
    %2404 = vmatpush1.xpose.msra.mxu0 0.0
    %2405 = vmatprep.subr.mxu0 0.0
    %2406 = vmatpush1.xpose.msra.mxu0 0.0
    %2407 = vmatprep.subr.mxu0 0.0
    %2408 = vmatpush1.xpose.msra.mxu0 0.0
    %2409 = vmatprep.subr.mxu0 0.0
    %2410 = vmatpush1.xpose.msra.mxu0 0.0
    %2411 = vmatprep.subr.mxu0 0.0
    %2412 = vmatpush1.xpose.msra.mxu0 0.0
    %2413 = vmatprep.subr.mxu0 0.0
    %2414 = vmatpush1.xpose.msra.mxu0 0.0
    %2415 = vmatprep.subr.mxu0 0.0
    %2416 = vmatpush1.xpose.msra.mxu0 0.0
    %2417 = vmatprep.subr.mxu0 0.0
    %2418 = vmatpush1.xpose.msra.mxu0 0.0
    %2419 = vmatprep.subr.mxu0 0.0
    %2420 = vmatpush1.xpose.msra.mxu0 0.0
    %2421 = vmatprep.mubr.f32.mxu0 0.0
    %2422 = vmatmul.mubr.f32.gmra.mrb[0].mxu0 %v2356
    %v2423 = vpop.f32.mrb[0].mxu0
    %v2424 = vadd.f32 0.0, %v2423
    %v2425 = vpop.f32.mrb[0].mxu0
    %2426 = vdwg.mxu0
    %2427 = vadd.xlane.f32.xlu0 %v2356
    %v2428 = vpop.xlane.xlu0 %2427
    %v2429 = vmax.f32 %v2428, 1.0
    %v2430 = vrcp.pop %v2429
    %v2431 = vmul.f32 %v2424, %v2430
    %vm2432 = vcmp.gt.f32.partialorder %v2428, 0.0
    %v2433 = vsel %vm2432, 1, 0
    %vm2434 = vcmp.eq.s32.totalorder %v2433, 1
    %v2435 = vsel %vm2434, %v2431, %v2211
    %v2437 = vsel %vm1763, %v2435, 0
    %2439 = vmatprep.subr.mxu0 0.0
    %2440 = vmatpush1.msra.mxu0 %v1689
    %2441 = vmatprep.subr.mxu0 0.0
    %2442 = vmatpush1.msra.mxu0 0.0
    %2443 = vmatprep.subr.mxu0 0.0
    %2444 = vmatpush1.msra.mxu0 0.0
    %2445 = vmatprep.subr.mxu0 0.0
    %2446 = vmatpush1.msra.mxu0 0.0
    %2447 = vmatprep.subr.mxu0 0.0
    %2448 = vmatpush1.msra.mxu0 0.0
    %2449 = vmatprep.subr.mxu0 0.0
    %2450 = vmatpush1.msra.mxu0 0.0
    %2451 = vmatprep.subr.mxu0 0.0
    %2452 = vmatpush1.msra.mxu0 0.0
    %2453 = vmatprep.subr.mxu0 0.0
    %2454 = vmatpush1.msra.mxu0 0.0
    %2455 = vmatprep.subr.mxu0 0.0
    %2456 = vmatpush1.msra.mxu0 0.0
    %2457 = vmatprep.subr.mxu0 0.0
    %2458 = vmatpush1.msra.mxu0 0.0
    %2459 = vmatprep.subr.mxu0 0.0
    %2460 = vmatpush1.msra.mxu0 0.0
    %2461 = vmatprep.subr.mxu0 0.0
    %2462 = vmatpush1.msra.mxu0 0.0
    %2463 = vmatprep.subr.mxu0 0.0
    %2464 = vmatpush1.msra.mxu0 0.0
    %2465 = vmatprep.subr.mxu0 0.0
    %2466 = vmatpush1.msra.mxu0 0.0
    %2467 = vmatprep.subr.mxu0 0.0
    %2468 = vmatpush1.msra.mxu0 0.0
    %2469 = vmatprep.subr.mxu0 0.0
    %2470 = vmatpush1.msra.mxu0 0.0
    %2471 = vmatprep.subr.mxu0 0.0
    %2472 = vmatpush1.msra.mxu0 0.0
    %2473 = vmatprep.subr.mxu0 0.0
    %2474 = vmatpush1.msra.mxu0 0.0
    %2475 = vmatprep.subr.mxu0 0.0
    %2476 = vmatpush1.msra.mxu0 0.0
    %2477 = vmatprep.subr.mxu0 0.0
    %2478 = vmatpush1.msra.mxu0 0.0
    %2479 = vmatprep.subr.mxu0 0.0
    %2480 = vmatpush1.msra.mxu0 0.0
    %2481 = vmatprep.subr.mxu0 0.0
    %2482 = vmatpush1.msra.mxu0 0.0
    %2483 = vmatprep.subr.mxu0 0.0
    %2484 = vmatpush1.msra.mxu0 0.0
    %2485 = vmatprep.subr.mxu0 0.0
    %2486 = vmatpush1.msra.mxu0 0.0
    %2487 = vmatprep.subr.mxu0 0.0
    %2488 = vmatpush1.msra.mxu0 0.0
    %2489 = vmatprep.subr.mxu0 0.0
    %2490 = vmatpush1.msra.mxu0 0.0
    %2491 = vmatprep.subr.mxu0 0.0
    %2492 = vmatpush1.msra.mxu0 0.0
    %2493 = vmatprep.subr.mxu0 0.0
    %2494 = vmatpush1.msra.mxu0 0.0
    %2495 = vmatprep.subr.mxu0 0.0
    %2496 = vmatpush1.msra.mxu0 0.0
    %2497 = vmatprep.subr.mxu0 0.0
    %2498 = vmatpush1.msra.mxu0 0.0
    %2499 = vmatprep.subr.mxu0 0.0
    %2500 = vmatpush1.msra.mxu0 0.0
    %2501 = vmatprep.subr.mxu0 0.0
    %2502 = vmatpush1.msra.mxu0 0.0
    %2503 = vmatprep.mubr.f32.mxu0 0.0
    %2504 = vmatmul.mubr.f32.gmra.mrb[0].mxu0 %v2437
    %v2505 = vpop.f32.mrb[0].mxu0
    %v2506 = vadd.f32 0.0, %v2505
    %v2507 = vpop.f32.mrb[0].mxu0
    %2508 = vdwg.mxu0
    %v2509 = vmul.f32 %v2435, %v2435
    %v2510 = vsel %vm1763, %v2509, 0.0
    %2511 = vadd.xlane.f32.xlu0 %v2510
    %v2512 = vpop.xlane.xlu0 %2511
    %v2513 = vmul.f32 %v2506, 2.0
    %v2514 = vsub.f32 %v2512, %v2513
    %v2516 = vrot.slane %v2514, 7
    %vm2518 = vcmp.lt.f32.partialorder %v2514, %v2516
    %v2519 = vsel %vm2518, %v2514, %v2516
    %v2520 = vsel %vm2518, 1.0, 0.0
    %v2522 = vrot.slane %v2519, 7
    %vm2524 = vcmp.lt.f32.partialorder %v2514, %v2522
    %v2525 = vsel %vm2524, %v2514, %v2522
    %v2527 = vrot.slane %v2520, 7
    %v2529 = vsel %vm2524, 2.0, %v2527
    %v2531 = vrot.slane %v2525, 7
    %vm2533 = vcmp.lt.f32.partialorder %v2514, %v2531
    %v2534 = vsel %vm2533, %v2514, %v2531
    %v2536 = vrot.slane %v2529, 7
    %v2538 = vsel %vm2533, 3.0, %v2536
    %v2540 = vrot.slane %v2534, 7
    %vm2542 = vcmp.lt.f32.partialorder %v2514, %v2540
    %v2543 = vsel %vm2542, %v2514, %v2540
    %v2545 = vrot.slane %v2538, 7
    %v2547 = vsel %vm2542, 4.0, %v2545
    %v2549 = vrot.slane %v2543, 7
    %vm2551 = vcmp.lt.f32.partialorder %v2514, %v2549
    %v2552 = vsel %vm2551, %v2514, %v2549
    %v2554 = vrot.slane %v2547, 7
    %v2556 = vsel %vm2551, 5.0, %v2554
    %v2558 = vrot.slane %v2552, 7
    %vm2560 = vcmp.lt.f32.partialorder %v2514, %v2558
    %v2561 = vsel %vm2560, %v2514, %v2558
    %v2563 = vrot.slane %v2556, 7
    %v2565 = vsel %vm2560, 6.0, %v2563
    %v2567 = vrot.slane %v2561, 7
    %vm2569 = vcmp.lt.f32.partialorder %v2514, %v2567
    %v2571 = vrot.slane %v2565, 7
    %v2573 = vsel %vm2569, 7.0, %v2571
    %v2574 = vlaneseq
    %v2575 = vshrl.u32 %v2574, 7
    %v2576 = vsub.s32 7, %v2575
    %v2577 = vrot.slane %v2573, %v2576
    %vm2578 = vcmp.eq.f32.partialorder %v2577, %v1762
    %v2579 = vsel %vm2578, 1, 0
    %v2580 = vcvt.s32.f32 %v2579
    %2581 = vmatprep.subr.mxu0 0.0
    %2582 = vmatpush1.xpose.msra.mxu0 %v1689
    %2583 = vmatprep.subr.mxu0 0.0
    %2584 = vmatpush1.xpose.msra.mxu0 0.0
    %2585 = vmatprep.subr.mxu0 0.0
    %2586 = vmatpush1.xpose.msra.mxu0 0.0
    %2587 = vmatprep.subr.mxu0 0.0
    %2588 = vmatpush1.xpose.msra.mxu0 0.0
    %2589 = vmatprep.subr.mxu0 0.0
    %2590 = vmatpush1.xpose.msra.mxu0 0.0
    %2591 = vmatprep.subr.mxu0 0.0
    %2592 = vmatpush1.xpose.msra.mxu0 0.0
    %2593 = vmatprep.subr.mxu0 0.0
    %2594 = vmatpush1.xpose.msra.mxu0 0.0
    %2595 = vmatprep.subr.mxu0 0.0
    %2596 = vmatpush1.xpose.msra.mxu0 0.0
    %2597 = vmatprep.subr.mxu0 0.0
    %2598 = vmatpush1.xpose.msra.mxu0 0.0
    %2599 = vmatprep.subr.mxu0 0.0
    %2600 = vmatpush1.xpose.msra.mxu0 0.0
    %2601 = vmatprep.subr.mxu0 0.0
    %2602 = vmatpush1.xpose.msra.mxu0 0.0
    %2603 = vmatprep.subr.mxu0 0.0
    %2604 = vmatpush1.xpose.msra.mxu0 0.0
    %2605 = vmatprep.subr.mxu0 0.0
    %2606 = vmatpush1.xpose.msra.mxu0 0.0
    %2607 = vmatprep.subr.mxu0 0.0
    %2608 = vmatpush1.xpose.msra.mxu0 0.0
    %2609 = vmatprep.subr.mxu0 0.0
    %2610 = vmatpush1.xpose.msra.mxu0 0.0
    %2611 = vmatprep.subr.mxu0 0.0
    %2612 = vmatpush1.xpose.msra.mxu0 0.0
    %2613 = vmatprep.subr.mxu0 0.0
    %2614 = vmatpush1.xpose.msra.mxu0 0.0
    %2615 = vmatprep.subr.mxu0 0.0
    %2616 = vmatpush1.xpose.msra.mxu0 0.0
    %2617 = vmatprep.subr.mxu0 0.0
    %2618 = vmatpush1.xpose.msra.mxu0 0.0
    %2619 = vmatprep.subr.mxu0 0.0
    %2620 = vmatpush1.xpose.msra.mxu0 0.0
    %2621 = vmatprep.subr.mxu0 0.0
    %2622 = vmatpush1.xpose.msra.mxu0 0.0
    %2623 = vmatprep.subr.mxu0 0.0
    %2624 = vmatpush1.xpose.msra.mxu0 0.0
    %2625 = vmatprep.subr.mxu0 0.0
    %2626 = vmatpush1.xpose.msra.mxu0 0.0
    %2627 = vmatprep.subr.mxu0 0.0
    %2628 = vmatpush1.xpose.msra.mxu0 0.0
    %2629 = vmatprep.subr.mxu0 0.0
    %2630 = vmatpush1.xpose.msra.mxu0 0.0
    %2631 = vmatprep.subr.mxu0 0.0
    %2632 = vmatpush1.xpose.msra.mxu0 0.0
    %2633 = vmatprep.subr.mxu0 0.0
    %2634 = vmatpush1.xpose.msra.mxu0 0.0
    %2635 = vmatprep.subr.mxu0 0.0
    %2636 = vmatpush1.xpose.msra.mxu0 0.0
    %2637 = vmatprep.subr.mxu0 0.0
    %2638 = vmatpush1.xpose.msra.mxu0 0.0
    %2639 = vmatprep.subr.mxu0 0.0
    %2640 = vmatpush1.xpose.msra.mxu0 0.0
    %2641 = vmatprep.subr.mxu0 0.0
    %2642 = vmatpush1.xpose.msra.mxu0 0.0
    %2643 = vmatprep.subr.mxu0 0.0
    %2644 = vmatpush1.xpose.msra.mxu0 0.0
    %2645 = vmatprep.mubr.f32.mxu0 0.0
    %2646 = vmatmul.mubr.f32.gmra.mrb[0].mxu0 %v2580
    %v2647 = vpop.f32.mrb[0].mxu0
    %v2648 = vadd.f32 0.0, %v2647
    %v2649 = vpop.f32.mrb[0].mxu0
    %2650 = vdwg.mxu0
    %2651 = vadd.xlane.f32.xlu0 %v2580
    %v2652 = vpop.xlane.xlu0 %2651
    %v2653 = vmax.f32 %v2652, 1.0
    %v2654 = vrcp.pop %v2653
    %v2655 = vmul.f32 %v2648, %v2654
    %vm2656 = vcmp.gt.f32.partialorder %v2652, 0.0
    %v2657 = vsel %vm2656, 1, 0
    %vm2658 = vcmp.eq.s32.totalorder %v2657, 1
    %v2659 = vsel %vm2658, %v2655, %v2435
    %v2661 = vsel %vm1763, %v2659, 0
    %2663 = vmatprep.subr.mxu0 0.0
    %2664 = vmatpush1.msra.mxu0 %v1689
    %2665 = vmatprep.subr.mxu0 0.0
    %2666 = vmatpush1.msra.mxu0 0.0
    %2667 = vmatprep.subr.mxu0 0.0
    %2668 = vmatpush1.msra.mxu0 0.0
    %2669 = vmatprep.subr.mxu0 0.0
    %2670 = vmatpush1.msra.mxu0 0.0
    %2671 = vmatprep.subr.mxu0 0.0
    %2672 = vmatpush1.msra.mxu0 0.0
    %2673 = vmatprep.subr.mxu0 0.0
    %2674 = vmatpush1.msra.mxu0 0.0
    %2675 = vmatprep.subr.mxu0 0.0
    %2676 = vmatpush1.msra.mxu0 0.0
    %2677 = vmatprep.subr.mxu0 0.0
    %2678 = vmatpush1.msra.mxu0 0.0
    %2679 = vmatprep.subr.mxu0 0.0
    %2680 = vmatpush1.msra.mxu0 0.0
    %2681 = vmatprep.subr.mxu0 0.0
    %2682 = vmatpush1.msra.mxu0 0.0
    %2683 = vmatprep.subr.mxu0 0.0
    %2684 = vmatpush1.msra.mxu0 0.0
    %2685 = vmatprep.subr.mxu0 0.0
    %2686 = vmatpush1.msra.mxu0 0.0
    %2687 = vmatprep.subr.mxu0 0.0
    %2688 = vmatpush1.msra.mxu0 0.0
    %2689 = vmatprep.subr.mxu0 0.0
    %2690 = vmatpush1.msra.mxu0 0.0
    %2691 = vmatprep.subr.mxu0 0.0
    %2692 = vmatpush1.msra.mxu0 0.0
    %2693 = vmatprep.subr.mxu0 0.0
    %2694 = vmatpush1.msra.mxu0 0.0
    %2695 = vmatprep.subr.mxu0 0.0
    %2696 = vmatpush1.msra.mxu0 0.0
    %2697 = vmatprep.subr.mxu0 0.0
    %2698 = vmatpush1.msra.mxu0 0.0
    %2699 = vmatprep.subr.mxu0 0.0
    %2700 = vmatpush1.msra.mxu0 0.0
    %2701 = vmatprep.subr.mxu0 0.0
    %2702 = vmatpush1.msra.mxu0 0.0
    %2703 = vmatprep.subr.mxu0 0.0
    %2704 = vmatpush1.msra.mxu0 0.0
    %2705 = vmatprep.subr.mxu0 0.0
    %2706 = vmatpush1.msra.mxu0 0.0
    %2707 = vmatprep.subr.mxu0 0.0
    %2708 = vmatpush1.msra.mxu0 0.0
    %2709 = vmatprep.subr.mxu0 0.0
    %2710 = vmatpush1.msra.mxu0 0.0
    %2711 = vmatprep.subr.mxu0 0.0
    %2712 = vmatpush1.msra.mxu0 0.0
    %2713 = vmatprep.subr.mxu0 0.0
    %2714 = vmatpush1.msra.mxu0 0.0
    %2715 = vmatprep.subr.mxu0 0.0
    %2716 = vmatpush1.msra.mxu0 0.0
    %2717 = vmatprep.subr.mxu0 0.0
    %2718 = vmatpush1.msra.mxu0 0.0
    %2719 = vmatprep.subr.mxu0 0.0
    %2720 = vmatpush1.msra.mxu0 0.0
    %2721 = vmatprep.subr.mxu0 0.0
    %2722 = vmatpush1.msra.mxu0 0.0
    %2723 = vmatprep.subr.mxu0 0.0
    %2724 = vmatpush1.msra.mxu0 0.0
    %2725 = vmatprep.subr.mxu0 0.0
    %2726 = vmatpush1.msra.mxu0 0.0
    %2727 = vmatprep.mubr.f32.mxu0 0.0
    %2728 = vmatmul.mubr.f32.gmra.mrb[0].mxu0 %v2661
    %v2729 = vpop.f32.mrb[0].mxu0
    %v2730 = vadd.f32 0.0, %v2729
    %v2731 = vpop.f32.mrb[0].mxu0
    %2732 = vdwg.mxu0
    %v2733 = vmul.f32 %v2659, %v2659
    %v2734 = vsel %vm1763, %v2733, 0.0
    %2735 = vadd.xlane.f32.xlu0 %v2734
    %v2736 = vpop.xlane.xlu0 %2735
    %v2737 = vmul.f32 %v2730, 2.0
    %v2738 = vsub.f32 %v2736, %v2737
    %v2740 = vrot.slane %v2738, 7
    %vm2742 = vcmp.lt.f32.partialorder %v2738, %v2740
    %v2743 = vsel %vm2742, %v2738, %v2740
    %v2744 = vsel %vm2742, 1.0, 0.0
    %v2746 = vrot.slane %v2743, 7
    %vm2748 = vcmp.lt.f32.partialorder %v2738, %v2746
    %v2749 = vsel %vm2748, %v2738, %v2746
    %v2751 = vrot.slane %v2744, 7
    %v2753 = vsel %vm2748, 2.0, %v2751
    %v2755 = vrot.slane %v2749, 7
    %vm2757 = vcmp.lt.f32.partialorder %v2738, %v2755
    %v2758 = vsel %vm2757, %v2738, %v2755
    %v2760 = vrot.slane %v2753, 7
    %v2762 = vsel %vm2757, 3.0, %v2760
    %v2764 = vrot.slane %v2758, 7
    %vm2766 = vcmp.lt.f32.partialorder %v2738, %v2764
    %v2767 = vsel %vm2766, %v2738, %v2764
    %v2769 = vrot.slane %v2762, 7
    %v2771 = vsel %vm2766, 4.0, %v2769
    %v2773 = vrot.slane %v2767, 7
    %vm2775 = vcmp.lt.f32.partialorder %v2738, %v2773
    %v2776 = vsel %vm2775, %v2738, %v2773
    %v2778 = vrot.slane %v2771, 7
    %v2780 = vsel %vm2775, 5.0, %v2778
    %v2782 = vrot.slane %v2776, 7
    %vm2784 = vcmp.lt.f32.partialorder %v2738, %v2782
    %v2785 = vsel %vm2784, %v2738, %v2782
    %v2787 = vrot.slane %v2780, 7
    %v2789 = vsel %vm2784, 6.0, %v2787
    %v2791 = vrot.slane %v2785, 7
    %vm2793 = vcmp.lt.f32.partialorder %v2738, %v2791
    %v2795 = vrot.slane %v2789, 7
    %v2797 = vsel %vm2793, 7.0, %v2795
    %v2798 = vlaneseq
    %v2799 = vshrl.u32 %v2798, 7
    %v2800 = vsub.s32 7, %v2799
    %v2801 = vrot.slane %v2797, %v2800
    %vm2802 = vcmp.eq.f32.partialorder %v2801, %v1762
    %v2803 = vsel %vm2802, 1, 0
    %v2804 = vcvt.s32.f32 %v2803
    %2805 = vmatprep.subr.mxu0 0.0
    %2806 = vmatpush1.xpose.msra.mxu0 %v1689
    %2807 = vmatprep.subr.mxu0 0.0
    %2808 = vmatpush1.xpose.msra.mxu0 0.0
    %2809 = vmatprep.subr.mxu0 0.0
    %2810 = vmatpush1.xpose.msra.mxu0 0.0
    %2811 = vmatprep.subr.mxu0 0.0
    %2812 = vmatpush1.xpose.msra.mxu0 0.0
    %2813 = vmatprep.subr.mxu0 0.0
    %2814 = vmatpush1.xpose.msra.mxu0 0.0
    %2815 = vmatprep.subr.mxu0 0.0
    %2816 = vmatpush1.xpose.msra.mxu0 0.0
    %2817 = vmatprep.subr.mxu0 0.0
    %2818 = vmatpush1.xpose.msra.mxu0 0.0
    %2819 = vmatprep.subr.mxu0 0.0
    %2820 = vmatpush1.xpose.msra.mxu0 0.0
    %2821 = vmatprep.subr.mxu0 0.0
    %2822 = vmatpush1.xpose.msra.mxu0 0.0
    %2823 = vmatprep.subr.mxu0 0.0
    %2824 = vmatpush1.xpose.msra.mxu0 0.0
    %2825 = vmatprep.subr.mxu0 0.0
    %2826 = vmatpush1.xpose.msra.mxu0 0.0
    %2827 = vmatprep.subr.mxu0 0.0
    %2828 = vmatpush1.xpose.msra.mxu0 0.0
    %2829 = vmatprep.subr.mxu0 0.0
    %2830 = vmatpush1.xpose.msra.mxu0 0.0
    %2831 = vmatprep.subr.mxu0 0.0
    %2832 = vmatpush1.xpose.msra.mxu0 0.0
    %2833 = vmatprep.subr.mxu0 0.0
    %2834 = vmatpush1.xpose.msra.mxu0 0.0
    %2835 = vmatprep.subr.mxu0 0.0
    %2836 = vmatpush1.xpose.msra.mxu0 0.0
    %2837 = vmatprep.subr.mxu0 0.0
    %2838 = vmatpush1.xpose.msra.mxu0 0.0
    %2839 = vmatprep.subr.mxu0 0.0
    %2840 = vmatpush1.xpose.msra.mxu0 0.0
    %2841 = vmatprep.subr.mxu0 0.0
    %2842 = vmatpush1.xpose.msra.mxu0 0.0
    %2843 = vmatprep.subr.mxu0 0.0
    %2844 = vmatpush1.xpose.msra.mxu0 0.0
    %2845 = vmatprep.subr.mxu0 0.0
    %2846 = vmatpush1.xpose.msra.mxu0 0.0
    %2847 = vmatprep.subr.mxu0 0.0
    %2848 = vmatpush1.xpose.msra.mxu0 0.0
    %2849 = vmatprep.subr.mxu0 0.0
    %2850 = vmatpush1.xpose.msra.mxu0 0.0
    %2851 = vmatprep.subr.mxu0 0.0
    %2852 = vmatpush1.xpose.msra.mxu0 0.0
    %2853 = vmatprep.subr.mxu0 0.0
    %2854 = vmatpush1.xpose.msra.mxu0 0.0
    %2855 = vmatprep.subr.mxu0 0.0
    %2856 = vmatpush1.xpose.msra.mxu0 0.0
    %2857 = vmatprep.subr.mxu0 0.0
    %2858 = vmatpush1.xpose.msra.mxu0 0.0
    %2859 = vmatprep.subr.mxu0 0.0
    %2860 = vmatpush1.xpose.msra.mxu0 0.0
    %2861 = vmatprep.subr.mxu0 0.0
    %2862 = vmatpush1.xpose.msra.mxu0 0.0
    %2863 = vmatprep.subr.mxu0 0.0
    %2864 = vmatpush1.xpose.msra.mxu0 0.0
    %2865 = vmatprep.subr.mxu0 0.0
    %2866 = vmatpush1.xpose.msra.mxu0 0.0
    %2867 = vmatprep.subr.mxu0 0.0
    %2868 = vmatpush1.xpose.msra.mxu0 0.0
    %2869 = vmatprep.mubr.f32.mxu0 0.0
    %2870 = vmatmul.mubr.f32.gmra.mrb[0].mxu0 %v2804
    %v2871 = vpop.f32.mrb[0].mxu0
    %v2872 = vadd.f32 0.0, %v2871
    %v2873 = vpop.f32.mrb[0].mxu0
    %2874 = vdwg.mxu0
    %2875 = vadd.xlane.f32.xlu0 %v2804
    %v2876 = vpop.xlane.xlu0 %2875
    %v2877 = vmax.f32 %v2876, 1.0
    %v2878 = vrcp.pop %v2877
    %v2879 = vmul.f32 %v2872, %v2878
    %vm2880 = vcmp.gt.f32.partialorder %v2876, 0.0
    %v2881 = vsel %vm2880, 1, 0
    %vm2882 = vcmp.eq.s32.totalorder %v2881, 1
    %v2883 = vsel %vm2882, %v2879, %v2659
    %v2885 = vsel %vm1763, %v2883, 0
    %2887 = vmatprep.subr.mxu0 0.0
    %2888 = vmatpush1.msra.mxu0 %v1689
    %2889 = vmatprep.subr.mxu0 0.0
    %2890 = vmatpush1.msra.mxu0 0.0
    %2891 = vmatprep.subr.mxu0 0.0
    %2892 = vmatpush1.msra.mxu0 0.0
    %2893 = vmatprep.subr.mxu0 0.0
    %2894 = vmatpush1.msra.mxu0 0.0
    %2895 = vmatprep.subr.mxu0 0.0
    %2896 = vmatpush1.msra.mxu0 0.0
    %2897 = vmatprep.subr.mxu0 0.0
    %2898 = vmatpush1.msra.mxu0 0.0
    %2899 = vmatprep.subr.mxu0 0.0
    %2900 = vmatpush1.msra.mxu0 0.0
    %2901 = vmatprep.subr.mxu0 0.0
    %2902 = vmatpush1.msra.mxu0 0.0
    %2903 = vmatprep.subr.mxu0 0.0
    %2904 = vmatpush1.msra.mxu0 0.0
    %2905 = vmatprep.subr.mxu0 0.0
    %2906 = vmatpush1.msra.mxu0 0.0
    %2907 = vmatprep.subr.mxu0 0.0
    %2908 = vmatpush1.msra.mxu0 0.0
    %2909 = vmatprep.subr.mxu0 0.0
    %2910 = vmatpush1.msra.mxu0 0.0
    %2911 = vmatprep.subr.mxu0 0.0
    %2912 = vmatpush1.msra.mxu0 0.0
    %2913 = vmatprep.subr.mxu0 0.0
    %2914 = vmatpush1.msra.mxu0 0.0
    %2915 = vmatprep.subr.mxu0 0.0
    %2916 = vmatpush1.msra.mxu0 0.0
    %2917 = vmatprep.subr.mxu0 0.0
    %2918 = vmatpush1.msra.mxu0 0.0
    %2919 = vmatprep.subr.mxu0 0.0
    %2920 = vmatpush1.msra.mxu0 0.0
    %2921 = vmatprep.subr.mxu0 0.0
    %2922 = vmatpush1.msra.mxu0 0.0
    %2923 = vmatprep.subr.mxu0 0.0
    %2924 = vmatpush1.msra.mxu0 0.0
    %2925 = vmatprep.subr.mxu0 0.0
    %2926 = vmatpush1.msra.mxu0 0.0
    %2927 = vmatprep.subr.mxu0 0.0
    %2928 = vmatpush1.msra.mxu0 0.0
    %2929 = vmatprep.subr.mxu0 0.0
    %2930 = vmatpush1.msra.mxu0 0.0
    %2931 = vmatprep.subr.mxu0 0.0
    %2932 = vmatpush1.msra.mxu0 0.0
    %2933 = vmatprep.subr.mxu0 0.0
    %2934 = vmatpush1.msra.mxu0 0.0
    %2935 = vmatprep.subr.mxu0 0.0
    %2936 = vmatpush1.msra.mxu0 0.0
    %2937 = vmatprep.subr.mxu0 0.0
    %2938 = vmatpush1.msra.mxu0 0.0
    %2939 = vmatprep.subr.mxu0 0.0
    %2940 = vmatpush1.msra.mxu0 0.0
    %2941 = vmatprep.subr.mxu0 0.0
    %2942 = vmatpush1.msra.mxu0 0.0
    %2943 = vmatprep.subr.mxu0 0.0
    %2944 = vmatpush1.msra.mxu0 0.0
    %2945 = vmatprep.subr.mxu0 0.0
    %2946 = vmatpush1.msra.mxu0 0.0
    %2947 = vmatprep.subr.mxu0 0.0
    %2948 = vmatpush1.msra.mxu0 0.0
    %2949 = vmatprep.subr.mxu0 0.0
    %2950 = vmatpush1.msra.mxu0 0.0
    %2951 = vmatprep.mubr.f32.mxu0 0.0
    %2952 = vmatmul.mubr.f32.gmra.mrb[0].mxu0 %v2885
    %v2953 = vpop.f32.mrb[0].mxu0
    %v2954 = vadd.f32 0.0, %v2953
    %v2955 = vpop.f32.mrb[0].mxu0
    %2956 = vdwg.mxu0
    %v2957 = vmul.f32 %v2883, %v2883
    %v2958 = vsel %vm1763, %v2957, 0.0
    %2959 = vadd.xlane.f32.xlu0 %v2958
    %v2960 = vpop.xlane.xlu0 %2959
    %v2961 = vmul.f32 %v2954, 2.0
    %v2962 = vsub.f32 %v2960, %v2961
    %v2964 = vrot.slane %v2962, 7
    %vm2966 = vcmp.lt.f32.partialorder %v2962, %v2964
    %v2967 = vsel %vm2966, %v2962, %v2964
    %v2968 = vsel %vm2966, 1.0, 0.0
    %v2970 = vrot.slane %v2967, 7
    %vm2972 = vcmp.lt.f32.partialorder %v2962, %v2970
    %v2973 = vsel %vm2972, %v2962, %v2970
    %v2975 = vrot.slane %v2968, 7
    %v2977 = vsel %vm2972, 2.0, %v2975
    %v2979 = vrot.slane %v2973, 7
    %vm2981 = vcmp.lt.f32.partialorder %v2962, %v2979
    %v2982 = vsel %vm2981, %v2962, %v2979
    %v2984 = vrot.slane %v2977, 7
    %v2986 = vsel %vm2981, 3.0, %v2984
    %v2988 = vrot.slane %v2982, 7
    %vm2990 = vcmp.lt.f32.partialorder %v2962, %v2988
    %v2991 = vsel %vm2990, %v2962, %v2988
    %v2993 = vrot.slane %v2986, 7
    %v2995 = vsel %vm2990, 4.0, %v2993
    %v2997 = vrot.slane %v2991, 7
    %vm2999 = vcmp.lt.f32.partialorder %v2962, %v2997
    %v3000 = vsel %vm2999, %v2962, %v2997
    %v3002 = vrot.slane %v2995, 7
    %v3004 = vsel %vm2999, 5.0, %v3002
    %v3006 = vrot.slane %v3000, 7
    %vm3008 = vcmp.lt.f32.partialorder %v2962, %v3006
    %v3009 = vsel %vm3008, %v2962, %v3006
    %v3011 = vrot.slane %v3004, 7
    %v3013 = vsel %vm3008, 6.0, %v3011
    %v3015 = vrot.slane %v3009, 7
    %vm3017 = vcmp.lt.f32.partialorder %v2962, %v3015
    %v3019 = vrot.slane %v3013, 7
    %v3021 = vsel %vm3017, 7.0, %v3019
    %v3022 = vlaneseq
    %v3023 = vshrl.u32 %v3022, 7
    %v3024 = vsub.s32 7, %v3023
    %v3025 = vrot.slane %v3021, %v3024
    %vm3026 = vcmp.eq.f32.partialorder %v3025, %v1762
    %v3027 = vsel %vm3026, 1, 0
    %v3028 = vcvt.s32.f32 %v3027
    %3029 = vmatprep.subr.mxu0 0.0
    %3030 = vmatpush1.xpose.msra.mxu0 %v1689
    %3031 = vmatprep.subr.mxu0 0.0
    %3032 = vmatpush1.xpose.msra.mxu0 0.0
    %3033 = vmatprep.subr.mxu0 0.0
    %3034 = vmatpush1.xpose.msra.mxu0 0.0
    %3035 = vmatprep.subr.mxu0 0.0
    %3036 = vmatpush1.xpose.msra.mxu0 0.0
    %3037 = vmatprep.subr.mxu0 0.0
    %3038 = vmatpush1.xpose.msra.mxu0 0.0
    %3039 = vmatprep.subr.mxu0 0.0
    %3040 = vmatpush1.xpose.msra.mxu0 0.0
    %3041 = vmatprep.subr.mxu0 0.0
    %3042 = vmatpush1.xpose.msra.mxu0 0.0
    %3043 = vmatprep.subr.mxu0 0.0
    %3044 = vmatpush1.xpose.msra.mxu0 0.0
    %3045 = vmatprep.subr.mxu0 0.0
    %3046 = vmatpush1.xpose.msra.mxu0 0.0
    %3047 = vmatprep.subr.mxu0 0.0
    %3048 = vmatpush1.xpose.msra.mxu0 0.0
    %3049 = vmatprep.subr.mxu0 0.0
    %3050 = vmatpush1.xpose.msra.mxu0 0.0
    %3051 = vmatprep.subr.mxu0 0.0
    %3052 = vmatpush1.xpose.msra.mxu0 0.0
    %3053 = vmatprep.subr.mxu0 0.0
    %3054 = vmatpush1.xpose.msra.mxu0 0.0
    %3055 = vmatprep.subr.mxu0 0.0
    %3056 = vmatpush1.xpose.msra.mxu0 0.0
    %3057 = vmatprep.subr.mxu0 0.0
    %3058 = vmatpush1.xpose.msra.mxu0 0.0
    %3059 = vmatprep.subr.mxu0 0.0
    %3060 = vmatpush1.xpose.msra.mxu0 0.0
    %3061 = vmatprep.subr.mxu0 0.0
    %3062 = vmatpush1.xpose.msra.mxu0 0.0
    %3063 = vmatprep.subr.mxu0 0.0
    %3064 = vmatpush1.xpose.msra.mxu0 0.0
    %3065 = vmatprep.subr.mxu0 0.0
    %3066 = vmatpush1.xpose.msra.mxu0 0.0
    %3067 = vmatprep.subr.mxu0 0.0
    %3068 = vmatpush1.xpose.msra.mxu0 0.0
    %3069 = vmatprep.subr.mxu0 0.0
    %3070 = vmatpush1.xpose.msra.mxu0 0.0
    %3071 = vmatprep.subr.mxu0 0.0
    %3072 = vmatpush1.xpose.msra.mxu0 0.0
    %3073 = vmatprep.subr.mxu0 0.0
    %3074 = vmatpush1.xpose.msra.mxu0 0.0
    %3075 = vmatprep.subr.mxu0 0.0
    %3076 = vmatpush1.xpose.msra.mxu0 0.0
    %3077 = vmatprep.subr.mxu0 0.0
    %3078 = vmatpush1.xpose.msra.mxu0 0.0
    %3079 = vmatprep.subr.mxu0 0.0
    %3080 = vmatpush1.xpose.msra.mxu0 0.0
    %3081 = vmatprep.subr.mxu0 0.0
    %3082 = vmatpush1.xpose.msra.mxu0 0.0
    %3083 = vmatprep.subr.mxu0 0.0
    %3084 = vmatpush1.xpose.msra.mxu0 0.0
    %3085 = vmatprep.subr.mxu0 0.0
    %3086 = vmatpush1.xpose.msra.mxu0 0.0
    %3087 = vmatprep.subr.mxu0 0.0
    %3088 = vmatpush1.xpose.msra.mxu0 0.0
    %3089 = vmatprep.subr.mxu0 0.0
    %3090 = vmatpush1.xpose.msra.mxu0 0.0
    %3091 = vmatprep.subr.mxu0 0.0
    %3092 = vmatpush1.xpose.msra.mxu0 0.0
    %3093 = vmatprep.mubr.f32.mxu0 0.0
    %3094 = vmatmul.mubr.f32.gmra.mrb[0].mxu0 %v3028
    %v3095 = vpop.f32.mrb[0].mxu0
    %v3096 = vadd.f32 0.0, %v3095
    %v3097 = vpop.f32.mrb[0].mxu0
    %3098 = vdwg.mxu0
    %3099 = vadd.xlane.f32.xlu0 %v3028
    %v3100 = vpop.xlane.xlu0 %3099
    %v3101 = vmax.f32 %v3100, 1.0
    %v3102 = vrcp.pop %v3101
    %v3103 = vmul.f32 %v3096, %v3102
    %vm3104 = vcmp.gt.f32.partialorder %v3100, 0.0
    %v3105 = vsel %vm3104, 1, 0
    %vm3106 = vcmp.eq.s32.totalorder %v3105, 1
    %v3107 = vsel %vm3106, %v3103, %v2883
    %v3109 = vsel %vm1763, %v3107, 0
    %3111 = vmatprep.subr.mxu0 0.0
    %3112 = vmatpush1.msra.mxu0 %v1689
    %3113 = vmatprep.subr.mxu0 0.0
    %3114 = vmatpush1.msra.mxu0 0.0
    %3115 = vmatprep.subr.mxu0 0.0
    %3116 = vmatpush1.msra.mxu0 0.0
    %3117 = vmatprep.subr.mxu0 0.0
    %3118 = vmatpush1.msra.mxu0 0.0
    %3119 = vmatprep.subr.mxu0 0.0
    %3120 = vmatpush1.msra.mxu0 0.0
    %3121 = vmatprep.subr.mxu0 0.0
    %3122 = vmatpush1.msra.mxu0 0.0
    %3123 = vmatprep.subr.mxu0 0.0
    %3124 = vmatpush1.msra.mxu0 0.0
    %3125 = vmatprep.subr.mxu0 0.0
    %3126 = vmatpush1.msra.mxu0 0.0
    %3127 = vmatprep.subr.mxu0 0.0
    %3128 = vmatpush1.msra.mxu0 0.0
    %3129 = vmatprep.subr.mxu0 0.0
    %3130 = vmatpush1.msra.mxu0 0.0
    %3131 = vmatprep.subr.mxu0 0.0
    %3132 = vmatpush1.msra.mxu0 0.0
    %3133 = vmatprep.subr.mxu0 0.0
    %3134 = vmatpush1.msra.mxu0 0.0
    %3135 = vmatprep.subr.mxu0 0.0
    %3136 = vmatpush1.msra.mxu0 0.0
    %3137 = vmatprep.subr.mxu0 0.0
    %3138 = vmatpush1.msra.mxu0 0.0
    %3139 = vmatprep.subr.mxu0 0.0
    %3140 = vmatpush1.msra.mxu0 0.0
    %3141 = vmatprep.subr.mxu0 0.0
    %3142 = vmatpush1.msra.mxu0 0.0
    %3143 = vmatprep.subr.mxu0 0.0
    %3144 = vmatpush1.msra.mxu0 0.0
    %3145 = vmatprep.subr.mxu0 0.0
    %3146 = vmatpush1.msra.mxu0 0.0
    %3147 = vmatprep.subr.mxu0 0.0
    %3148 = vmatpush1.msra.mxu0 0.0
    %3149 = vmatprep.subr.mxu0 0.0
    %3150 = vmatpush1.msra.mxu0 0.0
    %3151 = vmatprep.subr.mxu0 0.0
    %3152 = vmatpush1.msra.mxu0 0.0
    %3153 = vmatprep.subr.mxu0 0.0
    %3154 = vmatpush1.msra.mxu0 0.0
    %3155 = vmatprep.subr.mxu0 0.0
    %3156 = vmatpush1.msra.mxu0 0.0
    %3157 = vmatprep.subr.mxu0 0.0
    %3158 = vmatpush1.msra.mxu0 0.0
    %3159 = vmatprep.subr.mxu0 0.0
    %3160 = vmatpush1.msra.mxu0 0.0
    %3161 = vmatprep.subr.mxu0 0.0
    %3162 = vmatpush1.msra.mxu0 0.0
    %3163 = vmatprep.subr.mxu0 0.0
    %3164 = vmatpush1.msra.mxu0 0.0
    %3165 = vmatprep.subr.mxu0 0.0
    %3166 = vmatpush1.msra.mxu0 0.0
    %3167 = vmatprep.subr.mxu0 0.0
    %3168 = vmatpush1.msra.mxu0 0.0
    %3169 = vmatprep.subr.mxu0 0.0
    %3170 = vmatpush1.msra.mxu0 0.0
    %3171 = vmatprep.subr.mxu0 0.0
    %3172 = vmatpush1.msra.mxu0 0.0
    %3173 = vmatprep.subr.mxu0 0.0
    %3174 = vmatpush1.msra.mxu0 0.0
    %3175 = vmatprep.mubr.f32.mxu0 0.0
    %3176 = vmatmul.mubr.f32.gmra.mrb[0].mxu0 %v3109
    %v3177 = vpop.f32.mrb[0].mxu0
    %v3178 = vadd.f32 0.0, %v3177
    %v3179 = vpop.f32.mrb[0].mxu0
    %3180 = vdwg.mxu0
    %v3181 = vmul.f32 %v3107, %v3107
    %v3182 = vsel %vm1763, %v3181, 0.0
    %3183 = vadd.xlane.f32.xlu0 %v3182
    %v3184 = vpop.xlane.xlu0 %3183
    %v3185 = vmul.f32 %v3178, 2.0
    %v3186 = vsub.f32 %v3184, %v3185
    %v3188 = vrot.slane %v3186, 7
    %vm3190 = vcmp.lt.f32.partialorder %v3186, %v3188
    %v3191 = vsel %vm3190, %v3186, %v3188
    %v3192 = vsel %vm3190, 1.0, 0.0
    %v3194 = vrot.slane %v3191, 7
    %vm3196 = vcmp.lt.f32.partialorder %v3186, %v3194
    %v3197 = vsel %vm3196, %v3186, %v3194
    %v3199 = vrot.slane %v3192, 7
    %v3201 = vsel %vm3196, 2.0, %v3199
    %v3203 = vrot.slane %v3197, 7
    %vm3205 = vcmp.lt.f32.partialorder %v3186, %v3203
    %v3206 = vsel %vm3205, %v3186, %v3203
    %v3208 = vrot.slane %v3201, 7
    %v3210 = vsel %vm3205, 3.0, %v3208
    %v3212 = vrot.slane %v3206, 7
    %vm3214 = vcmp.lt.f32.partialorder %v3186, %v3212
    %v3215 = vsel %vm3214, %v3186, %v3212
    %v3217 = vrot.slane %v3210, 7
    %v3219 = vsel %vm3214, 4.0, %v3217
    %v3221 = vrot.slane %v3215, 7
    %vm3223 = vcmp.lt.f32.partialorder %v3186, %v3221
    %v3224 = vsel %vm3223, %v3186, %v3221
    %v3226 = vrot.slane %v3219, 7
    %v3228 = vsel %vm3223, 5.0, %v3226
    %v3230 = vrot.slane %v3224, 7
    %vm3232 = vcmp.lt.f32.partialorder %v3186, %v3230
    %v3233 = vsel %vm3232, %v3186, %v3230
    %v3235 = vrot.slane %v3228, 7
    %v3237 = vsel %vm3232, 6.0, %v3235
    %v3239 = vrot.slane %v3233, 7
    %vm3241 = vcmp.lt.f32.partialorder %v3186, %v3239
    %v3243 = vrot.slane %v3237, 7
    %v3245 = vsel %vm3241, 7.0, %v3243
    %v3246 = vlaneseq
    %v3247 = vshrl.u32 %v3246, 7
    %v3248 = vsub.s32 7, %v3247
    %v3249 = vrot.slane %v3245, %v3248
    %vm3250 = vcmp.eq.f32.partialorder %v3249, %v1762
    %v3251 = vsel %vm3250, 1, 0
    %v3252 = vcvt.s32.f32 %v3251
    %3253 = vmatprep.subr.mxu0 0.0
    %3254 = vmatpush1.xpose.msra.mxu0 %v1689
    %3255 = vmatprep.subr.mxu0 0.0
    %3256 = vmatpush1.xpose.msra.mxu0 0.0
    %3257 = vmatprep.subr.mxu0 0.0
    %3258 = vmatpush1.xpose.msra.mxu0 0.0
    %3259 = vmatprep.subr.mxu0 0.0
    %3260 = vmatpush1.xpose.msra.mxu0 0.0
    %3261 = vmatprep.subr.mxu0 0.0
    %3262 = vmatpush1.xpose.msra.mxu0 0.0
    %3263 = vmatprep.subr.mxu0 0.0
    %3264 = vmatpush1.xpose.msra.mxu0 0.0
    %3265 = vmatprep.subr.mxu0 0.0
    %3266 = vmatpush1.xpose.msra.mxu0 0.0
    %3267 = vmatprep.subr.mxu0 0.0
    %3268 = vmatpush1.xpose.msra.mxu0 0.0
    %3269 = vmatprep.subr.mxu0 0.0
    %3270 = vmatpush1.xpose.msra.mxu0 0.0
    %3271 = vmatprep.subr.mxu0 0.0
    %3272 = vmatpush1.xpose.msra.mxu0 0.0
    %3273 = vmatprep.subr.mxu0 0.0
    %3274 = vmatpush1.xpose.msra.mxu0 0.0
    %3275 = vmatprep.subr.mxu0 0.0
    %3276 = vmatpush1.xpose.msra.mxu0 0.0
    %3277 = vmatprep.subr.mxu0 0.0
    %3278 = vmatpush1.xpose.msra.mxu0 0.0
    %3279 = vmatprep.subr.mxu0 0.0
    %3280 = vmatpush1.xpose.msra.mxu0 0.0
    %3281 = vmatprep.subr.mxu0 0.0
    %3282 = vmatpush1.xpose.msra.mxu0 0.0
    %3283 = vmatprep.subr.mxu0 0.0
    %3284 = vmatpush1.xpose.msra.mxu0 0.0
    %3285 = vmatprep.subr.mxu0 0.0
    %3286 = vmatpush1.xpose.msra.mxu0 0.0
    %3287 = vmatprep.subr.mxu0 0.0
    %3288 = vmatpush1.xpose.msra.mxu0 0.0
    %3289 = vmatprep.subr.mxu0 0.0
    %3290 = vmatpush1.xpose.msra.mxu0 0.0
    %3291 = vmatprep.subr.mxu0 0.0
    %3292 = vmatpush1.xpose.msra.mxu0 0.0
    %3293 = vmatprep.subr.mxu0 0.0
    %3294 = vmatpush1.xpose.msra.mxu0 0.0
    %3295 = vmatprep.subr.mxu0 0.0
    %3296 = vmatpush1.xpose.msra.mxu0 0.0
    %3297 = vmatprep.subr.mxu0 0.0
    %3298 = vmatpush1.xpose.msra.mxu0 0.0
    %3299 = vmatprep.subr.mxu0 0.0
    %3300 = vmatpush1.xpose.msra.mxu0 0.0
    %3301 = vmatprep.subr.mxu0 0.0
    %3302 = vmatpush1.xpose.msra.mxu0 0.0
    %3303 = vmatprep.subr.mxu0 0.0
    %3304 = vmatpush1.xpose.msra.mxu0 0.0
    %3305 = vmatprep.subr.mxu0 0.0
    %3306 = vmatpush1.xpose.msra.mxu0 0.0
    %3307 = vmatprep.subr.mxu0 0.0
    %3308 = vmatpush1.xpose.msra.mxu0 0.0
    %3309 = vmatprep.subr.mxu0 0.0
    %3310 = vmatpush1.xpose.msra.mxu0 0.0
    %3311 = vmatprep.subr.mxu0 0.0
    %3312 = vmatpush1.xpose.msra.mxu0 0.0
    %3313 = vmatprep.subr.mxu0 0.0
    %3314 = vmatpush1.xpose.msra.mxu0 0.0
    %3315 = vmatprep.subr.mxu0 0.0
    %3316 = vmatpush1.xpose.msra.mxu0 0.0
    %3317 = vmatprep.mubr.f32.mxu0 0.0
    %3318 = vmatmul.mubr.f32.gmra.mrb[0].mxu0 %v3252
    %v3319 = vpop.f32.mrb[0].mxu0
    %v3320 = vadd.f32 0.0, %v3319
    %v3321 = vpop.f32.mrb[0].mxu0
    %3322 = vdwg.mxu0
    %3323 = vadd.xlane.f32.xlu0 %v3252
    %v3324 = vpop.xlane.xlu0 %3323
    %v3325 = vmax.f32 %v3324, 1.0
    %v3326 = vrcp.pop %v3325
    %v3327 = vmul.f32 %v3320, %v3326
    %vm3328 = vcmp.gt.f32.partialorder %v3324, 0.0
    %v3329 = vsel %vm3328, 1, 0
    %vm3330 = vcmp.eq.s32.totalorder %v3329, 1
    %v3331 = vsel %vm3330, %v3327, %v3107
    %v3333 = vsel %vm1763, %v3331, 0
    %3335 = vmatprep.subr.mxu0 0.0
    %3336 = vmatpush1.msra.mxu0 %v1689
    %3337 = vmatprep.subr.mxu0 0.0
    %3338 = vmatpush1.msra.mxu0 0.0
    %3339 = vmatprep.subr.mxu0 0.0
    %3340 = vmatpush1.msra.mxu0 0.0
    %3341 = vmatprep.subr.mxu0 0.0
    %3342 = vmatpush1.msra.mxu0 0.0
    %3343 = vmatprep.subr.mxu0 0.0
    %3344 = vmatpush1.msra.mxu0 0.0
    %3345 = vmatprep.subr.mxu0 0.0
    %3346 = vmatpush1.msra.mxu0 0.0
    %3347 = vmatprep.subr.mxu0 0.0
    %3348 = vmatpush1.msra.mxu0 0.0
    %3349 = vmatprep.subr.mxu0 0.0
    %3350 = vmatpush1.msra.mxu0 0.0
    %3351 = vmatprep.subr.mxu0 0.0
    %3352 = vmatpush1.msra.mxu0 0.0
    %3353 = vmatprep.subr.mxu0 0.0
    %3354 = vmatpush1.msra.mxu0 0.0
    %3355 = vmatprep.subr.mxu0 0.0
    %3356 = vmatpush1.msra.mxu0 0.0
    %3357 = vmatprep.subr.mxu0 0.0
    %3358 = vmatpush1.msra.mxu0 0.0
    %3359 = vmatprep.subr.mxu0 0.0
    %3360 = vmatpush1.msra.mxu0 0.0
    %3361 = vmatprep.subr.mxu0 0.0
    %3362 = vmatpush1.msra.mxu0 0.0
    %3363 = vmatprep.subr.mxu0 0.0
    %3364 = vmatpush1.msra.mxu0 0.0
    %3365 = vmatprep.subr.mxu0 0.0
    %3366 = vmatpush1.msra.mxu0 0.0
    %3367 = vmatprep.subr.mxu0 0.0
    %3368 = vmatpush1.msra.mxu0 0.0
    %3369 = vmatprep.subr.mxu0 0.0
    %3370 = vmatpush1.msra.mxu0 0.0
    %3371 = vmatprep.subr.mxu0 0.0
    %3372 = vmatpush1.msra.mxu0 0.0
    %3373 = vmatprep.subr.mxu0 0.0
    %3374 = vmatpush1.msra.mxu0 0.0
    %3375 = vmatprep.subr.mxu0 0.0
    %3376 = vmatpush1.msra.mxu0 0.0
    %3377 = vmatprep.subr.mxu0 0.0
    %3378 = vmatpush1.msra.mxu0 0.0
    %3379 = vmatprep.subr.mxu0 0.0
    %3380 = vmatpush1.msra.mxu0 0.0
    %3381 = vmatprep.subr.mxu0 0.0
    %3382 = vmatpush1.msra.mxu0 0.0
    %3383 = vmatprep.subr.mxu0 0.0
    %3384 = vmatpush1.msra.mxu0 0.0
    %3385 = vmatprep.subr.mxu0 0.0
    %3386 = vmatpush1.msra.mxu0 0.0
    %3387 = vmatprep.subr.mxu0 0.0
    %3388 = vmatpush1.msra.mxu0 0.0
    %3389 = vmatprep.subr.mxu0 0.0
    %3390 = vmatpush1.msra.mxu0 0.0
    %3391 = vmatprep.subr.mxu0 0.0
    %3392 = vmatpush1.msra.mxu0 0.0
    %3393 = vmatprep.subr.mxu0 0.0
    %3394 = vmatpush1.msra.mxu0 0.0
    %3395 = vmatprep.subr.mxu0 0.0
    %3396 = vmatpush1.msra.mxu0 0.0
    %3397 = vmatprep.subr.mxu0 0.0
    %3398 = vmatpush1.msra.mxu0 0.0
    %3399 = vmatprep.mubr.f32.mxu0 0.0
    %3400 = vmatmul.mubr.f32.gmra.mrb[0].mxu0 %v3333
    %v3401 = vpop.f32.mrb[0].mxu0
    %v3402 = vadd.f32 0.0, %v3401
    %v3403 = vpop.f32.mrb[0].mxu0
    %3404 = vdwg.mxu0
    %v3405 = vmul.f32 %v3331, %v3331
    %v3406 = vsel %vm1763, %v3405, 0.0
    %3407 = vadd.xlane.f32.xlu0 %v3406
    %v3408 = vpop.xlane.xlu0 %3407
    %v3409 = vmul.f32 %v3402, 2.0
    %v3410 = vsub.f32 %v3408, %v3409
    %v3412 = vrot.slane %v3410, 7
    %vm3414 = vcmp.lt.f32.partialorder %v3410, %v3412
    %v3415 = vsel %vm3414, %v3410, %v3412
    %v3416 = vsel %vm3414, 1.0, 0.0
    %v3418 = vrot.slane %v3415, 7
    %vm3420 = vcmp.lt.f32.partialorder %v3410, %v3418
    %v3421 = vsel %vm3420, %v3410, %v3418
    %v3423 = vrot.slane %v3416, 7
    %v3425 = vsel %vm3420, 2.0, %v3423
    %v3427 = vrot.slane %v3421, 7
    %vm3429 = vcmp.lt.f32.partialorder %v3410, %v3427
    %v3430 = vsel %vm3429, %v3410, %v3427
    %v3432 = vrot.slane %v3425, 7
    %v3434 = vsel %vm3429, 3.0, %v3432
    %v3436 = vrot.slane %v3430, 7
    %vm3438 = vcmp.lt.f32.partialorder %v3410, %v3436
    %v3439 = vsel %vm3438, %v3410, %v3436
    %v3441 = vrot.slane %v3434, 7
    %v3443 = vsel %vm3438, 4.0, %v3441
    %v3445 = vrot.slane %v3439, 7
    %vm3447 = vcmp.lt.f32.partialorder %v3410, %v3445
    %v3448 = vsel %vm3447, %v3410, %v3445
    %v3450 = vrot.slane %v3443, 7
    %v3452 = vsel %vm3447, 5.0, %v3450
    %v3454 = vrot.slane %v3448, 7
    %vm3456 = vcmp.lt.f32.partialorder %v3410, %v3454
    %v3457 = vsel %vm3456, %v3410, %v3454
    %v3459 = vrot.slane %v3452, 7
    %v3461 = vsel %vm3456, 6.0, %v3459
    %v3463 = vrot.slane %v3457, 7
    %vm3465 = vcmp.lt.f32.partialorder %v3410, %v3463
    %v3467 = vrot.slane %v3461, 7
    %v3469 = vsel %vm3465, 7.0, %v3467
    %v3470 = vlaneseq
    %v3471 = vshrl.u32 %v3470, 7
    %v3472 = vsub.s32 7, %v3471
    %v3473 = vrot.slane %v3469, %v3472
    %vm3474 = vcmp.eq.f32.partialorder %v3473, %v1762
    %v3475 = vsel %vm3474, 1, 0
    %v3476 = vcvt.s32.f32 %v3475
    %3477 = vmatprep.subr.mxu0 0.0
    %3478 = vmatpush1.xpose.msra.mxu0 %v1689
    %3479 = vmatprep.subr.mxu0 0.0
    %3480 = vmatpush1.xpose.msra.mxu0 0.0
    %3481 = vmatprep.subr.mxu0 0.0
    %3482 = vmatpush1.xpose.msra.mxu0 0.0
    %3483 = vmatprep.subr.mxu0 0.0
    %3484 = vmatpush1.xpose.msra.mxu0 0.0
    %3485 = vmatprep.subr.mxu0 0.0
    %3486 = vmatpush1.xpose.msra.mxu0 0.0
    %3487 = vmatprep.subr.mxu0 0.0
    %3488 = vmatpush1.xpose.msra.mxu0 0.0
    %3489 = vmatprep.subr.mxu0 0.0
    %3490 = vmatpush1.xpose.msra.mxu0 0.0
    %3491 = vmatprep.subr.mxu0 0.0
    %3492 = vmatpush1.xpose.msra.mxu0 0.0
    %3493 = vmatprep.subr.mxu0 0.0
    %3494 = vmatpush1.xpose.msra.mxu0 0.0
    %3495 = vmatprep.subr.mxu0 0.0
    %3496 = vmatpush1.xpose.msra.mxu0 0.0
    %3497 = vmatprep.subr.mxu0 0.0
    %3498 = vmatpush1.xpose.msra.mxu0 0.0
    %3499 = vmatprep.subr.mxu0 0.0
    %3500 = vmatpush1.xpose.msra.mxu0 0.0
    %3501 = vmatprep.subr.mxu0 0.0
    %3502 = vmatpush1.xpose.msra.mxu0 0.0
    %3503 = vmatprep.subr.mxu0 0.0
    %3504 = vmatpush1.xpose.msra.mxu0 0.0
    %3505 = vmatprep.subr.mxu0 0.0
    %3506 = vmatpush1.xpose.msra.mxu0 0.0
    %3507 = vmatprep.subr.mxu0 0.0
    %3508 = vmatpush1.xpose.msra.mxu0 0.0
    %3509 = vmatprep.subr.mxu0 0.0
    %3510 = vmatpush1.xpose.msra.mxu0 0.0
    %3511 = vmatprep.subr.mxu0 0.0
    %3512 = vmatpush1.xpose.msra.mxu0 0.0
    %3513 = vmatprep.subr.mxu0 0.0
    %3514 = vmatpush1.xpose.msra.mxu0 0.0
    %3515 = vmatprep.subr.mxu0 0.0
    %3516 = vmatpush1.xpose.msra.mxu0 0.0
    %3517 = vmatprep.subr.mxu0 0.0
    %3518 = vmatpush1.xpose.msra.mxu0 0.0
    %3519 = vmatprep.subr.mxu0 0.0
    %3520 = vmatpush1.xpose.msra.mxu0 0.0
    %3521 = vmatprep.subr.mxu0 0.0
    %3522 = vmatpush1.xpose.msra.mxu0 0.0
    %3523 = vmatprep.subr.mxu0 0.0
    %3524 = vmatpush1.xpose.msra.mxu0 0.0
    %3525 = vmatprep.subr.mxu0 0.0
    %3526 = vmatpush1.xpose.msra.mxu0 0.0
    %3527 = vmatprep.subr.mxu0 0.0
    %3528 = vmatpush1.xpose.msra.mxu0 0.0
    %3529 = vmatprep.subr.mxu0 0.0
    %3530 = vmatpush1.xpose.msra.mxu0 0.0
    %3531 = vmatprep.subr.mxu0 0.0
    %3532 = vmatpush1.xpose.msra.mxu0 0.0
    %3533 = vmatprep.subr.mxu0 0.0
    %3534 = vmatpush1.xpose.msra.mxu0 0.0
    %3535 = vmatprep.subr.mxu0 0.0
    %3536 = vmatpush1.xpose.msra.mxu0 0.0
    %3537 = vmatprep.subr.mxu0 0.0
    %3538 = vmatpush1.xpose.msra.mxu0 0.0
    %3539 = vmatprep.subr.mxu0 0.0
    %3540 = vmatpush1.xpose.msra.mxu0 0.0
    %3541 = vmatprep.mubr.f32.mxu0 0.0
    %3542 = vmatmul.mubr.f32.gmra.mrb[0].mxu0 %v3476
    %v3543 = vpop.f32.mrb[0].mxu0
    %v3544 = vadd.f32 0.0, %v3543
    %v3545 = vpop.f32.mrb[0].mxu0
    %3546 = vdwg.mxu0
    %3547 = vadd.xlane.f32.xlu0 %v3476
    %v3548 = vpop.xlane.xlu0 %3547
    %v3549 = vmax.f32 %v3548, 1.0
    %v3550 = vrcp.pop %v3549
    %v3551 = vmul.f32 %v3544, %v3550
    %vm3552 = vcmp.gt.f32.partialorder %v3548, 0.0
    %v3553 = vsel %vm3552, 1, 0
    %vm3554 = vcmp.eq.s32.totalorder %v3553, 1
    %v3555 = vsel %vm3554, %v3551, %v3331
    %v3557 = vsel %vm1763, %v3555, 0
    %3559 = vmatprep.subr.mxu0 0.0
    %3560 = vmatpush1.msra.mxu0 %v1689
    %3561 = vmatprep.subr.mxu0 0.0
    %3562 = vmatpush1.msra.mxu0 0.0
    %3563 = vmatprep.subr.mxu0 0.0
    %3564 = vmatpush1.msra.mxu0 0.0
    %3565 = vmatprep.subr.mxu0 0.0
    %3566 = vmatpush1.msra.mxu0 0.0
    %3567 = vmatprep.subr.mxu0 0.0
    %3568 = vmatpush1.msra.mxu0 0.0
    %3569 = vmatprep.subr.mxu0 0.0
    %3570 = vmatpush1.msra.mxu0 0.0
    %3571 = vmatprep.subr.mxu0 0.0
    %3572 = vmatpush1.msra.mxu0 0.0
    %3573 = vmatprep.subr.mxu0 0.0
    %3574 = vmatpush1.msra.mxu0 0.0
    %3575 = vmatprep.subr.mxu0 0.0
    %3576 = vmatpush1.msra.mxu0 0.0
    %3577 = vmatprep.subr.mxu0 0.0
    %3578 = vmatpush1.msra.mxu0 0.0
    %3579 = vmatprep.subr.mxu0 0.0
    %3580 = vmatpush1.msra.mxu0 0.0
    %3581 = vmatprep.subr.mxu0 0.0
    %3582 = vmatpush1.msra.mxu0 0.0
    %3583 = vmatprep.subr.mxu0 0.0
    %3584 = vmatpush1.msra.mxu0 0.0
    %3585 = vmatprep.subr.mxu0 0.0
    %3586 = vmatpush1.msra.mxu0 0.0
    %3587 = vmatprep.subr.mxu0 0.0
    %3588 = vmatpush1.msra.mxu0 0.0
    %3589 = vmatprep.subr.mxu0 0.0
    %3590 = vmatpush1.msra.mxu0 0.0
    %3591 = vmatprep.subr.mxu0 0.0
    %3592 = vmatpush1.msra.mxu0 0.0
    %3593 = vmatprep.subr.mxu0 0.0
    %3594 = vmatpush1.msra.mxu0 0.0
    %3595 = vmatprep.subr.mxu0 0.0
    %3596 = vmatpush1.msra.mxu0 0.0
    %3597 = vmatprep.subr.mxu0 0.0
    %3598 = vmatpush1.msra.mxu0 0.0
    %3599 = vmatprep.subr.mxu0 0.0
    %3600 = vmatpush1.msra.mxu0 0.0
    %3601 = vmatprep.subr.mxu0 0.0
    %3602 = vmatpush1.msra.mxu0 0.0
    %3603 = vmatprep.subr.mxu0 0.0
    %3604 = vmatpush1.msra.mxu0 0.0
    %3605 = vmatprep.subr.mxu0 0.0
    %3606 = vmatpush1.msra.mxu0 0.0
    %3607 = vmatprep.subr.mxu0 0.0
    %3608 = vmatpush1.msra.mxu0 0.0
    %3609 = vmatprep.subr.mxu0 0.0
    %3610 = vmatpush1.msra.mxu0 0.0
    %3611 = vmatprep.subr.mxu0 0.0
    %3612 = vmatpush1.msra.mxu0 0.0
    %3613 = vmatprep.subr.mxu0 0.0
    %3614 = vmatpush1.msra.mxu0 0.0
    %3615 = vmatprep.subr.mxu0 0.0
    %3616 = vmatpush1.msra.mxu0 0.0
    %3617 = vmatprep.subr.mxu0 0.0
    %3618 = vmatpush1.msra.mxu0 0.0
    %3619 = vmatprep.subr.mxu0 0.0
    %3620 = vmatpush1.msra.mxu0 0.0
    %3621 = vmatprep.subr.mxu0 0.0
    %3622 = vmatpush1.msra.mxu0 0.0
    %3623 = vmatprep.mubr.f32.mxu0 0.0
    %3624 = vmatmul.mubr.f32.gmra.mrb[0].mxu0 %v3557
    %v3625 = vpop.f32.mrb[0].mxu0
    %v3626 = vadd.f32 0.0, %v3625
    %v3627 = vpop.f32.mrb[0].mxu0
    %3628 = vdwg.mxu0
    %v3629 = vmul.f32 %v3555, %v3555
    %v3630 = vsel %vm1763, %v3629, 0.0
    %3631 = vadd.xlane.f32.xlu0 %v3630
    %v3632 = vpop.xlane.xlu0 %3631
    %v3633 = vmul.f32 %v3626, 2.0
    %v3634 = vsub.f32 %v3632, %v3633
    %v3636 = vrot.slane %v3634, 7
    %vm3638 = vcmp.lt.f32.partialorder %v3634, %v3636
    %v3639 = vsel %vm3638, %v3634, %v3636
    %v3640 = vsel %vm3638, 1.0, 0.0
    %v3642 = vrot.slane %v3639, 7
    %vm3644 = vcmp.lt.f32.partialorder %v3634, %v3642
    %v3645 = vsel %vm3644, %v3634, %v3642
    %v3647 = vrot.slane %v3640, 7
    %v3649 = vsel %vm3644, 2.0, %v3647
    %v3651 = vrot.slane %v3645, 7
    %vm3653 = vcmp.lt.f32.partialorder %v3634, %v3651
    %v3654 = vsel %vm3653, %v3634, %v3651
    %v3656 = vrot.slane %v3649, 7
    %v3658 = vsel %vm3653, 3.0, %v3656
    %v3660 = vrot.slane %v3654, 7
    %vm3662 = vcmp.lt.f32.partialorder %v3634, %v3660
    %v3663 = vsel %vm3662, %v3634, %v3660
    %v3665 = vrot.slane %v3658, 7
    %v3667 = vsel %vm3662, 4.0, %v3665
    %v3669 = vrot.slane %v3663, 7
    %vm3671 = vcmp.lt.f32.partialorder %v3634, %v3669
    %v3672 = vsel %vm3671, %v3634, %v3669
    %v3674 = vrot.slane %v3667, 7
    %v3676 = vsel %vm3671, 5.0, %v3674
    %v3678 = vrot.slane %v3672, 7
    %vm3680 = vcmp.lt.f32.partialorder %v3634, %v3678
    %v3681 = vsel %vm3680, %v3634, %v3678
    %v3683 = vrot.slane %v3676, 7
    %v3685 = vsel %vm3680, 6.0, %v3683
    %v3687 = vrot.slane %v3681, 7
    %vm3689 = vcmp.lt.f32.partialorder %v3634, %v3687
    %v3691 = vrot.slane %v3685, 7
    %v3693 = vsel %vm3689, 7.0, %v3691
    %v3694 = vlaneseq
    %v3695 = vshrl.u32 %v3694, 7
    %v3696 = vsub.s32 7, %v3695
    %v3697 = vrot.slane %v3693, %v3696
    %vm3698 = vcmp.eq.f32.partialorder %v3697, %v1762
    %v3699 = vsel %vm3698, 1, 0
    %v3700 = vcvt.s32.f32 %v3699
    %3701 = vmatprep.subr.mxu0 0.0
    %3702 = vmatpush1.xpose.msra.mxu0 %v1689
    %3703 = vmatprep.subr.mxu0 0.0
    %3704 = vmatpush1.xpose.msra.mxu0 0.0
    %3705 = vmatprep.subr.mxu0 0.0
    %3706 = vmatpush1.xpose.msra.mxu0 0.0
    %3707 = vmatprep.subr.mxu0 0.0
    %3708 = vmatpush1.xpose.msra.mxu0 0.0
    %3709 = vmatprep.subr.mxu0 0.0
    %3710 = vmatpush1.xpose.msra.mxu0 0.0
    %3711 = vmatprep.subr.mxu0 0.0
    %3712 = vmatpush1.xpose.msra.mxu0 0.0
    %3713 = vmatprep.subr.mxu0 0.0
    %3714 = vmatpush1.xpose.msra.mxu0 0.0
    %3715 = vmatprep.subr.mxu0 0.0
    %3716 = vmatpush1.xpose.msra.mxu0 0.0
    %3717 = vmatprep.subr.mxu0 0.0
    %3718 = vmatpush1.xpose.msra.mxu0 0.0
    %3719 = vmatprep.subr.mxu0 0.0
    %3720 = vmatpush1.xpose.msra.mxu0 0.0
    %3721 = vmatprep.subr.mxu0 0.0
    %3722 = vmatpush1.xpose.msra.mxu0 0.0
    %3723 = vmatprep.subr.mxu0 0.0
    %3724 = vmatpush1.xpose.msra.mxu0 0.0
    %3725 = vmatprep.subr.mxu0 0.0
    %3726 = vmatpush1.xpose.msra.mxu0 0.0
    %3727 = vmatprep.subr.mxu0 0.0
    %3728 = vmatpush1.xpose.msra.mxu0 0.0
    %3729 = vmatprep.subr.mxu0 0.0
    %3730 = vmatpush1.xpose.msra.mxu0 0.0
    %3731 = vmatprep.subr.mxu0 0.0
    %3732 = vmatpush1.xpose.msra.mxu0 0.0
    %3733 = vmatprep.subr.mxu0 0.0
    %3734 = vmatpush1.xpose.msra.mxu0 0.0
    %3735 = vmatprep.subr.mxu0 0.0
    %3736 = vmatpush1.xpose.msra.mxu0 0.0
    %3737 = vmatprep.subr.mxu0 0.0
    %3738 = vmatpush1.xpose.msra.mxu0 0.0
    %3739 = vmatprep.subr.mxu0 0.0
    %3740 = vmatpush1.xpose.msra.mxu0 0.0
    %3741 = vmatprep.subr.mxu0 0.0
    %3742 = vmatpush1.xpose.msra.mxu0 0.0
    %3743 = vmatprep.subr.mxu0 0.0
    %3744 = vmatpush1.xpose.msra.mxu0 0.0
    %3745 = vmatprep.subr.mxu0 0.0
    %3746 = vmatpush1.xpose.msra.mxu0 0.0
    %3747 = vmatprep.subr.mxu0 0.0
    %3748 = vmatpush1.xpose.msra.mxu0 0.0
    %3749 = vmatprep.subr.mxu0 0.0
    %3750 = vmatpush1.xpose.msra.mxu0 0.0
    %3751 = vmatprep.subr.mxu0 0.0
    %3752 = vmatpush1.xpose.msra.mxu0 0.0
    %3753 = vmatprep.subr.mxu0 0.0
    %3754 = vmatpush1.xpose.msra.mxu0 0.0
    %3755 = vmatprep.subr.mxu0 0.0
    %3756 = vmatpush1.xpose.msra.mxu0 0.0
    %3757 = vmatprep.subr.mxu0 0.0
    %3758 = vmatpush1.xpose.msra.mxu0 0.0
    %3759 = vmatprep.subr.mxu0 0.0
    %3760 = vmatpush1.xpose.msra.mxu0 0.0
    %3761 = vmatprep.subr.mxu0 0.0
    %3762 = vmatpush1.xpose.msra.mxu0 0.0
    %3763 = vmatprep.subr.mxu0 0.0
    %3764 = vmatpush1.xpose.msra.mxu0 0.0
    %3765 = vmatprep.mubr.f32.mxu0 0.0
    %3766 = vmatmul.mubr.f32.gmra.mrb[0].mxu0 %v3700
    %v3767 = vpop.f32.mrb[0].mxu0
    %v3768 = vadd.f32 0.0, %v3767
    %v3769 = vpop.f32.mrb[0].mxu0
    %3770 = vdwg.mxu0
    %3771 = vadd.xlane.f32.xlu0 %v3700
    %v3772 = vpop.xlane.xlu0 %3771
    %v3773 = vmax.f32 %v3772, 1.0
    %v3774 = vrcp.pop %v3773
    %v3775 = vmul.f32 %v3768, %v3774
    %vm3776 = vcmp.gt.f32.partialorder %v3772, 0.0
    %v3777 = vsel %vm3776, 1, 0
    %vm3778 = vcmp.eq.s32.totalorder %v3777, 1
    %v3779 = vsel %vm3778, %v3775, %v3555
    %v3781 = vsel %vm1763, %v3779, 0
    %3783 = vmatprep.subr.mxu0 0.0
    %3784 = vmatpush1.msra.mxu0 %v1689
    %3785 = vmatprep.subr.mxu0 0.0
    %3786 = vmatpush1.msra.mxu0 0.0
    %3787 = vmatprep.subr.mxu0 0.0
    %3788 = vmatpush1.msra.mxu0 0.0
    %3789 = vmatprep.subr.mxu0 0.0
    %3790 = vmatpush1.msra.mxu0 0.0
    %3791 = vmatprep.subr.mxu0 0.0
    %3792 = vmatpush1.msra.mxu0 0.0
    %3793 = vmatprep.subr.mxu0 0.0
    %3794 = vmatpush1.msra.mxu0 0.0
    %3795 = vmatprep.subr.mxu0 0.0
    %3796 = vmatpush1.msra.mxu0 0.0
    %3797 = vmatprep.subr.mxu0 0.0
    %3798 = vmatpush1.msra.mxu0 0.0
    %3799 = vmatprep.subr.mxu0 0.0
    %3800 = vmatpush1.msra.mxu0 0.0
    %3801 = vmatprep.subr.mxu0 0.0
    %3802 = vmatpush1.msra.mxu0 0.0
    %3803 = vmatprep.subr.mxu0 0.0
    %3804 = vmatpush1.msra.mxu0 0.0
    %3805 = vmatprep.subr.mxu0 0.0
    %3806 = vmatpush1.msra.mxu0 0.0
    %3807 = vmatprep.subr.mxu0 0.0
    %3808 = vmatpush1.msra.mxu0 0.0
    %3809 = vmatprep.subr.mxu0 0.0
    %3810 = vmatpush1.msra.mxu0 0.0
    %3811 = vmatprep.subr.mxu0 0.0
    %3812 = vmatpush1.msra.mxu0 0.0
    %3813 = vmatprep.subr.mxu0 0.0
    %3814 = vmatpush1.msra.mxu0 0.0
    %3815 = vmatprep.subr.mxu0 0.0
    %3816 = vmatpush1.msra.mxu0 0.0
    %3817 = vmatprep.subr.mxu0 0.0
    %3818 = vmatpush1.msra.mxu0 0.0
    %3819 = vmatprep.subr.mxu0 0.0
    %3820 = vmatpush1.msra.mxu0 0.0
    %3821 = vmatprep.subr.mxu0 0.0
    %3822 = vmatpush1.msra.mxu0 0.0
    %3823 = vmatprep.subr.mxu0 0.0
    %3824 = vmatpush1.msra.mxu0 0.0
    %3825 = vmatprep.subr.mxu0 0.0
    %3826 = vmatpush1.msra.mxu0 0.0
    %3827 = vmatprep.subr.mxu0 0.0
    %3828 = vmatpush1.msra.mxu0 0.0
    %3829 = vmatprep.subr.mxu0 0.0
    %3830 = vmatpush1.msra.mxu0 0.0
    %3831 = vmatprep.subr.mxu0 0.0
    %3832 = vmatpush1.msra.mxu0 0.0
    %3833 = vmatprep.subr.mxu0 0.0
    %3834 = vmatpush1.msra.mxu0 0.0
    %3835 = vmatprep.subr.mxu0 0.0
    %3836 = vmatpush1.msra.mxu0 0.0
    %3837 = vmatprep.subr.mxu0 0.0
    %3838 = vmatpush1.msra.mxu0 0.0
    %3839 = vmatprep.subr.mxu0 0.0
    %3840 = vmatpush1.msra.mxu0 0.0
    %3841 = vmatprep.subr.mxu0 0.0
    %3842 = vmatpush1.msra.mxu0 0.0
    %3843 = vmatprep.subr.mxu0 0.0
    %3844 = vmatpush1.msra.mxu0 0.0
    %3845 = vmatprep.subr.mxu0 0.0
    %3846 = vmatpush1.msra.mxu0 0.0
    %3847 = vmatprep.mubr.f32.mxu0 0.0
    %3848 = vmatmul.mubr.f32.gmra.mrb[0].mxu0 %v3781
    %v3849 = vpop.f32.mrb[0].mxu0
    %v3850 = vadd.f32 0.0, %v3849
    %v3851 = vpop.f32.mrb[0].mxu0
    %3852 = vdwg.mxu0
    %v3853 = vmul.f32 %v3779, %v3779
    %v3854 = vsel %vm1763, %v3853, 0.0
    %3855 = vadd.xlane.f32.xlu0 %v3854
    %v3856 = vpop.xlane.xlu0 %3855
    %v3857 = vmul.f32 %v3850, 2.0
    %v3858 = vsub.f32 %v3856, %v3857
    %v3860 = vrot.slane %v3858, 7
    %vm3862 = vcmp.lt.f32.partialorder %v3858, %v3860
    %v3863 = vsel %vm3862, %v3858, %v3860
    %v3864 = vsel %vm3862, 1.0, 0.0
    %v3866 = vrot.slane %v3863, 7
    %vm3868 = vcmp.lt.f32.partialorder %v3858, %v3866
    %v3869 = vsel %vm3868, %v3858, %v3866
    %v3871 = vrot.slane %v3864, 7
    %v3873 = vsel %vm3868, 2.0, %v3871
    %v3875 = vrot.slane %v3869, 7
    %vm3877 = vcmp.lt.f32.partialorder %v3858, %v3875
    %v3878 = vsel %vm3877, %v3858, %v3875
    %v3880 = vrot.slane %v3873, 7
    %v3882 = vsel %vm3877, 3.0, %v3880
    %v3884 = vrot.slane %v3878, 7
    %vm3886 = vcmp.lt.f32.partialorder %v3858, %v3884
    %v3887 = vsel %vm3886, %v3858, %v3884
    %v3889 = vrot.slane %v3882, 7
    %v3891 = vsel %vm3886, 4.0, %v3889
    %v3893 = vrot.slane %v3887, 7
    %vm3895 = vcmp.lt.f32.partialorder %v3858, %v3893
    %v3896 = vsel %vm3895, %v3858, %v3893
    %v3898 = vrot.slane %v3891, 7
    %v3900 = vsel %vm3895, 5.0, %v3898
    %v3902 = vrot.slane %v3896, 7
    %vm3904 = vcmp.lt.f32.partialorder %v3858, %v3902
    %v3905 = vsel %vm3904, %v3858, %v3902
    %v3907 = vrot.slane %v3900, 7
    %v3909 = vsel %vm3904, 6.0, %v3907
    %v3911 = vrot.slane %v3905, 7
    %vm3913 = vcmp.lt.f32.partialorder %v3858, %v3911
    %v3915 = vrot.slane %v3909, 7
    %v3917 = vsel %vm3913, 7.0, %v3915
    %3918 = vst [vmem:[#allocation2 - $0x7] sm:$0x80] %v3917
    // Predicated region
    $region21: #{open_spectral_fit_and_forward.1} parent=1 // pred_check
      _
    $region22: #{open_spectral_fit_and_forward.1} parent=1 // pred_check_branch
      %3920 = sbr.rel (0) target = $region24
    $region23: #{open_spectral_fit_and_forward.1} parent=1 // pred_region
      %s3922 = ssub.s32 16, 16
      %3923 = vsyncadd [#allocation3], %s3922
      %s3925 = sshll.u32 [#allocation2], 4
      %s3926 = int_to_ptr.vmem [resolvable:$true] %s3925
      %3928 = dma.vmem_to_hbm [thread:$0]  %s3926, 16, %s3, [#allocation3]
    $region24: #{open_spectral_fit_and_forward.1} parent=1 // pred_fallthru
      _
    // Predicated region
    $region25: #{open_spectral_fit_and_forward.1} parent=1 // pred_check
      _
    $region26: #{open_spectral_fit_and_forward.1} parent=1 // pred_check_branch
      %3930 = sbr.rel (0) target = $region28
    $region27: #{open_spectral_fit_and_forward.1} parent=1 // pred_region
      %3931 = dma.done [#allocation3], 16
    $region28: #{open_spectral_fit_and_forward.1} parent=1 // pred_fallthru
      _
    %3932 = vsyncpa [#allocation3], 1

</llo_original>
